<compile_context>
chip_gen: v5e
topology: v5e:2x2
jax: 0.10.0
libtpu: 0.0.40
codegen_flags: <defaults>
</compile_context>

<pallas_src>
import functools

import jax
import jax.numpy as jnp
from jax.experimental import pallas as pl
from jax.experimental.pallas import tpu as pltpu

EPS = 1e-5


# ----------------------------- Pallas kernels ------------------------------ #

def _fused_bottleneck_kernel(x_ref, w1_ref, b1_ref, w2_ref, b2_ref,
                             w3_ref, b3_ref, ws_ref, bs_ref,
                             o_ref, h1_ref, *, H, W, P):
    """Whole bottleneck block (stride=1) for one batch element, all in VMEM.

    x_ref : (1, H, W, Cin)  bf16
    w*_ref: BN-folded bf16 weights; b*_ref: (1, C) f32 biases
    o_ref : (1, H, W, 4*planes) f32
    h1_ref: ((H+2), (W+2), P) f32 scratch (zero halo ring for the 3x3 conv)
    """
    cin = x_ref.shape[-1]
    c4 = o_ref.shape[-1]

    x = x_ref[...].reshape(H * W, cin)                      # bf16, reused below

    # ---- conv1 (1x1) + bn1 + relu -> zero-padded VMEM scratch (f32) ----
    h1 = jnp.dot(x, w1_ref[...], preferred_element_type=jnp.float32)
    h1 = jnp.maximum(h1 + b1_ref[...], 0.0)
    h1_ref[...] = jnp.zeros_like(h1_ref)                    # halo ring = 0
    h1_ref[pl.ds(1, H), pl.ds(1, W), :] = h1.reshape(H, W, P)

    # ---- conv2 (3x3, pad=1, stride=1) + bn2 + relu: 9-tap MXU accumulation ----
    acc = None
    for t in range(9):
        dh, dw = divmod(t, 3)
        tap = h1_ref[pl.ds(dh, H), pl.ds(dw, W), :]
        tap = tap.reshape(H * W, P).astype(jnp.bfloat16)
        d = jnp.dot(tap, w2_ref[t], preferred_element_type=jnp.float32)
        acc = d if acc is None else acc + d
    h2 = jnp.maximum(acc + b2_ref[...], 0.0).astype(jnp.bfloat16)

    # ---- conv3 (1x1)+bn3  +  shortcut (1x1)+bn  + add + relu ----
    main = jnp.dot(h2, w3_ref[...], preferred_element_type=jnp.float32) + b3_ref[...]
    sc = jnp.dot(x, ws_ref[...], preferred_element_type=jnp.float32) + bs_ref[...]
    o_ref[...] = jnp.maximum(main + sc, 0.0).reshape(1, H, W, c4)


def _mm_bias_kernel(x_ref, w_ref, b_ref, o_ref, *, relu):
    y = jnp.dot(x_ref[...], w_ref[...], preferred_element_type=jnp.float32)
    y = y + b_ref[...]
    if relu:
        y = jnp.maximum(y, 0.0)
    o_ref[...] = y.astype(o_ref.dtype)


def _residual_kernel(h_ref, w3_ref, b3_ref, xs_ref, ws_ref, bs_ref, o_ref):
    main = jnp.dot(h_ref[...], w3_ref[...],
                   preferred_element_type=jnp.float32) + b3_ref[...]
    sc = jnp.dot(xs_ref[...], ws_ref[...],
                 preferred_element_type=jnp.float32) + bs_ref[...]
    o_ref[...] = jnp.maximum(main + sc, 0.0).astype(o_ref.dtype)


# ------------------------------ Pallas wrappers ---------------------------- #

_VMEM_LIMIT = 64 * 1024 * 1024


def _round_up(x, m):
    return (x + m - 1) // m * m


def _fold_bn_into_weight(w, bn):
    """Fold BN (inference) scale into the weight's output channels."""
    gamma, beta, mean, var = bn
    scale = gamma * jax.lax.rsqrt(var + EPS)
    bias = beta - mean * scale
    return (w * scale).astype(jnp.bfloat16), bias.reshape(1, -1).astype(jnp.float32)


def _fused_vmem_ok(H, W, Cin, P, C4):
    est = (2 * (H * W * Cin * 2)            # x block, double buffered (bf16)
           + 2 * (H * W * C4 * 4)           # out block, double buffered (f32)
           + (H + 2) * (W + 2) * P * 4      # h1 scratch (f32)
           + (9 * P * P + Cin * P + P * C4 + Cin * C4) * 2
           + 4 * H * W * (P + C4) * 4)      # live f32 values (rough)
    return est < 24 * 1024 * 1024


def _fused_bottleneck(x_nhwc, w1, b1, w2, b2, w3, b3, ws, bs):
    N, H, W, Cin = x_nhwc.shape
    P = w1.shape[1]
    C4 = w3.shape[1]
    w2r = w2.reshape(9, P, P)                 # (kh, kw, cin, cout) -> (tap, cin, cout)

    kernel = functools.partial(_fused_bottleneck_kernel, H=H, W=W, P=P)
    return pl.pallas_call(
        kernel,
        out_shape=jax.ShapeDtypeStruct((N, H, W, C4), jnp.float32),
        grid_spec=pltpu.PrefetchScalarGridSpec(
            num_scalar_prefetch=0,
            grid=(N,),
            in_specs=[
                pl.BlockSpec((1, H, W, Cin), lambda n: (n, 0, 0, 0)),
                pl.BlockSpec((Cin, P), lambda n: (0, 0)),
                pl.BlockSpec((1, P), lambda n: (0, 0)),
                pl.BlockSpec((9, P, P), lambda n: (0, 0, 0)),
                pl.BlockSpec((1, P), lambda n: (0, 0)),
                pl.BlockSpec((P, C4), lambda n: (0, 0)),
                pl.BlockSpec((1, C4), lambda n: (0, 0)),
                pl.BlockSpec((Cin, C4), lambda n: (0, 0)),
                pl.BlockSpec((1, C4), lambda n: (0, 0)),
            ],
            out_specs=pl.BlockSpec((1, H, W, C4), lambda n: (n, 0, 0, 0)),
            scratch_shapes=[pltpu.VMEM((H + 2, W + 2, P), jnp.float32)],
        ),
        compiler_params=pltpu.CompilerParams(
            dimension_semantics=("parallel",),
            vmem_limit_bytes=_VMEM_LIMIT),
    )(x_nhwc.astype(jnp.bfloat16), w1, b1, w2r, b2, w3, b3, ws, bs)


# --------- fallback path (stride != 1, or spatial tile too big) ------------ #

def _row_tiling(M):
    if M >= 1024:
        tm = 512
    elif M >= 256:
        tm = _round_up((M + 1) // 2, 8)
    else:
        tm = _round_up(max(M, 8), 8)
    return tm, _round_up(M, tm)


def _matmul_bias(x, w, b, *, relu):
    M, K = x.shape
    Nc = w.shape[1]
    tm, Mp = _row_tiling(M)
    if Mp != M:
        x = jnp.pad(x, ((0, Mp - M), (0, 0)))
    out = pl.pallas_call(
        functools.partial(_mm_bias_kernel, relu=relu),
        out_shape=jax.ShapeDtypeStruct((Mp, Nc), jnp.float32),
        grid_spec=pltpu.PrefetchScalarGridSpec(
            num_scalar_prefetch=0,
            grid=(Mp // tm,),
            in_specs=[
                pl.BlockSpec((tm, K), lambda i: (i, 0)),
                pl.BlockSpec((K, Nc), lambda i: (0, 0)),
                pl.BlockSpec((1, Nc), lambda i: (0, 0)),
            ],
            out_specs=pl.BlockSpec((tm, Nc), lambda i: (i, 0)),
        ),
        compiler_params=pltpu.CompilerParams(
            dimension_semantics=("parallel",),
            vmem_limit_bytes=_VMEM_LIMIT),
    )(x.astype(jnp.bfloat16), w, b)
    return out[:M]


def _residual_matmul(h, w3, b3, xs, ws, bs):
    M, K1 = h.shape
    K2 = xs.shape[1]
    Nc = w3.shape[1]
    tm, Mp = _row_tiling(M)
    if Mp != M:
        h = jnp.pad(h, ((0, Mp - M), (0, 0)))
        xs = jnp.pad(xs, ((0, Mp - M), (0, 0)))
    out = pl.pallas_call(
        _residual_kernel,
        out_shape=jax.ShapeDtypeStruct((Mp, Nc), jnp.float32),
        grid_spec=pltpu.PrefetchScalarGridSpec(
            num_scalar_prefetch=0,
            grid=(Mp // tm,),
            in_specs=[
                pl.BlockSpec((tm, K1), lambda i: (i, 0)),
                pl.BlockSpec((K1, Nc), lambda i: (0, 0)),
                pl.BlockSpec((1, Nc), lambda i: (0, 0)),
                pl.BlockSpec((tm, K2), lambda i: (i, 0)),
                pl.BlockSpec((K2, Nc), lambda i: (0, 0)),
                pl.BlockSpec((1, Nc), lambda i: (0, 0)),
            ],
            out_specs=pl.BlockSpec((tm, Nc), lambda i: (i, 0)),
        ),
        compiler_params=pltpu.CompilerParams(
            dimension_semantics=("parallel",),
            vmem_limit_bytes=_VMEM_LIMIT),
    )(h.astype(jnp.bfloat16), w3, b3, xs.astype(jnp.bfloat16), ws, bs)
    return out[:M]


def _im2col_3x3(x_nhwc, stride):
    N, H, W, C = x_nhwc.shape
    xp = jnp.pad(x_nhwc, ((0, 0), (1, 1), (1, 1), (0, 0)))
    Ho = (H - 1) // stride + 1
    Wo = (W - 1) // stride + 1
    patches = []
    for dh in range(3):
        for dw in range(3):
            patches.append(
                xp[:, dh:dh + (Ho - 1) * stride + 1:stride,
                      dw:dw + (Wo - 1) * stride + 1:stride, :])
    return jnp.concatenate(patches, axis=-1), Ho, Wo


def _tiled_bottleneck(x_nhwc, w1, b1, w2, b2, w3, b3, ws, bs, stride):
    # TODO(synk): stride != 1 (and oversized-spatial) path still stages h1 via a
    # JAX-side 9-tap gather; the stride==1 path above is fully VMEM-fused.
    N, H, W, Cin = x_nhwc.shape
    P = w1.shape[1]
    C4 = w3.shape[1]
    xb = x_nhwc.astype(jnp.bfloat16)

    h1 = _matmul_bias(xb.reshape(N * H * W, Cin), w1, b1, relu=True)
    h1 = h1.astype(jnp.bfloat16).reshape(N, H, W, P)

    cols, Ho, Wo = _im2col_3x3(h1, stride)
    h2 = _matmul_bias(cols.reshape(N * Ho * Wo, 9 * P),
                      w2.reshape(9 * P, P), b2, relu=True)

    xs = xb[:, ::stride, ::stride, :][:, :Ho, :Wo, :].reshape(N * Ho * Wo, Cin)
    out = _residual_matmul(h2, w3, b3, xs, ws, bs)
    return out.reshape(N, Ho, Wo, C4)


# ------------------------------- forward ----------------------------------- #

def bottleneck_forward(x_nchw, params, stride=1):
    """Inference forward of Bottleneck (option 'B')."""
    # TODO(synk): training-mode Dropout2d (channel dropout) not implemented;
    # eval-mode identity is used (matches module.eval()).
    x = jnp.transpose(x_nchw, (0, 2, 3, 1))  # NCHW -> NHWC
    N, H, W, Cin = x.shape
    P = params["w1"].shape[1]
    C4 = params["w3"].shape[1]

    w1, b1 = _fold_bn_into_weight(params["w1"], params["bn1"])
    w2, b2 = _fold_bn_into_weight(params["w2"], params["bn2"])
    w3, b3 = _fold_bn_into_weight(params["w3"], params["bn3"])
    ws, bs = _fold_bn_into_weight(params["ws"], params["bns"])

    if stride == 1 and _fused_vmem_ok(H, W, Cin, P, C4):
        out = _fused_bottleneck(x, w1, b1, w2, b2, w3, b3, ws, bs)
    else:
        out = _tiled_bottleneck(x, w1, b1, w2, b2, w3, b3, ws, bs, stride)
    return jnp.transpose(out, (0, 3, 1, 2))  # NHWC -> NCHW


# ----------------------------- pure-JAX reference --------------------------- #

def _fold_bn(gamma, beta, mean, var):
    scale = gamma * jax.lax.rsqrt(var + EPS)
    return scale, beta - mean * scale


def _conv_ref(x_nhwc, w_hwio, stride):
    return jax.lax.conv_general_dilated(
        x_nhwc, w_hwio, window_strides=(stride, stride),
        padding=[(w_hwio.shape[0] // 2,) * 2, (w_hwio.shape[1] // 2,) * 2],
        dimension_numbers=("NHWC", "HWIO", "NHWC"),
        precision=jax.lax.Precision.HIGHEST)


def bottleneck_ref(x_nchw, params, stride=1):
    x = jnp.transpose(x_nchw, (0, 2, 3, 1))
    planes = params["w1"].shape[1]

    def bn(y, p):
        s, b = _fold_bn(*p)
        return y * s + b

    h = jax.nn.relu(bn(_conv_ref(x, params["w1"].reshape(1, 1, -1, planes), 1),
                       params["bn1"]))
    h = jax.nn.relu(bn(_conv_ref(h, params["w2"], stride), params["bn2"]))
    h = bn(_conv_ref(h, params["w3"].reshape(1, 1, planes, 4 * planes), 1),
           params["bn3"])
    sc = bn(_conv_ref(x, params["ws"].reshape(1, 1, -1, 4 * planes), stride),
            params["bns"])
    out = jax.nn.relu(h + sc)
    return jnp.transpose(out, (0, 3, 1, 2))


# ---------------------------------- main ----------------------------------- #

def init_params(key, in_planes, planes):
    exp = 4
    ks = jax.random.split(key, 8)

    def bn_params(k, c):
        k0, k1, k2, k3 = jax.random.split(k, 4)
        gamma = jax.random.uniform(k0, (c,), jnp.float32, 0.8, 1.2)
        beta = 0.1 * jax.random.normal(k1, (c,), jnp.float32)
        mean = 0.1 * jax.random.normal(k2, (c,), jnp.float32)
        var = jax.random.uniform(k3, (c,), jnp.float32, 0.5, 1.5)
        return (gamma, beta, mean, var)

    return {
        # 1x1 conv weights stored as (Cin, Cout); 3x3 as (kh, kw, Cin, Cout)
        "w1": 0.2 * jax.random.normal(ks[0], (in_planes, planes), jnp.float32),
        "w2": 0.2 * jax.random.normal(ks[1], (3, 3, planes, planes), jnp.float32),
        "w3": 0.2 * jax.random.normal(ks[2], (planes, exp * planes), jnp.float32),
        "ws": 0.2 * jax.random.normal(ks[3], (in_planes, exp * planes), jnp.float32),
        "bn1": bn_params(ks[4], planes),
        "bn2": bn_params(ks[5], planes),
        "bn3": bn_params(ks[6], exp * planes),
        "bns": bn_params(ks[7], exp * planes),
    }


if __name__ == "__main__":
    key = jax.random.PRNGKey(0)
    k_x, k_p = jax.random.split(key)

    batch, in_planes, planes, H, W, stride = 2, 4, 4, 16, 16, 1
    x = jax.random.normal(k_x, (batch, in_planes, H, W), jnp.float32)
    params = init_params(k_p, in_planes, planes)

    out = jax.block_until_ready(bottleneck_forward(x, params, stride=stride))
    ref = jax.block_until_ready(bottleneck_ref(x, params, stride=stride))

    assert out.shape == (batch, 4 * planes, H, W), out.shape
    max_err = float(jnp.max(jnp.abs(out - ref)))
    # bf16 MXU inputs vs. f32/HIGHEST reference -> allow a few 1e-2 of slack.
    assert jnp.allclose(out, ref, atol=3e-2, rtol=3e-2), max_err
    print("KERNEL_OK")
</pallas_src>

<mosaic_0001>
module attributes {stable_mosaic.version = 11 : i64} {
  func.func @_fused_bottleneck_kernel(%arg0: i32, %arg1: memref<1x16x16x4xbf16, #tpu.memory_space<vmem>>, %arg2: memref<4x4xbf16, #tpu.memory_space<vmem>>, %arg3: memref<1x4xf32, #tpu.memory_space<vmem>>, %arg4: memref<9x4x4xbf16, #tpu.memory_space<vmem>>, %arg5: memref<1x4xf32, #tpu.memory_space<vmem>>, %arg6: memref<4x16xbf16, #tpu.memory_space<vmem>>, %arg7: memref<1x16xf32, #tpu.memory_space<vmem>>, %arg8: memref<4x16xbf16, #tpu.memory_space<vmem>>, %arg9: memref<1x16xf32, #tpu.memory_space<vmem>>, %arg10: memref<1x16x16x16xf32, #tpu.memory_space<vmem>>, %arg11: memref<18x18x4xf32, #tpu.memory_space<vmem>>) attributes {dimension_semantics = [#tpu.dimension_semantics<parallel>], iteration_bounds = array<i64: 2>, scalar_prefetch = 0 : i64, scratch_operands = 1 : i64, tpu.core_type = #tpu.core_type<tc>, window_params = [{transform_indices = @transform_0, window_bounds = array<i64: 1, 16, 16, 4>}, {pipeline_mode = #tpu.pipeline_mode<synchronous>, transform_indices = @transform_1, window_bounds = array<i64: 4, 4>}, {pipeline_mode = #tpu.pipeline_mode<synchronous>, transform_indices = @transform_2, window_bounds = array<i64: 1, 4>}, {pipeline_mode = #tpu.pipeline_mode<synchronous>, transform_indices = @transform_3, window_bounds = array<i64: 9, 4, 4>}, {pipeline_mode = #tpu.pipeline_mode<synchronous>, transform_indices = @transform_4, window_bounds = array<i64: 1, 4>}, {pipeline_mode = #tpu.pipeline_mode<synchronous>, transform_indices = @transform_5, window_bounds = array<i64: 4, 16>}, {pipeline_mode = #tpu.pipeline_mode<synchronous>, transform_indices = @transform_6, window_bounds = array<i64: 1, 16>}, {pipeline_mode = #tpu.pipeline_mode<synchronous>, transform_indices = @transform_7, window_bounds = array<i64: 4, 16>}, {pipeline_mode = #tpu.pipeline_mode<synchronous>, transform_indices = @transform_8, window_bounds = array<i64: 1, 16>}, {transform_indices = @transform_9, window_bounds = array<i64: 1, 16, 16, 16>}]} {
    %c0 = arith.constant 0 : index
    %c0_0 = arith.constant 0 : index
    %c0_1 = arith.constant 0 : index
    %c0_2 = arith.constant 0 : index
    %0 = vector.load %arg1[%c0, %c0_0, %c0_1, %c0_2] : memref<1x16x16x4xbf16, #tpu.memory_space<vmem>>, vector<1x16x16x4xbf16>
    %1 = vector.shape_cast %0 : vector<1x16x16x4xbf16> to vector<256x4xbf16>
    %c0_3 = arith.constant 0 : index
    %c0_4 = arith.constant 0 : index
    %2 = vector.load %arg2[%c0_3, %c0_4] : memref<4x4xbf16, #tpu.memory_space<vmem>>, vector<4x4xbf16>
    %cst = arith.constant dense<0.000000e+00> : vector<256x4xf32>
    %3 = tpu.matmul %1, %2, %cst {dimension_numbers = #tpu.dot_dimension_numbers<[1], [0], [0], [1], [0, 0, 1, 1], [], []>} : vector<256x4xbf16>, vector<4x4xbf16>, vector<256x4xf32> -> vector<256x4xf32>
    %c0_5 = arith.constant 0 : index
    %c0_6 = arith.constant 0 : index
    %4 = vector.load %arg3[%c0_5, %c0_6] : memref<1x4xf32, #tpu.memory_space<vmem>>, vector<1x4xf32>
    %5 = vector.broadcast %4 : vector<1x4xf32> to vector<256x4xf32>
    %6 = arith.addf %3, %5 : vector<256x4xf32>
    %cst_7 = arith.constant 0.000000e+00 : f32
    %7 = vector.broadcast %cst_7 : f32 to vector<256x4xf32>
    %8 = arith.maximumf %6, %7 : vector<256x4xf32>
    %cst_8 = arith.constant 0.000000e+00 : f32
    %9 = vector.broadcast %cst_8 : f32 to vector<18x18x4xf32>
    %c0_9 = arith.constant 0 : index
    %c0_10 = arith.constant 0 : index
    %c0_11 = arith.constant 0 : index
    %10 = vector.load %arg11[%c0_9, %c0_10, %c0_11] : memref<18x18x4xf32, #tpu.memory_space<vmem>>, vector<18x18x4xf32>
    tpu.vector_store %arg11[%c0_9, %c0_10, %c0_11], %9 {strides = array<i32>} : memref<18x18x4xf32, #tpu.memory_space<vmem>>, vector<18x18x4xf32>,
    %11 = vector.shape_cast %8 : vector<256x4xf32> to vector<16x16x4xf32>
    %c1 = arith.constant 1 : index
    %c1_12 = arith.constant 1 : index
    %c0_13 = arith.constant 0 : index
    %12 = vector.load %arg11[%c1, %c1_12, %c0_13] : memref<18x18x4xf32, #tpu.memory_space<vmem>>, vector<16x16x4xf32>
    tpu.vector_store %arg11[%c1, %c1_12, %c0_13], %11 {strides = array<i32>} : memref<18x18x4xf32, #tpu.memory_space<vmem>>, vector<16x16x4xf32>,
    %c0_14 = arith.constant 0 : index
    %c0_15 = arith.constant 0 : index
    %c0_16 = arith.constant 0 : index
    %13 = vector.load %arg11[%c0_14, %c0_15, %c0_16] : memref<18x18x4xf32, #tpu.memory_space<vmem>>, vector<16x16x4xf32>
    %14 = vector.shape_cast %13 : vector<16x16x4xf32> to vector<256x4xf32>
    %15 = arith.truncf %14 : vector<256x4xf32> to vector<256x4xbf16>
    %c0_17 = arith.constant 0 : index
    %c0_18 = arith.constant 0 : index
    %c0_19 = arith.constant 0 : index
    %16 = vector.load %arg4[%c0_17, %c0_18, %c0_19] : memref<9x4x4xbf16, #tpu.memory_space<vmem>>, vector<1x4x4xbf16>
    %17 = vector.shape_cast %16 : vector<1x4x4xbf16> to vector<4x4xbf16>
    %cst_20 = arith.constant dense<0.000000e+00> : vector<256x4xf32>
    %18 = tpu.matmul %15, %17, %cst_20 {dimension_numbers = #tpu.dot_dimension_numbers<[1], [0], [0], [1], [0, 0, 1, 1], [], []>} : vector<256x4xbf16>, vector<4x4xbf16>, vector<256x4xf32> -> vector<256x4xf32>
    %c0_21 = arith.constant 0 : index
    %c1_22 = arith.constant 1 : index
    %c0_23 = arith.constant 0 : index
    %19 = vector.load %arg11[%c0_21, %c1_22, %c0_23] : memref<18x18x4xf32, #tpu.memory_space<vmem>>, vector<16x16x4xf32>
    %20 = vector.shape_cast %19 : vector<16x16x4xf32> to vector<256x4xf32>
    %21 = arith.truncf %20 : vector<256x4xf32> to vector<256x4xbf16>
    %c1_24 = arith.constant 1 : index
    %c0_25 = arith.constant 0 : index
    %c0_26 = arith.constant 0 : index
    %22 = vector.load %arg4[%c1_24, %c0_25, %c0_26] : memref<9x4x4xbf16, #tpu.memory_space<vmem>>, vector<1x4x4xbf16>
    %23 = vector.shape_cast %22 : vector<1x4x4xbf16> to vector<4x4xbf16>
    %cst_27 = arith.constant dense<0.000000e+00> : vector<256x4xf32>
    %24 = tpu.matmul %21, %23, %cst_27 {dimension_numbers = #tpu.dot_dimension_numbers<[1], [0], [0], [1], [0, 0, 1, 1], [], []>} : vector<256x4xbf16>, vector<4x4xbf16>, vector<256x4xf32> -> vector<256x4xf32>
    %25 = arith.addf %18, %24 : vector<256x4xf32>
    %c0_28 = arith.constant 0 : index
    %c2 = arith.constant 2 : index
    %c0_29 = arith.constant 0 : index
    %26 = vector.load %arg11[%c0_28, %c2, %c0_29] : memref<18x18x4xf32, #tpu.memory_space<vmem>>, vector<16x16x4xf32>
    %27 = vector.shape_cast %26 : vector<16x16x4xf32> to vector<256x4xf32>
    %28 = arith.truncf %27 : vector<256x4xf32> to vector<256x4xbf16>
    %c2_30 = arith.constant 2 : index
    %c0_31 = arith.constant 0 : index
    %c0_32 = arith.constant 0 : index
    %29 = vector.load %arg4[%c2_30, %c0_31, %c0_32] : memref<9x4x4xbf16, #tpu.memory_space<vmem>>, vector<1x4x4xbf16>
    %30 = vector.shape_cast %29 : vector<1x4x4xbf16> to vector<4x4xbf16>
    %cst_33 = arith.constant dense<0.000000e+00> : vector<256x4xf32>
    %31 = tpu.matmul %28, %30, %cst_33 {dimension_numbers = #tpu.dot_dimension_numbers<[1], [0], [0], [1], [0, 0, 1, 1], [], []>} : vector<256x4xbf16>, vector<4x4xbf16>, vector<256x4xf32> -> vector<256x4xf32>
    %32 = arith.addf %25, %31 : vector<256x4xf32>
    %c1_34 = arith.constant 1 : index
    %c0_35 = arith.constant 0 : index
    %c0_36 = arith.constant 0 : index
    %33 = vector.load %arg11[%c1_34, %c0_35, %c0_36] : memref<18x18x4xf32, #tpu.memory_space<vmem>>, vector<16x16x4xf32>
    %34 = vector.shape_cast %33 : vector<16x16x4xf32> to vector<256x4xf32>
    %35 = arith.truncf %34 : vector<256x4xf32> to vector<256x4xbf16>
    %c3 = arith.constant 3 : index
    %c0_37 = arith.constant 0 : index
    %c0_38 = arith.constant 0 : index
    %36 = vector.load %arg4[%c3, %c0_37, %c0_38] : memref<9x4x4xbf16, #tpu.memory_space<vmem>>, vector<1x4x4xbf16>
    %37 = vector.shape_cast %36 : vector<1x4x4xbf16> to vector<4x4xbf16>
    %cst_39 = arith.constant dense<0.000000e+00> : vector<256x4xf32>
    %38 = tpu.matmul %35, %37, %cst_39 {dimension_numbers = #tpu.dot_dimension_numbers<[1], [0], [0], [1], [0, 0, 1, 1], [], []>} : vector<256x4xbf16>, vector<4x4xbf16>, vector<256x4xf32> -> vector<256x4xf32>
    %39 = arith.addf %32, %38 : vector<256x4xf32>
    %c1_40 = arith.constant 1 : index
    %c1_41 = arith.constant 1 : index
    %c0_42 = arith.constant 0 : index
    %40 = vector.load %arg11[%c1_40, %c1_41, %c0_42] : memref<18x18x4xf32, #tpu.memory_space<vmem>>, vector<16x16x4xf32>
    %41 = vector.shape_cast %40 : vector<16x16x4xf32> to vector<256x4xf32>
    %42 = arith.truncf %41 : vector<256x4xf32> to vector<256x4xbf16>
    %c4 = arith.constant 4 : index
    %c0_43 = arith.constant 0 : index
    %c0_44 = arith.constant 0 : index
    %43 = vector.load %arg4[%c4, %c0_43, %c0_44] : memref<9x4x4xbf16, #tpu.memory_space<vmem>>, vector<1x4x4xbf16>
    %44 = vector.shape_cast %43 : vector<1x4x4xbf16> to vector<4x4xbf16>
    %cst_45 = arith.constant dense<0.000000e+00> : vector<256x4xf32>
    %45 = tpu.matmul %42, %44, %cst_45 {dimension_numbers = #tpu.dot_dimension_numbers<[1], [0], [0], [1], [0, 0, 1, 1], [], []>} : vector<256x4xbf16>, vector<4x4xbf16>, vector<256x4xf32> -> vector<256x4xf32>
    %46 = arith.addf %39, %45 : vector<256x4xf32>
    %c1_46 = arith.constant 1 : index
    %c2_47 = arith.constant 2 : index
    %c0_48 = arith.constant 0 : index
    %47 = vector.load %arg11[%c1_46, %c2_47, %c0_48] : memref<18x18x4xf32, #tpu.memory_space<vmem>>, vector<16x16x4xf32>
    %48 = vector.shape_cast %47 : vector<16x16x4xf32> to vector<256x4xf32>
    %49 = arith.truncf %48 : vector<256x4xf32> to vector<256x4xbf16>
    %c5 = arith.constant 5 : index
    %c0_49 = arith.constant 0 : index
    %c0_50 = arith.constant 0 : index
    %50 = vector.load %arg4[%c5, %c0_49, %c0_50] : memref<9x4x4xbf16, #tpu.memory_space<vmem>>, vector<1x4x4xbf16>
    %51 = vector.shape_cast %50 : vector<1x4x4xbf16> to vector<4x4xbf16>
    %cst_51 = arith.constant dense<0.000000e+00> : vector<256x4xf32>
    %52 = tpu.matmul %49, %51, %cst_51 {dimension_numbers = #tpu.dot_dimension_numbers<[1], [0], [0], [1], [0, 0, 1, 1], [], []>} : vector<256x4xbf16>, vector<4x4xbf16>, vector<256x4xf32> -> vector<256x4xf32>
    %53 = arith.addf %46, %52 : vector<256x4xf32>
    %c2_52 = arith.constant 2 : index
    %c0_53 = arith.constant 0 : index
    %c0_54 = arith.constant 0 : index
    %54 = vector.load %arg11[%c2_52, %c0_53, %c0_54] : memref<18x18x4xf32, #tpu.memory_space<vmem>>, vector<16x16x4xf32>
    %55 = vector.shape_cast %54 : vector<16x16x4xf32> to vector<256x4xf32>
    %56 = arith.truncf %55 : vector<256x4xf32> to vector<256x4xbf16>
    %c6 = arith.constant 6 : index
    %c0_55 = arith.constant 0 : index
    %c0_56 = arith.constant 0 : index
    %57 = vector.load %arg4[%c6, %c0_55, %c0_56] : memref<9x4x4xbf16, #tpu.memory_space<vmem>>, vector<1x4x4xbf16>
    %58 = vector.shape_cast %57 : vector<1x4x4xbf16> to vector<4x4xbf16>
    %cst_57 = arith.constant dense<0.000000e+00> : vector<256x4xf32>
    %59 = tpu.matmul %56, %58, %cst_57 {dimension_numbers = #tpu.dot_dimension_numbers<[1], [0], [0], [1], [0, 0, 1, 1], [], []>} : vector<256x4xbf16>, vector<4x4xbf16>, vector<256x4xf32> -> vector<256x4xf32>
    %60 = arith.addf %53, %59 : vector<256x4xf32>
    %c2_58 = arith.constant 2 : index
    %c1_59 = arith.constant 1 : index
    %c0_60 = arith.constant 0 : index
    %61 = vector.load %arg11[%c2_58, %c1_59, %c0_60] : memref<18x18x4xf32, #tpu.memory_space<vmem>>, vector<16x16x4xf32>
    %62 = vector.shape_cast %61 : vector<16x16x4xf32> to vector<256x4xf32>
    %63 = arith.truncf %62 : vector<256x4xf32> to vector<256x4xbf16>
    %c7 = arith.constant 7 : index
    %c0_61 = arith.constant 0 : index
    %c0_62 = arith.constant 0 : index
    %64 = vector.load %arg4[%c7, %c0_61, %c0_62] : memref<9x4x4xbf16, #tpu.memory_space<vmem>>, vector<1x4x4xbf16>
    %65 = vector.shape_cast %64 : vector<1x4x4xbf16> to vector<4x4xbf16>
    %cst_63 = arith.constant dense<0.000000e+00> : vector<256x4xf32>
    %66 = tpu.matmul %63, %65, %cst_63 {dimension_numbers = #tpu.dot_dimension_numbers<[1], [0], [0], [1], [0, 0, 1, 1], [], []>} : vector<256x4xbf16>, vector<4x4xbf16>, vector<256x4xf32> -> vector<256x4xf32>
    %67 = arith.addf %60, %66 : vector<256x4xf32>
    %c2_64 = arith.constant 2 : index
    %c2_65 = arith.constant 2 : index
    %c0_66 = arith.constant 0 : index
    %68 = vector.load %arg11[%c2_64, %c2_65, %c0_66] : memref<18x18x4xf32, #tpu.memory_space<vmem>>, vector<16x16x4xf32>
    %69 = vector.shape_cast %68 : vector<16x16x4xf32> to vector<256x4xf32>
    %70 = arith.truncf %69 : vector<256x4xf32> to vector<256x4xbf16>
    %c8 = arith.constant 8 : index
    %c0_67 = arith.constant 0 : index
    %c0_68 = arith.constant 0 : index
    %71 = vector.load %arg4[%c8, %c0_67, %c0_68] : memref<9x4x4xbf16, #tpu.memory_space<vmem>>, vector<1x4x4xbf16>
    %72 = vector.shape_cast %71 : vector<1x4x4xbf16> to vector<4x4xbf16>
    %cst_69 = arith.constant dense<0.000000e+00> : vector<256x4xf32>
    %73 = tpu.matmul %70, %72, %cst_69 {dimension_numbers = #tpu.dot_dimension_numbers<[1], [0], [0], [1], [0, 0, 1, 1], [], []>} : vector<256x4xbf16>, vector<4x4xbf16>, vector<256x4xf32> -> vector<256x4xf32>
    %74 = arith.addf %67, %73 : vector<256x4xf32>
    %c0_70 = arith.constant 0 : index
    %c0_71 = arith.constant 0 : index
    %75 = vector.load %arg5[%c0_70, %c0_71] : memref<1x4xf32, #tpu.memory_space<vmem>>, vector<1x4xf32>
    %76 = vector.broadcast %75 : vector<1x4xf32> to vector<256x4xf32>
    %77 = arith.addf %74, %76 : vector<256x4xf32>
    %cst_72 = arith.constant 0.000000e+00 : f32
    %78 = vector.broadcast %cst_72 : f32 to vector<256x4xf32>
    %79 = arith.maximumf %77, %78 : vector<256x4xf32>
    %80 = arith.truncf %79 : vector<256x4xf32> to vector<256x4xbf16>
    %c0_73 = arith.constant 0 : index
    %c0_74 = arith.constant 0 : index
    %81 = vector.load %arg6[%c0_73, %c0_74] : memref<4x16xbf16, #tpu.memory_space<vmem>>, vector<4x16xbf16>
    %cst_75 = arith.constant dense<0.000000e+00> : vector<256x16xf32>
    %82 = tpu.matmul %80, %81, %cst_75 {dimension_numbers = #tpu.dot_dimension_numbers<[1], [0], [0], [1], [0, 0, 1, 1], [], []>} : vector<256x4xbf16>, vector<4x16xbf16>, vector<256x16xf32> -> vector<256x16xf32>
    %c0_76 = arith.constant 0 : index
    %c0_77 = arith.constant 0 : index
    %83 = vector.load %arg7[%c0_76, %c0_77] : memref<1x16xf32, #tpu.memory_space<vmem>>, vector<1x16xf32>
    %84 = vector.broadcast %83 : vector<1x16xf32> to vector<256x16xf32>
    %85 = arith.addf %82, %84 : vector<256x16xf32>
    %c0_78 = arith.constant 0 : index
    %c0_79 = arith.constant 0 : index
    %86 = vector.load %arg8[%c0_78, %c0_79] : memref<4x16xbf16, #tpu.memory_space<vmem>>, vector<4x16xbf16>
    %cst_80 = arith.constant dense<0.000000e+00> : vector<256x16xf32>
    %87 = tpu.matmul %1, %86, %cst_80 {dimension_numbers = #tpu.dot_dimension_numbers<[1], [0], [0], [1], [0, 0, 1, 1], [], []>} : vector<256x4xbf16>, vector<4x16xbf16>, vector<256x16xf32> -> vector<256x16xf32>
    %c0_81 = arith.constant 0 : index
    %c0_82 = arith.constant 0 : index
    %88 = vector.load %arg9[%c0_81, %c0_82] : memref<1x16xf32, #tpu.memory_space<vmem>>, vector<1x16xf32>
    %89 = vector.broadcast %88 : vector<1x16xf32> to vector<256x16xf32>
    %90 = arith.addf %87, %89 : vector<256x16xf32>
    %91 = arith.addf %85, %90 : vector<256x16xf32>
    %cst_83 = arith.constant 0.000000e+00 : f32
    %92 = vector.broadcast %cst_83 : f32 to vector<256x16xf32>
    %93 = arith.maximumf %91, %92 : vector<256x16xf32>
    %94 = vector.shape_cast %93 : vector<256x16xf32> to vector<1x16x16x16xf32>
    %c0_84 = arith.constant 0 : index
    %c0_85 = arith.constant 0 : index
    %c0_86 = arith.constant 0 : index
    %c0_87 = arith.constant 0 : index
    %95 = vector.load %arg10[%c0_84, %c0_85, %c0_86, %c0_87] : memref<1x16x16x16xf32, #tpu.memory_space<vmem>>, vector<1x16x16x16xf32>
    tpu.vector_store %arg10[%c0_84, %c0_85, %c0_86, %c0_87], %94 {strides = array<i32>} : memref<1x16x16x16xf32, #tpu.memory_space<vmem>>, vector<1x16x16x16xf32>,
    return
  }
  func.func @transform_0(%arg0: i32) -> (i32, i32, i32, i32) {
    %c0_i32 = arith.constant 0 : i32
    %c0_i32_0 = arith.constant 0 : i32
    %c0_i32_1 = arith.constant 0 : i32
    %c0_i32_2 = arith.constant 0 : i32
    return %arg0, %c0_i32, %c0_i32_0, %c0_i32_1 : i32, i32, i32, i32
  }
  func.func @transform_1(%arg0: i32) -> (i32, i32) {
    %c0_i32 = arith.constant 0 : i32
    %c0_i32_0 = arith.constant 0 : i32
    %c0_i32_1 = arith.constant 0 : i32
    return %c0_i32, %c0_i32_0 : i32, i32
  }
  func.func @transform_2(%arg0: i32) -> (i32, i32) {
    %c0_i32 = arith.constant 0 : i32
    %c0_i32_0 = arith.constant 0 : i32
    %c0_i32_1 = arith.constant 0 : i32
    return %c0_i32, %c0_i32_0 : i32, i32
  }
  func.func @transform_3(%arg0: i32) -> (i32, i32, i32) {
    %c0_i32 = arith.constant 0 : i32
    %c0_i32_0 = arith.constant 0 : i32
    %c0_i32_1 = arith.constant 0 : i32
    %c0_i32_2 = arith.constant 0 : i32
    return %c0_i32, %c0_i32_0, %c0_i32_1 : i32, i32, i32
  }
  func.func @transform_4(%arg0: i32) -> (i32, i32) {
    %c0_i32 = arith.constant 0 : i32
    %c0_i32_0 = arith.constant 0 : i32
    %c0_i32_1 = arith.constant 0 : i32
    return %c0_i32, %c0_i32_0 : i32, i32
  }
  func.func @transform_5(%arg0: i32) -> (i32, i32) {
    %c0_i32 = arith.constant 0 : i32
    %c0_i32_0 = arith.constant 0 : i32
    %c0_i32_1 = arith.constant 0 : i32
    return %c0_i32, %c0_i32_0 : i32, i32
  }
  func.func @transform_6(%arg0: i32) -> (i32, i32) {
    %c0_i32 = arith.constant 0 : i32
    %c0_i32_0 = arith.constant 0 : i32
    %c0_i32_1 = arith.constant 0 : i32
    return %c0_i32, %c0_i32_0 : i32, i32
  }
  func.func @transform_7(%arg0: i32) -> (i32, i32) {
    %c0_i32 = arith.constant 0 : i32
    %c0_i32_0 = arith.constant 0 : i32
    %c0_i32_1 = arith.constant 0 : i32
    return %c0_i32, %c0_i32_0 : i32, i32
  }
  func.func @transform_8(%arg0: i32) -> (i32, i32) {
    %c0_i32 = arith.constant 0 : i32
    %c0_i32_0 = arith.constant 0 : i32
    %c0_i32_1 = arith.constant 0 : i32
    return %c0_i32, %c0_i32_0 : i32, i32
  }
  func.func @transform_9(%arg0: i32) -> (i32, i32, i32, i32) {
    %c0_i32 = arith.constant 0 : i32
    %c0_i32_0 = arith.constant 0 : i32
    %c0_i32_1 = arith.constant 0 : i32
    %c0_i32_2 = arith.constant 0 : i32
    return %arg0, %c0_i32, %c0_i32_0, %c0_i32_1 : i32, i32, i32, i32
  }
}

</mosaic_0001>

<llo_original>
// kernel: tpu_custom_call.1
$region0: #{tpu_custom_call.1}
  #allocation0 [shape = 'u32[]', space=smem, size = 0x4, offset = 0x4, fixed_abs, tag = 'smem constant byte address 0x4 - core index']
  #allocation1 [shape = 'u32[72,128]{1,0:T(1,128)}', space=vmem, size = 0x9000, scoped, tag = 'internal scratch']
  #allocation2 [shape = 'f32[18,18,4]{2,1,0:T(8,128)}', space=vmem, size = 0x36000, scoped, tag = 'scratch operand']
  %s0 = inlined_call_operand.vmem [shape: bf16[2,16,16,4], index: 0, kind: input, shape index: {}]
  %s1 = inlined_call_operand.vmem [shape: bf16[4,4], index: 1, kind: input, shape index: {}]
  %s2 = inlined_call_operand.vmem [shape: f32[1,4], index: 2, kind: input, shape index: {}]
  %s3 = inlined_call_operand.vmem [shape: bf16[9,4,4], index: 3, kind: input, shape index: {}]
  %s4 = inlined_call_operand.vmem [shape: f32[1,4], index: 4, kind: input, shape index: {}]
  %s5 = inlined_call_operand.vmem [shape: bf16[4,16], index: 5, kind: input, shape index: {}]
  %s6 = inlined_call_operand.vmem [shape: f32[1,16], index: 6, kind: input, shape index: {}]
  %s7 = inlined_call_operand.vmem [shape: bf16[4,16], index: 7, kind: input, shape index: {}]
  %s8 = inlined_call_operand.vmem [shape: f32[1,16], index: 8, kind: input, shape index: {}]
  %s9 = inlined_call_operand.hbm [shape: f32[2,16,16,16], index: 9, kind: output, shape index: {}]
  %s10 = sld [smem:[#allocation0]]
  $region69: #{tpu_custom_call.1} parent=0
    _
  %s12 = ssub.s32 1, %s10
  %s13 = scalar_select 0, %s12, %s10
  $region1: #{tpu_custom_call.1} parent=0
    #allocation3 [shape = 'u8[262144]{0}', space=vmem, size = 0x40000, scoped, tag = 'output window, operand 0']
    #allocation4 [shape = 's32[2]{0}', space=sflag, size = 0x8, scoped, tag = 'scoped memory for tpu_custom_call.1']
    %14 = vsyncpa [#allocation4], 0
    %s15 = scalar_lea.sflag [#allocation4], 1
    %16 = vsyncpa %s15, 0
    loop: start=0, step=1, limit=4
    $region2: #{tpu_custom_call.1} parent=1 // loop_pre_header
      _
    $region3: #{tpu_custom_call.1} parent=1 // loop_header
      %s18 = sphi 0, %s22
      %p19 = scmp.ge.s32.totalorder %s18, 4
      %s28 = sphi 0, %s30
      %s31 = sphi 0, %s28
      %s32 = sphi 0, %s31
      %s48 = sphi 0, %s32
      %s52 = sphi 0, %s52
      %s54 = sphi 0, %s52
      %s55 = sphi 0, %s54
      %s69 = sphi 0, %s55
      %s73 = sphi 0, %s73
      %s75 = sphi 0, %s73
      %s76 = sphi 0, %s75
      %s90 = sphi 0, %s76
      %s94 = sphi 0, %s94
      %s96 = sphi 0, %s94
      %s97 = sphi 0, %s96
      %s111 = sphi 0, %s97
      %s115 = sphi 0, %s115
      %s117 = sphi 0, %s115
      %s118 = sphi 0, %s117
      %s132 = sphi 0, %s118
      %s136 = sphi 0, %s136
      %s138 = sphi 0, %s136
      %s139 = sphi 0, %s138
      %s153 = sphi 0, %s139
      %s157 = sphi 0, %s157
      %s159 = sphi 0, %s157
      %s160 = sphi 0, %s159
      %s174 = sphi 0, %s160
      %s178 = sphi 0, %s178
      %s180 = sphi 0, %s178
      %s181 = sphi 0, %s180
      %s195 = sphi 0, %s181
      %s199 = sphi 0, %s199
      %s201 = sphi 0, %s199
      %s202 = sphi 0, %s201
      %s216 = sphi 0, %s202
      %s222 = sphi 0, %s224
      %s225 = sphi 0, %s222
      %s226 = sphi 0, %s225
      %s242 = sphi 0, %s226
    $region4: #{tpu_custom_call.1} parent=1 // loop_header_branch
      %21 = sbr.rel (%p19) target = $region8
    $region5: #{tpu_custom_call.1} parent=1 // loop_body
      %s23 = ssub.s32 %s18, 1
      %s24 = ssub.s32 %s18, 2
      %s25 = sadd.s32 %s18, 1
      %s26 = ssub.s32 %s18, %s25
      %p27 = scmp.eq.s32.totalorder %s26, 0
      %s29 = sadd.s32 %s28, 1
      %s30 = scalar_select %p27, %s28, %s29
      %p33 = pneg %p27
      %p34 = scmp.eq.s32.totalorder %s18, 1
      %p35 = por %p33, %p34
      %p36 = scmp.ne.s32.totalorder %s28, %s31
      %p37 = scmp.eq.s32.totalorder %s18, 0
      %p38 = por %p36, %p37
      %p39 = scmp.ne.s32.totalorder %s28, %s31
      %p40 = scmp.eq.s32.totalorder %s23, 1
      %p41 = por %p39, %p40
      %p42 = scmp.ne.s32.totalorder %s31, %s32
      %p43 = scmp.eq.s32.totalorder %s23, 0
      %p44 = por %p42, %p43
      %p45 = scmp.ne.s32.totalorder %s31, %s32
      %p46 = scmp.eq.s32.totalorder %s24, 1
      %p47 = por %p45, %p46
      %p49 = scmp.ne.s32.totalorder %s32, %s48
      %p50 = scmp.eq.s32.totalorder %s24, 0
      %p51 = por %p49, %p50
      %s53 = sadd.s32 %s52, 1
      %p56 = scmp.eq.s32.totalorder %s18, 1
      %p57 = scmp.ne.s32.totalorder %s52, %s54
      %p58 = scmp.eq.s32.totalorder %s18, 0
      %p59 = por %p57, %p58
      %p60 = scmp.ne.s32.totalorder %s52, %s54
      %p61 = scmp.eq.s32.totalorder %s23, 1
      %p62 = por %p60, %p61
      %p63 = scmp.ne.s32.totalorder %s54, %s55
      %p64 = scmp.eq.s32.totalorder %s23, 0
      %p65 = por %p63, %p64
      %p66 = scmp.ne.s32.totalorder %s54, %s55
      %p67 = scmp.eq.s32.totalorder %s24, 1
      %p68 = por %p66, %p67
      %p70 = scmp.ne.s32.totalorder %s55, %s69
      %p71 = scmp.eq.s32.totalorder %s24, 0
      %p72 = por %p70, %p71
      %s74 = sadd.s32 %s73, 1
      %p77 = scmp.eq.s32.totalorder %s18, 1
      %p78 = scmp.ne.s32.totalorder %s73, %s75
      %p79 = scmp.eq.s32.totalorder %s18, 0
      %p80 = por %p78, %p79
      %p81 = scmp.ne.s32.totalorder %s73, %s75
      %p82 = scmp.eq.s32.totalorder %s23, 1
      %p83 = por %p81, %p82
      %p84 = scmp.ne.s32.totalorder %s75, %s76
      %p85 = scmp.eq.s32.totalorder %s23, 0
      %p86 = por %p84, %p85
      %p87 = scmp.ne.s32.totalorder %s75, %s76
      %p88 = scmp.eq.s32.totalorder %s24, 1
      %p89 = por %p87, %p88
      %p91 = scmp.ne.s32.totalorder %s76, %s90
      %p92 = scmp.eq.s32.totalorder %s24, 0
      %p93 = por %p91, %p92
      %s95 = sadd.s32 %s94, 1
      %p98 = scmp.eq.s32.totalorder %s18, 1
      %p99 = scmp.ne.s32.totalorder %s94, %s96
      %p100 = scmp.eq.s32.totalorder %s18, 0
      %p101 = por %p99, %p100
      %p102 = scmp.ne.s32.totalorder %s94, %s96
      %p103 = scmp.eq.s32.totalorder %s23, 1
      %p104 = por %p102, %p103
      %p105 = scmp.ne.s32.totalorder %s96, %s97
      %p106 = scmp.eq.s32.totalorder %s23, 0
      %p107 = por %p105, %p106
      %p108 = scmp.ne.s32.totalorder %s96, %s97
      %p109 = scmp.eq.s32.totalorder %s24, 1
      %p110 = por %p108, %p109
      %p112 = scmp.ne.s32.totalorder %s97, %s111
      %p113 = scmp.eq.s32.totalorder %s24, 0
      %p114 = por %p112, %p113
      %s116 = sadd.s32 %s115, 1
      %p119 = scmp.eq.s32.totalorder %s18, 1
      %p120 = scmp.ne.s32.totalorder %s115, %s117
      %p121 = scmp.eq.s32.totalorder %s18, 0
      %p122 = por %p120, %p121
      %p123 = scmp.ne.s32.totalorder %s115, %s117
      %p124 = scmp.eq.s32.totalorder %s23, 1
      %p125 = por %p123, %p124
      %p126 = scmp.ne.s32.totalorder %s117, %s118
      %p127 = scmp.eq.s32.totalorder %s23, 0
      %p128 = por %p126, %p127
      %p129 = scmp.ne.s32.totalorder %s117, %s118
      %p130 = scmp.eq.s32.totalorder %s24, 1
      %p131 = por %p129, %p130
      %p133 = scmp.ne.s32.totalorder %s118, %s132
      %p134 = scmp.eq.s32.totalorder %s24, 0
      %p135 = por %p133, %p134
      %s137 = sadd.s32 %s136, 1
      %p140 = scmp.eq.s32.totalorder %s18, 1
      %p141 = scmp.ne.s32.totalorder %s136, %s138
      %p142 = scmp.eq.s32.totalorder %s18, 0
      %p143 = por %p141, %p142
      %p144 = scmp.ne.s32.totalorder %s136, %s138
      %p145 = scmp.eq.s32.totalorder %s23, 1
      %p146 = por %p144, %p145
      %p147 = scmp.ne.s32.totalorder %s138, %s139
      %p148 = scmp.eq.s32.totalorder %s23, 0
      %p149 = por %p147, %p148
      %p150 = scmp.ne.s32.totalorder %s138, %s139
      %p151 = scmp.eq.s32.totalorder %s24, 1
      %p152 = por %p150, %p151
      %p154 = scmp.ne.s32.totalorder %s139, %s153
      %p155 = scmp.eq.s32.totalorder %s24, 0
      %p156 = por %p154, %p155
      %s158 = sadd.s32 %s157, 1
      %p161 = scmp.eq.s32.totalorder %s18, 1
      %p162 = scmp.ne.s32.totalorder %s157, %s159
      %p163 = scmp.eq.s32.totalorder %s18, 0
      %p164 = por %p162, %p163
      %p165 = scmp.ne.s32.totalorder %s157, %s159
      %p166 = scmp.eq.s32.totalorder %s23, 1
      %p167 = por %p165, %p166
      %p168 = scmp.ne.s32.totalorder %s159, %s160
      %p169 = scmp.eq.s32.totalorder %s23, 0
      %p170 = por %p168, %p169
      %p171 = scmp.ne.s32.totalorder %s159, %s160
      %p172 = scmp.eq.s32.totalorder %s24, 1
      %p173 = por %p171, %p172
      %p175 = scmp.ne.s32.totalorder %s160, %s174
      %p176 = scmp.eq.s32.totalorder %s24, 0
      %p177 = por %p175, %p176
      %s179 = sadd.s32 %s178, 1
      %p182 = scmp.eq.s32.totalorder %s18, 1
      %p183 = scmp.ne.s32.totalorder %s178, %s180
      %p184 = scmp.eq.s32.totalorder %s18, 0
      %p185 = por %p183, %p184
      %p186 = scmp.ne.s32.totalorder %s178, %s180
      %p187 = scmp.eq.s32.totalorder %s23, 1
      %p188 = por %p186, %p187
      %p189 = scmp.ne.s32.totalorder %s180, %s181
      %p190 = scmp.eq.s32.totalorder %s23, 0
      %p191 = por %p189, %p190
      %p192 = scmp.ne.s32.totalorder %s180, %s181
      %p193 = scmp.eq.s32.totalorder %s24, 1
      %p194 = por %p192, %p193
      %p196 = scmp.ne.s32.totalorder %s181, %s195
      %p197 = scmp.eq.s32.totalorder %s24, 0
      %p198 = por %p196, %p197
      %s200 = sadd.s32 %s199, 1
      %p203 = scmp.eq.s32.totalorder %s18, 1
      %p204 = scmp.ne.s32.totalorder %s199, %s201
      %p205 = scmp.eq.s32.totalorder %s18, 0
      %p206 = por %p204, %p205
      %p207 = scmp.ne.s32.totalorder %s199, %s201
      %p208 = scmp.eq.s32.totalorder %s23, 1
      %p209 = por %p207, %p208
      %p210 = scmp.ne.s32.totalorder %s201, %s202
      %p211 = scmp.eq.s32.totalorder %s23, 0
      %p212 = por %p210, %p211
      %p213 = scmp.ne.s32.totalorder %s201, %s202
      %p214 = scmp.eq.s32.totalorder %s24, 1
      %p215 = por %p213, %p214
      %p217 = scmp.ne.s32.totalorder %s202, %s216
      %p218 = scmp.eq.s32.totalorder %s24, 0
      %p219 = por %p217, %p218
      %s220 = ssub.s32 %s18, %s25
      %p221 = scmp.eq.s32.totalorder %s220, 0
      %s223 = sadd.s32 %s222, 1
      %s224 = scalar_select %p221, %s222, %s223
      %p227 = pneg %p221
      %p228 = scmp.eq.s32.totalorder %s18, 1
      %p229 = por %p227, %p228
      %p230 = scmp.ne.s32.totalorder %s222, %s225
      %p231 = scmp.eq.s32.totalorder %s18, 0
      %p232 = por %p230, %p231
      %p233 = scmp.ne.s32.totalorder %s222, %s225
      %p234 = scmp.eq.s32.totalorder %s23, 1
      %p235 = por %p233, %p234
      %p236 = scmp.ne.s32.totalorder %s225, %s226
      %p237 = scmp.eq.s32.totalorder %s23, 0
      %p238 = por %p236, %p237
      %p239 = scmp.ne.s32.totalorder %s225, %s226
      %p240 = scmp.eq.s32.totalorder %s24, 1
      %p241 = por %p239, %p240
      %p243 = scmp.ne.s32.totalorder %s226, %s242
      %p244 = scmp.eq.s32.totalorder %s24, 0
      %p245 = por %p243, %p244
      %p246 = scmp.le.s32.totalorder 1, %s18
      %p247 = scmp.lt.s32.totalorder %s18, 3
      %p248 = pnand %p246, %p247
      %p249 = pneg %p248
      // Predicated region
      $region9: #{tpu_custom_call.1} parent=5 // pred_check
        _
      $region10: #{tpu_custom_call.1} parent=5 // pred_check_branch
        %251 = sbr.rel (%p248) target = $region12
      $region11: #{tpu_custom_call.1} parent=5 // pred_region
        %s252 = ssub.s32 %s18, 1
        // Predicated region
        $region13: #{tpu_custom_call.1} parent=11 // pred_check
          %p253 = pneg %p65
        $region14: #{tpu_custom_call.1} parent=11 // pred_check_branch
          %255 = sbr.rel (%p253) target = $region16
        $region15: #{tpu_custom_call.1} parent=11 // pred_region
          _
        $region16: #{tpu_custom_call.1} parent=11 // pred_fallthru
          _
        // Predicated region
        $region17: #{tpu_custom_call.1} parent=11 // pred_check
          %p256 = pneg %p86
        $region18: #{tpu_custom_call.1} parent=11 // pred_check_branch
          %258 = sbr.rel (%p256) target = $region20
        $region19: #{tpu_custom_call.1} parent=11 // pred_region
          _
        $region20: #{tpu_custom_call.1} parent=11 // pred_fallthru
          _
        // Predicated region
        $region21: #{tpu_custom_call.1} parent=11 // pred_check
          %p259 = pneg %p107
        $region22: #{tpu_custom_call.1} parent=11 // pred_check_branch
          %261 = sbr.rel (%p259) target = $region24
        $region23: #{tpu_custom_call.1} parent=11 // pred_region
          _
        $region24: #{tpu_custom_call.1} parent=11 // pred_fallthru
          _
        // Predicated region
        $region25: #{tpu_custom_call.1} parent=11 // pred_check
          %p262 = pneg %p128
        $region26: #{tpu_custom_call.1} parent=11 // pred_check_branch
          %264 = sbr.rel (%p262) target = $region28
        $region27: #{tpu_custom_call.1} parent=11 // pred_region
          _
        $region28: #{tpu_custom_call.1} parent=11 // pred_fallthru
          _
        // Predicated region
        $region29: #{tpu_custom_call.1} parent=11 // pred_check
          %p265 = pneg %p149
        $region30: #{tpu_custom_call.1} parent=11 // pred_check_branch
          %267 = sbr.rel (%p265) target = $region32
        $region31: #{tpu_custom_call.1} parent=11 // pred_region
          _
        $region32: #{tpu_custom_call.1} parent=11 // pred_fallthru
          _
        // Predicated region
        $region33: #{tpu_custom_call.1} parent=11 // pred_check
          %p268 = pneg %p170
        $region34: #{tpu_custom_call.1} parent=11 // pred_check_branch
          %270 = sbr.rel (%p268) target = $region36
        $region35: #{tpu_custom_call.1} parent=11 // pred_region
          _
        $region36: #{tpu_custom_call.1} parent=11 // pred_fallthru
          _
        // Predicated region
        $region37: #{tpu_custom_call.1} parent=11 // pred_check
          %p271 = pneg %p191
        $region38: #{tpu_custom_call.1} parent=11 // pred_check_branch
          %273 = sbr.rel (%p271) target = $region40
        $region39: #{tpu_custom_call.1} parent=11 // pred_region
          _
        $region40: #{tpu_custom_call.1} parent=11 // pred_fallthru
          _
        // Predicated region
        $region41: #{tpu_custom_call.1} parent=11 // pred_check
          %p274 = pneg %p212
        $region42: #{tpu_custom_call.1} parent=11 // pred_check_branch
          %276 = sbr.rel (%p274) target = $region44
        $region43: #{tpu_custom_call.1} parent=11 // pred_region
          _
        $region44: #{tpu_custom_call.1} parent=11 // pred_fallthru
          _
      $region12: #{tpu_custom_call.1} parent=5 // pred_fallthru
        _
      %p277 = scmp.lt.s32.totalorder %s18, 2
      // Predicated region
      $region45: #{tpu_custom_call.1} parent=5 // pred_check
        %p278 = pneg %p277
      $region46: #{tpu_custom_call.1} parent=5 // pred_check_branch
        %280 = sbr.rel (%p278) target = $region48
      $region47: #{tpu_custom_call.1} parent=5 // pred_region
        // Predicated region
        $region49: #{tpu_custom_call.1} parent=47 // pred_check
          %p281 = pneg %p38
        $region50: #{tpu_custom_call.1} parent=47 // pred_check_branch
          %283 = sbr.rel (%p281) target = $region52
        $region51: #{tpu_custom_call.1} parent=47 // pred_region
          %p284 = scmp.lt.s32.totalorder %s18, 1
          %s285 = scalar_select %p284, %s18, 1
          %s286 = smul.addr %s285, 32
          %s287 = smul.addr %s286, 4
          %s288 = scalar_lea.vmem %s0, %s287
        $region52: #{tpu_custom_call.1} parent=47 // pred_fallthru
          _
      $region48: #{tpu_custom_call.1} parent=5 // pred_fallthru
        _
      %p289 = scmp.le.s32.totalorder 1, %s18
      %p290 = scmp.lt.s32.totalorder %s18, 3
      %p291 = pnand %p289, %p290
      %p292 = pneg %p291
      // Predicated region
      $region53: #{tpu_custom_call.1} parent=5 // pred_check
        _
      $region54: #{tpu_custom_call.1} parent=5 // pred_check_branch
        %294 = sbr.rel (%p291) target = $region56
      $region55: #{tpu_custom_call.1} parent=5 // pred_region
        %s295 = ssub.s32 %s18, 1
        %p296 = scmp.lt.s32.totalorder %s23, 1
        %s297 = scalar_select %p296, %s23, 1
        %s298 = smul.addr %s297, 32
        %s299 = smul.addr %s298, 4
        %s300 = scalar_lea.vmem %s0, %s299
        %p301 = pneg %p44
        %p302 = pneg %p41
        %p303 = pneg %p65
        %p304 = pneg %p62
        %p305 = pneg %p86
        %p306 = pneg %p83
        %p307 = pneg %p107
        %p308 = pneg %p104
        %p309 = pneg %p128
        %p310 = pneg %p125
        %p311 = pneg %p149
        %p312 = pneg %p146
        %p313 = pneg %p170
        %p314 = pneg %p167
        %p315 = pneg %p191
        %p316 = pneg %p188
        %p317 = pneg %p212
        %p318 = pneg %p209
        %p319 = pneg %p238
        %p320 = pneg %p235
        %s321 = sand.u32 %s225, 1
        %s322 = scalar_lea.sflag [#allocation4], %s321
        %s323 = sand.u32 %s225, 1
        %s324 = smul.addr %s323, 256
        %s325 = scalar_lea.vmem [#allocation3], %s324
        %p326 = scmp.lt.s32.totalorder %s23, 1
        %s327 = scalar_select %p326, %s23, 1
        %s328 = smul.addr %s327, 32
        %s329 = smul.addr %s328, 4
        %s330 = scalar_lea.vmem %s0, %s329
        %v332 = vld [vmem:[%s330] sm:$0xf]
        %v333 = vld [vmem:[%s330 + $0x4] sm:$0xf]
        %v334 = vld [vmem:[%s330 + $0x8] sm:$0xf]
        %v335 = vld [vmem:[%s330 + $0xc] sm:$0xf]
        %v336 = vld [vmem:[%s330 + $0x10] sm:$0xf]
        %v337 = vld [vmem:[%s330 + $0x14] sm:$0xf]
        %v338 = vld [vmem:[%s330 + $0x18] sm:$0xf]
        %v339 = vld [vmem:[%s330 + $0x1c] sm:$0xf]
        %v340 = vld [vmem:[%s330 + $0x20] sm:$0xf]
        %v341 = vld [vmem:[%s330 + $0x24] sm:$0xf]
        %v342 = vld [vmem:[%s330 + $0x28] sm:$0xf]
        %v343 = vld [vmem:[%s330 + $0x2c] sm:$0xf]
        %v344 = vld [vmem:[%s330 + $0x30] sm:$0xf]
        %v345 = vld [vmem:[%s330 + $0x34] sm:$0xf]
        %v346 = vld [vmem:[%s330 + $0x38] sm:$0xf]
        %v347 = vld [vmem:[%s330 + $0x3c] sm:$0xf]
        %v348 = vld [vmem:[%s330 + $0x40] sm:$0xf]
        %v349 = vld [vmem:[%s330 + $0x44] sm:$0xf]
        %v350 = vld [vmem:[%s330 + $0x48] sm:$0xf]
        %v351 = vld [vmem:[%s330 + $0x4c] sm:$0xf]
        %v352 = vld [vmem:[%s330 + $0x50] sm:$0xf]
        %v353 = vld [vmem:[%s330 + $0x54] sm:$0xf]
        %v354 = vld [vmem:[%s330 + $0x58] sm:$0xf]
        %v355 = vld [vmem:[%s330 + $0x5c] sm:$0xf]
        %v356 = vld [vmem:[%s330 + $0x60] sm:$0xf]
        %v357 = vld [vmem:[%s330 + $0x64] sm:$0xf]
        %v358 = vld [vmem:[%s330 + $0x68] sm:$0xf]
        %v359 = vld [vmem:[%s330 + $0x6c] sm:$0xf]
        %v360 = vld [vmem:[%s330 + $0x70] sm:$0xf]
        %v361 = vld [vmem:[%s330 + $0x74] sm:$0xf]
        %v362 = vld [vmem:[%s330 + $0x78] sm:$0xf]
        %v363 = vld [vmem:[%s330 + $0x7c] sm:$0xf]
        %v364 = vld [vmem:[%s1] sm:$0x3]
        %v365 = vld [vmem:[%s2] sm:$0x1]
        %v367 = vperm.slane %v365, 0
        %v401 = vunpack.c.l.b16 %v332
        %v402 = vunpack.c.l.b16 %v333
        %v403 = vunpack.c.l.b16 %v334
        %v404 = vunpack.c.l.b16 %v335
        %v405 = vunpack.c.l.b16 %v336
        %v406 = vunpack.c.l.b16 %v337
        %v407 = vunpack.c.l.b16 %v338
        %v408 = vunpack.c.l.b16 %v339
        %v409 = vunpack.c.l.b16 %v340
        %v410 = vunpack.c.l.b16 %v341
        %v411 = vunpack.c.l.b16 %v342
        %v412 = vunpack.c.l.b16 %v343
        %v413 = vunpack.c.l.b16 %v344
        %v414 = vunpack.c.l.b16 %v345
        %v415 = vunpack.c.l.b16 %v346
        %v416 = vunpack.c.l.b16 %v347
        %v417 = vunpack.c.l.b16 %v348
        %v418 = vunpack.c.l.b16 %v349
        %v419 = vunpack.c.l.b16 %v350
        %v420 = vunpack.c.l.b16 %v351
        %v421 = vunpack.c.l.b16 %v352
        %v422 = vunpack.c.l.b16 %v353
        %v423 = vunpack.c.l.b16 %v354
        %v424 = vunpack.c.l.b16 %v355
        %v425 = vunpack.c.l.b16 %v356
        %v426 = vunpack.c.l.b16 %v357
        %v427 = vunpack.c.l.b16 %v358
        %v428 = vunpack.c.l.b16 %v359
        %v429 = vunpack.c.l.b16 %v360
        %v430 = vunpack.c.l.b16 %v361
        %v431 = vunpack.c.l.b16 %v362
        %v432 = vunpack.c.l.b16 %v363
        %v433 = vpack.c.b16 %v402, %v401
        %v434 = vpack.c.b16 %v404, %v403
        %v435 = vpack.c.b16 %v406, %v405
        %v436 = vpack.c.b16 %v408, %v407
        %v437 = vpack.c.b16 %v410, %v409
        %v438 = vpack.c.b16 %v412, %v411
        %v439 = vpack.c.b16 %v414, %v413
        %v440 = vpack.c.b16 %v416, %v415
        %v441 = vpack.c.b16 %v418, %v417
        %v442 = vpack.c.b16 %v420, %v419
        %v443 = vpack.c.b16 %v422, %v421
        %v444 = vpack.c.b16 %v424, %v423
        %v445 = vpack.c.b16 %v426, %v425
        %v446 = vpack.c.b16 %v428, %v427
        %v447 = vpack.c.b16 %v430, %v429
        %v448 = vpack.c.b16 %v432, %v431
        %vm449 = vcmask 31744
        %v451 = vsel %vm449, %v433, 0
        %v454 = vsel %vm449, %v434, 0
        %v457 = vsel %vm449, %v435, 0
        %v460 = vsel %vm449, %v436, 0
        %v463 = vsel %vm449, %v437, 0
        %v466 = vsel %vm449, %v438, 0
        %v469 = vsel %vm449, %v439, 0
        %v472 = vsel %vm449, %v440, 0
        %v475 = vsel %vm449, %v441, 0
        %v478 = vsel %vm449, %v442, 0
        %v481 = vsel %vm449, %v443, 0
        %v484 = vsel %vm449, %v444, 0
        %v487 = vsel %vm449, %v445, 0
        %v490 = vsel %vm449, %v446, 0
        %v493 = vsel %vm449, %v447, 0
        %v496 = vsel %vm449, %v448, 0
        %vm498 = vcmask 1041408
        %v500 = vsel %vm498, %v364, 0
        %502 = vmatpush.bf16.msra.mxu0 0
        %503 = vmatpush.bf16.msra.mxu0 0
        %504 = vmatpush.bf16.msra.mxu0 0
        %505 = vmatpush.bf16.msra.mxu0 0
        %506 = vmatpush.bf16.msra.mxu0 0
        %507 = vmatpush.bf16.msra.mxu0 0
        %508 = vmatpush.bf16.msra.mxu0 0
        %509 = vmatpush.bf16.msra.mxu0 %v500
        %510 = vmatmul.bf16.gmra.mxu0 %v451
        %v511 = vpop.f32.mrf.mxu0
        %v512 = vadd.f32 %v367, %v511
        %v513 = vpop.f32.mrf.mxu0
        %v514 = vadd.f32 %v367, %v513
        %515 = vmatmul.bf16.gmra.mxu0 %v454
        %v516 = vpop.f32.mrf.mxu0
        %v517 = vadd.f32 %v367, %v516
        %v518 = vpop.f32.mrf.mxu0
        %v519 = vadd.f32 %v367, %v518
        %520 = vmatmul.bf16.gmra.mxu0 %v457
        %v521 = vpop.f32.mrf.mxu0
        %v522 = vadd.f32 %v367, %v521
        %v523 = vpop.f32.mrf.mxu0
        %v524 = vadd.f32 %v367, %v523
        %525 = vmatmul.bf16.gmra.mxu0 %v460
        %v526 = vpop.f32.mrf.mxu0
        %v527 = vadd.f32 %v367, %v526
        %v528 = vpop.f32.mrf.mxu0
        %v529 = vadd.f32 %v367, %v528
        %530 = vmatmul.bf16.gmra.mxu0 %v463
        %v531 = vpop.f32.mrf.mxu0
        %v532 = vadd.f32 %v367, %v531
        %v533 = vpop.f32.mrf.mxu0
        %v534 = vadd.f32 %v367, %v533
        %535 = vmatmul.bf16.gmra.mxu0 %v466
        %v536 = vpop.f32.mrf.mxu0
        %v537 = vadd.f32 %v367, %v536
        %v538 = vpop.f32.mrf.mxu0
        %v539 = vadd.f32 %v367, %v538
        %540 = vmatmul.bf16.gmra.mxu0 %v469
        %v541 = vpop.f32.mrf.mxu0
        %v542 = vadd.f32 %v367, %v541
        %v543 = vpop.f32.mrf.mxu0
        %v544 = vadd.f32 %v367, %v543
        %545 = vmatmul.bf16.gmra.mxu0 %v472
        %v546 = vpop.f32.mrf.mxu0
        %v547 = vadd.f32 %v367, %v546
        %v548 = vpop.f32.mrf.mxu0
        %v549 = vadd.f32 %v367, %v548
        %550 = vmatmul.bf16.gmra.mxu0 %v475
        %v551 = vpop.f32.mrf.mxu0
        %v552 = vadd.f32 %v367, %v551
        %v553 = vpop.f32.mrf.mxu0
        %v554 = vadd.f32 %v367, %v553
        %555 = vmatmul.bf16.gmra.mxu0 %v478
        %v556 = vpop.f32.mrf.mxu0
        %v557 = vadd.f32 %v367, %v556
        %v558 = vpop.f32.mrf.mxu0
        %v559 = vadd.f32 %v367, %v558
        %560 = vmatmul.bf16.gmra.mxu0 %v481
        %v561 = vpop.f32.mrf.mxu0
        %v562 = vadd.f32 %v367, %v561
        %v563 = vpop.f32.mrf.mxu0
        %v564 = vadd.f32 %v367, %v563
        %565 = vmatmul.bf16.gmra.mxu0 %v484
        %v566 = vpop.f32.mrf.mxu0
        %v567 = vadd.f32 %v367, %v566
        %v568 = vpop.f32.mrf.mxu0
        %v569 = vadd.f32 %v367, %v568
        %570 = vmatmul.bf16.gmra.mxu0 %v487
        %v571 = vpop.f32.mrf.mxu0
        %v572 = vadd.f32 %v367, %v571
        %v573 = vpop.f32.mrf.mxu0
        %v574 = vadd.f32 %v367, %v573
        %575 = vmatmul.bf16.gmra.mxu0 %v490
        %v576 = vpop.f32.mrf.mxu0
        %v577 = vadd.f32 %v367, %v576
        %v578 = vpop.f32.mrf.mxu0
        %v579 = vadd.f32 %v367, %v578
        %580 = vmatmul.bf16.gmra.mxu0 %v493
        %v581 = vpop.f32.mrf.mxu0
        %v582 = vadd.f32 %v367, %v581
        %v583 = vpop.f32.mrf.mxu0
        %v584 = vadd.f32 %v367, %v583
        %585 = vmatmul.bf16.gmra.mxu0 %v496
        %v586 = vpop.f32.mrf.mxu0
        %v587 = vadd.f32 %v367, %v586
        %v588 = vpop.f32.mrf.mxu0
        %v589 = vadd.f32 %v367, %v588
        %590 = vdwg.mxu0
        %v591 = vmax.f32 %v512, 0.0
        %v592 = vmax.f32 %v514, 0.0
        %v593 = vmax.f32 %v517, 0.0
        %v594 = vmax.f32 %v519, 0.0
        %v595 = vmax.f32 %v522, 0.0
        %v596 = vmax.f32 %v524, 0.0
        %v597 = vmax.f32 %v527, 0.0
        %v598 = vmax.f32 %v529, 0.0
        %v599 = vmax.f32 %v532, 0.0
        %v600 = vmax.f32 %v534, 0.0
        %v601 = vmax.f32 %v537, 0.0
        %v602 = vmax.f32 %v539, 0.0
        %v603 = vmax.f32 %v542, 0.0
        %v604 = vmax.f32 %v544, 0.0
        %v605 = vmax.f32 %v547, 0.0
        %v606 = vmax.f32 %v549, 0.0
        %v607 = vmax.f32 %v552, 0.0
        %v608 = vmax.f32 %v554, 0.0
        %v609 = vmax.f32 %v557, 0.0
        %v610 = vmax.f32 %v559, 0.0
        %v611 = vmax.f32 %v562, 0.0
        %v612 = vmax.f32 %v564, 0.0
        %v613 = vmax.f32 %v567, 0.0
        %v614 = vmax.f32 %v569, 0.0
        %v615 = vmax.f32 %v572, 0.0
        %v616 = vmax.f32 %v574, 0.0
        %v617 = vmax.f32 %v577, 0.0
        %v618 = vmax.f32 %v579, 0.0
        %v619 = vmax.f32 %v582, 0.0
        %v620 = vmax.f32 %v584, 0.0
        %v621 = vmax.f32 %v587, 0.0
        %v622 = vmax.f32 %v589, 0.0
        %623 = vst.msk [vmem:[#allocation2] sm:$0xff] %vm449, 0.0
        %624 = vst.msk [vmem:[#allocation2 + $0x8] sm:$0xff] %vm449, 0.0
        %vm625 = vcmask 25600
        %626 = vst.msk [vmem:[#allocation2 + $0x10] sm:$0x3] %vm625, 0.0
        %627 = vst.msk [vmem:[#allocation2 + $0x18] sm:$0xff] %vm449, 0.0
        %628 = vst.msk [vmem:[#allocation2 + $0x20] sm:$0xff] %vm449, 0.0
        %629 = vst.msk [vmem:[#allocation2 + $0x28] sm:$0x3] %vm625, 0.0
        %630 = vst.msk [vmem:[#allocation2 + $0x30] sm:$0xff] %vm449, 0.0
        %631 = vst.msk [vmem:[#allocation2 + $0x38] sm:$0xff] %vm449, 0.0
        %632 = vst.msk [vmem:[#allocation2 + $0x40] sm:$0x3] %vm625, 0.0
        %633 = vst.msk [vmem:[#allocation2 + $0x48] sm:$0xff] %vm449, 0.0
        %634 = vst.msk [vmem:[#allocation2 + $0x50] sm:$0xff] %vm449, 0.0
        %635 = vst.msk [vmem:[#allocation2 + $0x58] sm:$0x3] %vm625, 0.0
        %636 = vst.msk [vmem:[#allocation2 + $0x60] sm:$0xff] %vm449, 0.0
        %637 = vst.msk [vmem:[#allocation2 + $0x68] sm:$0xff] %vm449, 0.0
        %638 = vst.msk [vmem:[#allocation2 + $0x70] sm:$0x3] %vm625, 0.0
        %639 = vst.msk [vmem:[#allocation2 + $0x78] sm:$0xff] %vm449, 0.0
        %640 = vst.msk [vmem:[#allocation2 + $0x80] sm:$0xff] %vm449, 0.0
        %641 = vst.msk [vmem:[#allocation2 + $0x88] sm:$0x3] %vm625, 0.0
        %642 = vst.msk [vmem:[#allocation2 + $0x90] sm:$0xff] %vm449, 0.0
        %643 = vst.msk [vmem:[#allocation2 + $0x98] sm:$0xff] %vm449, 0.0
        %644 = vst.msk [vmem:[#allocation2 + $0xa0] sm:$0x3] %vm625, 0.0
        %645 = vst.msk [vmem:[#allocation2 + $0xa8] sm:$0xff] %vm449, 0.0
        %646 = vst.msk [vmem:[#allocation2 + $0xb0] sm:$0xff] %vm449, 0.0
        %647 = vst.msk [vmem:[#allocation2 + $0xb8] sm:$0x3] %vm625, 0.0
        %648 = vst.msk [vmem:[#allocation2 + $0xc0] sm:$0xff] %vm449, 0.0
        %649 = vst.msk [vmem:[#allocation2 + $0xc8] sm:$0xff] %vm449, 0.0
        %650 = vst.msk [vmem:[#allocation2 + $0xd0] sm:$0x3] %vm625, 0.0
        %651 = vst.msk [vmem:[#allocation2 + $0xd8] sm:$0xff] %vm449, 0.0
        %652 = vst.msk [vmem:[#allocation2 + $0xe0] sm:$0xff] %vm449, 0.0
        %653 = vst.msk [vmem:[#allocation2 + $0xe8] sm:$0x3] %vm625, 0.0
        %654 = vst.msk [vmem:[#allocation2 + $0xf0] sm:$0xff] %vm449, 0.0
        %655 = vst.msk [vmem:[#allocation2 + $0xf8] sm:$0xff] %vm449, 0.0
        %656 = vst.msk [vmem:[#allocation2 + $0x100] sm:$0x3] %vm625, 0.0
        %657 = vst.msk [vmem:[#allocation2 + $0x108] sm:$0xff] %vm449, 0.0
        %658 = vst.msk [vmem:[#allocation2 + $0x110] sm:$0xff] %vm449, 0.0
        %659 = vst.msk [vmem:[#allocation2 + $0x118] sm:$0x3] %vm625, 0.0
        %660 = vst.msk [vmem:[#allocation2 + $0x120] sm:$0xff] %vm449, 0.0
        %661 = vst.msk [vmem:[#allocation2 + $0x128] sm:$0xff] %vm449, 0.0
        %662 = vst.msk [vmem:[#allocation2 + $0x130] sm:$0x3] %vm625, 0.0
        %663 = vst.msk [vmem:[#allocation2 + $0x138] sm:$0xff] %vm449, 0.0
        %664 = vst.msk [vmem:[#allocation2 + $0x140] sm:$0xff] %vm449, 0.0
        %665 = vst.msk [vmem:[#allocation2 + $0x148] sm:$0x3] %vm625, 0.0
        %666 = vst.msk [vmem:[#allocation2 + $0x150] sm:$0xff] %vm449, 0.0
        %667 = vst.msk [vmem:[#allocation2 + $0x158] sm:$0xff] %vm449, 0.0
        %668 = vst.msk [vmem:[#allocation2 + $0x160] sm:$0x3] %vm625, 0.0
        %669 = vst.msk [vmem:[#allocation2 + $0x168] sm:$0xff] %vm449, 0.0
        %670 = vst.msk [vmem:[#allocation2 + $0x170] sm:$0xff] %vm449, 0.0
        %671 = vst.msk [vmem:[#allocation2 + $0x178] sm:$0x3] %vm625, 0.0
        %672 = vst.msk [vmem:[#allocation2 + $0x180] sm:$0xff] %vm449, 0.0
        %673 = vst.msk [vmem:[#allocation2 + $0x188] sm:$0xff] %vm449, 0.0
        %674 = vst.msk [vmem:[#allocation2 + $0x190] sm:$0x3] %vm625, 0.0
        %675 = vst.msk [vmem:[#allocation2 + $0x198] sm:$0xff] %vm449, 0.0
        %676 = vst.msk [vmem:[#allocation2 + $0x1a0] sm:$0xff] %vm449, 0.0
        %677 = vst.msk [vmem:[#allocation2 + $0x1a8] sm:$0x3] %vm625, 0.0
        %s678 = scalar_lea.vmem [#allocation2], 24
        %679 = vst.msk [vmem:[%s678 + $0x1] sm:$0xff] %vm449, %v591
        %680 = vst.msk [vmem:[%s678 + $0x9] sm:$0xff] %vm449, %v592
        %681 = vst.msk [vmem:[%s678 + $0x19] sm:$0xff] %vm449, %v593
        %682 = vst.msk [vmem:[%s678 + $0x21] sm:$0xff] %vm449, %v594
        %683 = vst.msk [vmem:[%s678 + $0x31] sm:$0xff] %vm449, %v595
        %684 = vst.msk [vmem:[%s678 + $0x39] sm:$0xff] %vm449, %v596
        %685 = vst.msk [vmem:[%s678 + $0x49] sm:$0xff] %vm449, %v597
        %686 = vst.msk [vmem:[%s678 + $0x51] sm:$0xff] %vm449, %v598
        %687 = vst.msk [vmem:[%s678 + $0x61] sm:$0xff] %vm449, %v599
        %688 = vst.msk [vmem:[%s678 + $0x69] sm:$0xff] %vm449, %v600
        %689 = vst.msk [vmem:[%s678 + $0x79] sm:$0xff] %vm449, %v601
        %690 = vst.msk [vmem:[%s678 + $0x81] sm:$0xff] %vm449, %v602
        %691 = vst.msk [vmem:[%s678 + $0x91] sm:$0xff] %vm449, %v603
        %692 = vst.msk [vmem:[%s678 + $0x99] sm:$0xff] %vm449, %v604
        %693 = vst.msk [vmem:[%s678 + $0xa9] sm:$0xff] %vm449, %v605
        %694 = vst.msk [vmem:[%s678 + $0xb1] sm:$0xff] %vm449, %v606
        %695 = vst.msk [vmem:[%s678 + $0xc1] sm:$0xff] %vm449, %v607
        %696 = vst.msk [vmem:[%s678 + $0xc9] sm:$0xff] %vm449, %v608
        %697 = vst.msk [vmem:[%s678 + $0xd9] sm:$0xff] %vm449, %v609
        %698 = vst.msk [vmem:[%s678 + $0xe1] sm:$0xff] %vm449, %v610
        %699 = vst.msk [vmem:[%s678 + $0xf1] sm:$0xff] %vm449, %v611
        %700 = vst.msk [vmem:[%s678 + $0xf9] sm:$0xff] %vm449, %v612
        %701 = vst.msk [vmem:[%s678 + $0x109] sm:$0xff] %vm449, %v613
        %702 = vst.msk [vmem:[%s678 + $0x111] sm:$0xff] %vm449, %v614
        %703 = vst.msk [vmem:[%s678 + $0x121] sm:$0xff] %vm449, %v615
        %704 = vst.msk [vmem:[%s678 + $0x129] sm:$0xff] %vm449, %v616
        %705 = vst.msk [vmem:[%s678 + $0x139] sm:$0xff] %vm449, %v617
        %706 = vst.msk [vmem:[%s678 + $0x141] sm:$0xff] %vm449, %v618
        %707 = vst.msk [vmem:[%s678 + $0x151] sm:$0xff] %vm449, %v619
        %708 = vst.msk [vmem:[%s678 + $0x159] sm:$0xff] %vm449, %v620
        %709 = vst.msk [vmem:[%s678 + $0x169] sm:$0xff] %vm449, %v621
        %710 = vst.msk [vmem:[%s678 + $0x171] sm:$0xff] %vm449, %v622
        %v711 = vld [vmem:[#allocation2] sm:$0xff]
        %v712 = vld [vmem:[#allocation2 + $0x8] sm:$0xff]
        %v713 = vld [vmem:[#allocation2 + $0x18] sm:$0xff]
        %v714 = vld [vmem:[#allocation2 + $0x20] sm:$0xff]
        %v715 = vld [vmem:[#allocation2 + $0x30] sm:$0xff]
        %v716 = vld [vmem:[#allocation2 + $0x38] sm:$0xff]
        %v717 = vld [vmem:[#allocation2 + $0x48] sm:$0xff]
        %v718 = vld [vmem:[#allocation2 + $0x50] sm:$0xff]
        %v719 = vld [vmem:[#allocation2 + $0x60] sm:$0xff]
        %v720 = vld [vmem:[#allocation2 + $0x68] sm:$0xff]
        %v721 = vld [vmem:[#allocation2 + $0x78] sm:$0xff]
        %v722 = vld [vmem:[#allocation2 + $0x80] sm:$0xff]
        %v723 = vld [vmem:[#allocation2 + $0x90] sm:$0xff]
        %v724 = vld [vmem:[#allocation2 + $0x98] sm:$0xff]
        %v725 = vld [vmem:[#allocation2 + $0xa8] sm:$0xff]
        %v726 = vld [vmem:[#allocation2 + $0xb0] sm:$0xff]
        %v727 = vld [vmem:[#allocation2 + $0xc0] sm:$0xff]
        %v728 = vld [vmem:[#allocation2 + $0xc8] sm:$0xff]
        %v729 = vld [vmem:[#allocation2 + $0xd8] sm:$0xff]
        %v730 = vld [vmem:[#allocation2 + $0xe0] sm:$0xff]
        %v731 = vld [vmem:[#allocation2 + $0xf0] sm:$0xff]
        %v732 = vld [vmem:[#allocation2 + $0xf8] sm:$0xff]
        %v733 = vld [vmem:[#allocation2 + $0x108] sm:$0xff]
        %v734 = vld [vmem:[#allocation2 + $0x110] sm:$0xff]
        %v735 = vld [vmem:[#allocation2 + $0x120] sm:$0xff]
        %v736 = vld [vmem:[#allocation2 + $0x128] sm:$0xff]
        %v737 = vld [vmem:[#allocation2 + $0x138] sm:$0xff]
        %v738 = vld [vmem:[#allocation2 + $0x140] sm:$0xff]
        %v739 = vld [vmem:[#allocation2 + $0x150] sm:$0xff]
        %v740 = vld [vmem:[#allocation2 + $0x158] sm:$0xff]
        %v741 = vld [vmem:[#allocation2 + $0x168] sm:$0xff]
        %v742 = vld [vmem:[#allocation2 + $0x170] sm:$0xff]
        %v743 = vpack.c.bf16 %v712, %v711
        %v744 = vpack.c.bf16 %v714, %v713
        %v745 = vpack.c.bf16 %v716, %v715
        %v746 = vpack.c.bf16 %v718, %v717
        %v747 = vpack.c.bf16 %v720, %v719
        %v748 = vpack.c.bf16 %v722, %v721
        %v749 = vpack.c.bf16 %v724, %v723
        %v750 = vpack.c.bf16 %v726, %v725
        %v751 = vpack.c.bf16 %v728, %v727
        %v752 = vpack.c.bf16 %v730, %v729
        %v753 = vpack.c.bf16 %v732, %v731
        %v754 = vpack.c.bf16 %v734, %v733
        %v755 = vpack.c.bf16 %v736, %v735
        %v756 = vpack.c.bf16 %v738, %v737
        %v757 = vpack.c.bf16 %v740, %v739
        %v758 = vpack.c.bf16 %v742, %v741
        %v759 = vld [vmem:[%s3] sm:$0x3]
        %v760 = vld [vmem:[#allocation2 + $0x1] sm:$0xff]
        %v761 = vld [vmem:[#allocation2 + $0x9] sm:$0xff]
        %v762 = vld [vmem:[#allocation2 + $0x19] sm:$0xff]
        %v763 = vld [vmem:[#allocation2 + $0x21] sm:$0xff]
        %v764 = vld [vmem:[#allocation2 + $0x31] sm:$0xff]
        %v765 = vld [vmem:[#allocation2 + $0x39] sm:$0xff]
        %v766 = vld [vmem:[#allocation2 + $0x49] sm:$0xff]
        %v767 = vld [vmem:[#allocation2 + $0x51] sm:$0xff]
        %v768 = vld [vmem:[#allocation2 + $0x61] sm:$0xff]
        %v769 = vld [vmem:[#allocation2 + $0x69] sm:$0xff]
        %v770 = vld [vmem:[#allocation2 + $0x79] sm:$0xff]
        %v771 = vld [vmem:[#allocation2 + $0x81] sm:$0xff]
        %v772 = vld [vmem:[#allocation2 + $0x91] sm:$0xff]
        %v773 = vld [vmem:[#allocation2 + $0x99] sm:$0xff]
        %v774 = vld [vmem:[#allocation2 + $0xa9] sm:$0xff]
        %v775 = vld [vmem:[#allocation2 + $0xb1] sm:$0xff]
        %v776 = vld [vmem:[#allocation2 + $0xc1] sm:$0xff]
        %v777 = vld [vmem:[#allocation2 + $0xc9] sm:$0xff]
        %v778 = vld [vmem:[#allocation2 + $0xd9] sm:$0xff]
        %v779 = vld [vmem:[#allocation2 + $0xe1] sm:$0xff]
        %v780 = vld [vmem:[#allocation2 + $0xf1] sm:$0xff]
        %v781 = vld [vmem:[#allocation2 + $0xf9] sm:$0xff]
        %v782 = vld [vmem:[#allocation2 + $0x109] sm:$0xff]
        %v783 = vld [vmem:[#allocation2 + $0x111] sm:$0xff]
        %v784 = vld [vmem:[#allocation2 + $0x121] sm:$0xff]
        %v785 = vld [vmem:[#allocation2 + $0x129] sm:$0xff]
        %v786 = vld [vmem:[#allocation2 + $0x139] sm:$0xff]
        %v787 = vld [vmem:[#allocation2 + $0x141] sm:$0xff]
        %v788 = vld [vmem:[#allocation2 + $0x151] sm:$0xff]
        %v789 = vld [vmem:[#allocation2 + $0x159] sm:$0xff]
        %v790 = vld [vmem:[#allocation2 + $0x169] sm:$0xff]
        %v791 = vld [vmem:[#allocation2 + $0x171] sm:$0xff]
        %v792 = vpack.c.bf16 %v761, %v760
        %v793 = vpack.c.bf16 %v763, %v762
        %v794 = vpack.c.bf16 %v765, %v764
        %v795 = vpack.c.bf16 %v767, %v766
        %v796 = vpack.c.bf16 %v769, %v768
        %v797 = vpack.c.bf16 %v771, %v770
        %v798 = vpack.c.bf16 %v773, %v772
        %v799 = vpack.c.bf16 %v775, %v774
        %v800 = vpack.c.bf16 %v777, %v776
        %v801 = vpack.c.bf16 %v779, %v778
        %v802 = vpack.c.bf16 %v781, %v780
        %v803 = vpack.c.bf16 %v783, %v782
        %v804 = vpack.c.bf16 %v785, %v784
        %v805 = vpack.c.bf16 %v787, %v786
        %v806 = vpack.c.bf16 %v789, %v788
        %v807 = vpack.c.bf16 %v791, %v790
        %s808 = scalar_lea.vmem %s3, 2
        %v809 = vld [vmem:[%s808] sm:$0x3]
        %v811 = vsel %vm449, %v792, 0
        %v814 = vsel %vm449, %v793, 0
        %v817 = vsel %vm449, %v794, 0
        %v820 = vsel %vm449, %v795, 0
        %v823 = vsel %vm449, %v796, 0
        %v826 = vsel %vm449, %v797, 0
        %v829 = vsel %vm449, %v798, 0
        %v832 = vsel %vm449, %v799, 0
        %v835 = vsel %vm449, %v800, 0
        %v838 = vsel %vm449, %v801, 0
        %v841 = vsel %vm449, %v802, 0
        %v844 = vsel %vm449, %v803, 0
        %v847 = vsel %vm449, %v804, 0
        %v850 = vsel %vm449, %v805, 0
        %v853 = vsel %vm449, %v806, 0
        %v856 = vsel %vm449, %v807, 0
        %v859 = vsel %vm498, %v809, 0
        %861 = vmatpush.bf16.msra.mxu0 0
        %862 = vmatpush.bf16.msra.mxu0 0
        %863 = vmatpush.bf16.msra.mxu0 0
        %864 = vmatpush.bf16.msra.mxu0 0
        %865 = vmatpush.bf16.msra.mxu0 0
        %866 = vmatpush.bf16.msra.mxu0 0
        %867 = vmatpush.bf16.msra.mxu0 0
        %868 = vmatpush.bf16.msra.mxu0 %v859
        %869 = vmatmul.bf16.gmra.mxu0 %v811
        %v870 = vpop.f32.mrf.mxu0
        %v871 = vadd.f32 0.0, %v870
        %v872 = vpop.f32.mrf.mxu0
        %v873 = vadd.f32 0.0, %v872
        %874 = vmatmul.bf16.gmra.mxu0 %v814
        %v875 = vpop.f32.mrf.mxu0
        %v876 = vadd.f32 0.0, %v875
        %v877 = vpop.f32.mrf.mxu0
        %v878 = vadd.f32 0.0, %v877
        %879 = vmatmul.bf16.gmra.mxu0 %v817
        %v880 = vpop.f32.mrf.mxu0
        %v881 = vadd.f32 0.0, %v880
        %v882 = vpop.f32.mrf.mxu0
        %v883 = vadd.f32 0.0, %v882
        %884 = vmatmul.bf16.gmra.mxu0 %v820
        %v885 = vpop.f32.mrf.mxu0
        %v886 = vadd.f32 0.0, %v885
        %v887 = vpop.f32.mrf.mxu0
        %v888 = vadd.f32 0.0, %v887
        %889 = vmatmul.bf16.gmra.mxu0 %v823
        %v890 = vpop.f32.mrf.mxu0
        %v891 = vadd.f32 0.0, %v890
        %v892 = vpop.f32.mrf.mxu0
        %v893 = vadd.f32 0.0, %v892
        %894 = vmatmul.bf16.gmra.mxu0 %v826
        %v895 = vpop.f32.mrf.mxu0
        %v896 = vadd.f32 0.0, %v895
        %v897 = vpop.f32.mrf.mxu0
        %v898 = vadd.f32 0.0, %v897
        %899 = vmatmul.bf16.gmra.mxu0 %v829
        %v900 = vpop.f32.mrf.mxu0
        %v901 = vadd.f32 0.0, %v900
        %v902 = vpop.f32.mrf.mxu0
        %v903 = vadd.f32 0.0, %v902
        %904 = vmatmul.bf16.gmra.mxu0 %v832
        %v905 = vpop.f32.mrf.mxu0
        %v906 = vadd.f32 0.0, %v905
        %v907 = vpop.f32.mrf.mxu0
        %v908 = vadd.f32 0.0, %v907
        %909 = vmatmul.bf16.gmra.mxu0 %v835
        %v910 = vpop.f32.mrf.mxu0
        %v911 = vadd.f32 0.0, %v910
        %v912 = vpop.f32.mrf.mxu0
        %v913 = vadd.f32 0.0, %v912
        %914 = vmatmul.bf16.gmra.mxu0 %v838
        %v915 = vpop.f32.mrf.mxu0
        %v916 = vadd.f32 0.0, %v915
        %v917 = vpop.f32.mrf.mxu0
        %v918 = vadd.f32 0.0, %v917
        %919 = vmatmul.bf16.gmra.mxu0 %v841
        %v920 = vpop.f32.mrf.mxu0
        %v921 = vadd.f32 0.0, %v920
        %v922 = vpop.f32.mrf.mxu0
        %v923 = vadd.f32 0.0, %v922
        %924 = vmatmul.bf16.gmra.mxu0 %v844
        %v925 = vpop.f32.mrf.mxu0
        %v926 = vadd.f32 0.0, %v925
        %v927 = vpop.f32.mrf.mxu0
        %v928 = vadd.f32 0.0, %v927
        %929 = vmatmul.bf16.gmra.mxu0 %v847
        %v930 = vpop.f32.mrf.mxu0
        %v931 = vadd.f32 0.0, %v930
        %v932 = vpop.f32.mrf.mxu0
        %v933 = vadd.f32 0.0, %v932
        %934 = vmatmul.bf16.gmra.mxu0 %v850
        %v935 = vpop.f32.mrf.mxu0
        %v936 = vadd.f32 0.0, %v935
        %v937 = vpop.f32.mrf.mxu0
        %v938 = vadd.f32 0.0, %v937
        %939 = vmatmul.bf16.gmra.mxu0 %v853
        %v940 = vpop.f32.mrf.mxu0
        %v941 = vadd.f32 0.0, %v940
        %v942 = vpop.f32.mrf.mxu0
        %v943 = vadd.f32 0.0, %v942
        %944 = vmatmul.bf16.gmra.mxu0 %v856
        %v945 = vpop.f32.mrf.mxu0
        %v946 = vadd.f32 0.0, %v945
        %v947 = vpop.f32.mrf.mxu0
        %v948 = vadd.f32 0.0, %v947
        %949 = vdwg.mxu0
        %v951 = vsel %vm449, %v743, 0
        %v954 = vsel %vm449, %v744, 0
        %v957 = vsel %vm449, %v745, 0
        %v960 = vsel %vm449, %v746, 0
        %v963 = vsel %vm449, %v747, 0
        %v966 = vsel %vm449, %v748, 0
        %v969 = vsel %vm449, %v749, 0
        %v972 = vsel %vm449, %v750, 0
        %v975 = vsel %vm449, %v751, 0
        %v978 = vsel %vm449, %v752, 0
        %v981 = vsel %vm449, %v753, 0
        %v984 = vsel %vm449, %v754, 0
        %v987 = vsel %vm449, %v755, 0
        %v990 = vsel %vm449, %v756, 0
        %v993 = vsel %vm449, %v757, 0
        %v996 = vsel %vm449, %v758, 0
        %v999 = vsel %vm498, %v759, 0
        %1001 = vmatpush.bf16.msra.mxu0 0
        %1002 = vmatpush.bf16.msra.mxu0 0
        %1003 = vmatpush.bf16.msra.mxu0 0
        %1004 = vmatpush.bf16.msra.mxu0 0
        %1005 = vmatpush.bf16.msra.mxu0 0
        %1006 = vmatpush.bf16.msra.mxu0 0
        %1007 = vmatpush.bf16.msra.mxu0 0
        %1008 = vmatpush.bf16.msra.mxu0 %v999
        %1009 = vmatmul.bf16.gmra.mxu0 %v951
        %v1010 = vpop.f32.mrf.mxu0
        %v1011 = vadd.f32 %v871, %v1010
        %v1012 = vpop.f32.mrf.mxu0
        %v1013 = vadd.f32 %v873, %v1012
        %1014 = vmatmul.bf16.gmra.mxu0 %v954
        %v1015 = vpop.f32.mrf.mxu0
        %v1016 = vadd.f32 %v876, %v1015
        %v1017 = vpop.f32.mrf.mxu0
        %v1018 = vadd.f32 %v878, %v1017
        %1019 = vmatmul.bf16.gmra.mxu0 %v957
        %v1020 = vpop.f32.mrf.mxu0
        %v1021 = vadd.f32 %v881, %v1020
        %v1022 = vpop.f32.mrf.mxu0
        %v1023 = vadd.f32 %v883, %v1022
        %1024 = vmatmul.bf16.gmra.mxu0 %v960
        %v1025 = vpop.f32.mrf.mxu0
        %v1026 = vadd.f32 %v886, %v1025
        %v1027 = vpop.f32.mrf.mxu0
        %v1028 = vadd.f32 %v888, %v1027
        %1029 = vmatmul.bf16.gmra.mxu0 %v963
        %v1030 = vpop.f32.mrf.mxu0
        %v1031 = vadd.f32 %v891, %v1030
        %v1032 = vpop.f32.mrf.mxu0
        %v1033 = vadd.f32 %v893, %v1032
        %1034 = vmatmul.bf16.gmra.mxu0 %v966
        %v1035 = vpop.f32.mrf.mxu0
        %v1036 = vadd.f32 %v896, %v1035
        %v1037 = vpop.f32.mrf.mxu0
        %v1038 = vadd.f32 %v898, %v1037
        %1039 = vmatmul.bf16.gmra.mxu0 %v969
        %v1040 = vpop.f32.mrf.mxu0
        %v1041 = vadd.f32 %v901, %v1040
        %v1042 = vpop.f32.mrf.mxu0
        %v1043 = vadd.f32 %v903, %v1042
        %1044 = vmatmul.bf16.gmra.mxu0 %v972
        %v1045 = vpop.f32.mrf.mxu0
        %v1046 = vadd.f32 %v906, %v1045
        %v1047 = vpop.f32.mrf.mxu0
        %v1048 = vadd.f32 %v908, %v1047
        %1049 = vmatmul.bf16.gmra.mxu0 %v975
        %v1050 = vpop.f32.mrf.mxu0
        %v1051 = vadd.f32 %v911, %v1050
        %v1052 = vpop.f32.mrf.mxu0
        %v1053 = vadd.f32 %v913, %v1052
        %1054 = vmatmul.bf16.gmra.mxu0 %v978
        %v1055 = vpop.f32.mrf.mxu0
        %v1056 = vadd.f32 %v916, %v1055
        %v1057 = vpop.f32.mrf.mxu0
        %v1058 = vadd.f32 %v918, %v1057
        %1059 = vmatmul.bf16.gmra.mxu0 %v981
        %v1060 = vpop.f32.mrf.mxu0
        %v1061 = vadd.f32 %v921, %v1060
        %v1062 = vpop.f32.mrf.mxu0
        %v1063 = vadd.f32 %v923, %v1062
        %1064 = vmatmul.bf16.gmra.mxu0 %v984
        %v1065 = vpop.f32.mrf.mxu0
        %v1066 = vadd.f32 %v926, %v1065
        %v1067 = vpop.f32.mrf.mxu0
        %v1068 = vadd.f32 %v928, %v1067
        %1069 = vmatmul.bf16.gmra.mxu0 %v987
        %v1070 = vpop.f32.mrf.mxu0
        %v1071 = vadd.f32 %v931, %v1070
        %v1072 = vpop.f32.mrf.mxu0
        %v1073 = vadd.f32 %v933, %v1072
        %1074 = vmatmul.bf16.gmra.mxu0 %v990
        %v1075 = vpop.f32.mrf.mxu0
        %v1076 = vadd.f32 %v936, %v1075
        %v1077 = vpop.f32.mrf.mxu0
        %v1078 = vadd.f32 %v938, %v1077
        %1079 = vmatmul.bf16.gmra.mxu0 %v993
        %v1080 = vpop.f32.mrf.mxu0
        %v1081 = vadd.f32 %v941, %v1080
        %v1082 = vpop.f32.mrf.mxu0
        %v1083 = vadd.f32 %v943, %v1082
        %1084 = vmatmul.bf16.gmra.mxu0 %v996
        %v1085 = vpop.f32.mrf.mxu0
        %v1086 = vadd.f32 %v946, %v1085
        %v1087 = vpop.f32.mrf.mxu0
        %v1088 = vadd.f32 %v948, %v1087
        %1089 = vdwg.mxu0
        %v1090 = vld [vmem:[#allocation2 + $0x2] sm:$0xff]
        %v1091 = vld [vmem:[#allocation2 + $0xa] sm:$0xff]
        %v1092 = vld [vmem:[#allocation2 + $0x1a] sm:$0xff]
        %v1093 = vld [vmem:[#allocation2 + $0x22] sm:$0xff]
        %v1094 = vld [vmem:[#allocation2 + $0x32] sm:$0xff]
        %v1095 = vld [vmem:[#allocation2 + $0x3a] sm:$0xff]
        %v1096 = vld [vmem:[#allocation2 + $0x4a] sm:$0xff]
        %v1097 = vld [vmem:[#allocation2 + $0x52] sm:$0xff]
        %v1098 = vld [vmem:[#allocation2 + $0x62] sm:$0xff]
        %v1099 = vld [vmem:[#allocation2 + $0x6a] sm:$0xff]
        %v1100 = vld [vmem:[#allocation2 + $0x7a] sm:$0xff]
        %v1101 = vld [vmem:[#allocation2 + $0x82] sm:$0xff]
        %v1102 = vld [vmem:[#allocation2 + $0x92] sm:$0xff]
        %v1103 = vld [vmem:[#allocation2 + $0x9a] sm:$0xff]
        %v1104 = vld [vmem:[#allocation2 + $0xaa] sm:$0xff]
        %v1105 = vld [vmem:[#allocation2 + $0xb2] sm:$0xff]
        %v1106 = vld [vmem:[#allocation2 + $0xc2] sm:$0xff]
        %v1107 = vld [vmem:[#allocation2 + $0xca] sm:$0xff]
        %v1108 = vld [vmem:[#allocation2 + $0xda] sm:$0xff]
        %v1109 = vld [vmem:[#allocation2 + $0xe2] sm:$0xff]
        %v1110 = vld [vmem:[#allocation2 + $0xf2] sm:$0xff]
        %v1111 = vld [vmem:[#allocation2 + $0xfa] sm:$0xff]
        %v1112 = vld [vmem:[#allocation2 + $0x10a] sm:$0xff]
        %v1113 = vld [vmem:[#allocation2 + $0x112] sm:$0xff]
        %v1114 = vld [vmem:[#allocation2 + $0x122] sm:$0xff]
        %v1115 = vld [vmem:[#allocation2 + $0x12a] sm:$0xff]
        %v1116 = vld [vmem:[#allocation2 + $0x13a] sm:$0xff]
        %v1117 = vld [vmem:[#allocation2 + $0x142] sm:$0xff]
        %v1118 = vld [vmem:[#allocation2 + $0x152] sm:$0xff]
        %v1119 = vld [vmem:[#allocation2 + $0x15a] sm:$0xff]
        %v1120 = vld [vmem:[#allocation2 + $0x16a] sm:$0xff]
        %v1121 = vld [vmem:[#allocation2 + $0x172] sm:$0xff]
        %v1122 = vpack.c.bf16 %v1091, %v1090
        %v1123 = vpack.c.bf16 %v1093, %v1092
        %v1124 = vpack.c.bf16 %v1095, %v1094
        %v1125 = vpack.c.bf16 %v1097, %v1096
        %v1126 = vpack.c.bf16 %v1099, %v1098
        %v1127 = vpack.c.bf16 %v1101, %v1100
        %v1128 = vpack.c.bf16 %v1103, %v1102
        %v1129 = vpack.c.bf16 %v1105, %v1104
        %v1130 = vpack.c.bf16 %v1107, %v1106
        %v1131 = vpack.c.bf16 %v1109, %v1108
        %v1132 = vpack.c.bf16 %v1111, %v1110
        %v1133 = vpack.c.bf16 %v1113, %v1112
        %v1134 = vpack.c.bf16 %v1115, %v1114
        %v1135 = vpack.c.bf16 %v1117, %v1116
        %v1136 = vpack.c.bf16 %v1119, %v1118
        %v1137 = vpack.c.bf16 %v1121, %v1120
        %s1138 = scalar_lea.vmem %s3, 4
        %v1139 = vld [vmem:[%s1138] sm:$0x3]
        %v1141 = vsel %vm449, %v1122, 0
        %v1144 = vsel %vm449, %v1123, 0
        %v1147 = vsel %vm449, %v1124, 0
        %v1150 = vsel %vm449, %v1125, 0
        %v1153 = vsel %vm449, %v1126, 0
        %v1156 = vsel %vm449, %v1127, 0
        %v1159 = vsel %vm449, %v1128, 0
        %v1162 = vsel %vm449, %v1129, 0
        %v1165 = vsel %vm449, %v1130, 0
        %v1168 = vsel %vm449, %v1131, 0
        %v1171 = vsel %vm449, %v1132, 0
        %v1174 = vsel %vm449, %v1133, 0
        %v1177 = vsel %vm449, %v1134, 0
        %v1180 = vsel %vm449, %v1135, 0
        %v1183 = vsel %vm449, %v1136, 0
        %v1186 = vsel %vm449, %v1137, 0
        %v1189 = vsel %vm498, %v1139, 0
        %1191 = vmatpush.bf16.msra.mxu0 0
        %1192 = vmatpush.bf16.msra.mxu0 0
        %1193 = vmatpush.bf16.msra.mxu0 0
        %1194 = vmatpush.bf16.msra.mxu0 0
        %1195 = vmatpush.bf16.msra.mxu0 0
        %1196 = vmatpush.bf16.msra.mxu0 0
        %1197 = vmatpush.bf16.msra.mxu0 0
        %1198 = vmatpush.bf16.msra.mxu0 %v1189
        %1199 = vmatmul.bf16.gmra.mxu0 %v1141
        %v1200 = vpop.f32.mrf.mxu0
        %v1201 = vadd.f32 0.0, %v1200
        %v1202 = vpop.f32.mrf.mxu0
        %v1203 = vadd.f32 0.0, %v1202
        %1204 = vmatmul.bf16.gmra.mxu0 %v1144
        %v1205 = vpop.f32.mrf.mxu0
        %v1206 = vadd.f32 0.0, %v1205
        %v1207 = vpop.f32.mrf.mxu0
        %v1208 = vadd.f32 0.0, %v1207
        %1209 = vmatmul.bf16.gmra.mxu0 %v1147
        %v1210 = vpop.f32.mrf.mxu0
        %v1211 = vadd.f32 0.0, %v1210
        %v1212 = vpop.f32.mrf.mxu0
        %v1213 = vadd.f32 0.0, %v1212
        %1214 = vmatmul.bf16.gmra.mxu0 %v1150
        %v1215 = vpop.f32.mrf.mxu0
        %v1216 = vadd.f32 0.0, %v1215
        %v1217 = vpop.f32.mrf.mxu0
        %v1218 = vadd.f32 0.0, %v1217
        %1219 = vmatmul.bf16.gmra.mxu0 %v1153
        %v1220 = vpop.f32.mrf.mxu0
        %v1221 = vadd.f32 0.0, %v1220
        %v1222 = vpop.f32.mrf.mxu0
        %v1223 = vadd.f32 0.0, %v1222
        %1224 = vmatmul.bf16.gmra.mxu0 %v1156
        %v1225 = vpop.f32.mrf.mxu0
        %v1226 = vadd.f32 0.0, %v1225
        %v1227 = vpop.f32.mrf.mxu0
        %v1228 = vadd.f32 0.0, %v1227
        %1229 = vmatmul.bf16.gmra.mxu0 %v1159
        %v1230 = vpop.f32.mrf.mxu0
        %v1231 = vadd.f32 0.0, %v1230
        %v1232 = vpop.f32.mrf.mxu0
        %v1233 = vadd.f32 0.0, %v1232
        %1234 = vmatmul.bf16.gmra.mxu0 %v1162
        %v1235 = vpop.f32.mrf.mxu0
        %v1236 = vadd.f32 0.0, %v1235
        %v1237 = vpop.f32.mrf.mxu0
        %v1238 = vadd.f32 0.0, %v1237
        %1239 = vmatmul.bf16.gmra.mxu0 %v1165
        %v1240 = vpop.f32.mrf.mxu0
        %v1241 = vadd.f32 0.0, %v1240
        %v1242 = vpop.f32.mrf.mxu0
        %v1243 = vadd.f32 0.0, %v1242
        %1244 = vmatmul.bf16.gmra.mxu0 %v1168
        %v1245 = vpop.f32.mrf.mxu0
        %v1246 = vadd.f32 0.0, %v1245
        %v1247 = vpop.f32.mrf.mxu0
        %v1248 = vadd.f32 0.0, %v1247
        %1249 = vmatmul.bf16.gmra.mxu0 %v1171
        %v1250 = vpop.f32.mrf.mxu0
        %v1251 = vadd.f32 0.0, %v1250
        %v1252 = vpop.f32.mrf.mxu0
        %v1253 = vadd.f32 0.0, %v1252
        %1254 = vmatmul.bf16.gmra.mxu0 %v1174
        %v1255 = vpop.f32.mrf.mxu0
        %v1256 = vadd.f32 0.0, %v1255
        %v1257 = vpop.f32.mrf.mxu0
        %v1258 = vadd.f32 0.0, %v1257
        %1259 = vmatmul.bf16.gmra.mxu0 %v1177
        %v1260 = vpop.f32.mrf.mxu0
        %v1261 = vadd.f32 0.0, %v1260
        %v1262 = vpop.f32.mrf.mxu0
        %v1263 = vadd.f32 0.0, %v1262
        %1264 = vmatmul.bf16.gmra.mxu0 %v1180
        %v1265 = vpop.f32.mrf.mxu0
        %v1266 = vadd.f32 0.0, %v1265
        %v1267 = vpop.f32.mrf.mxu0
        %v1268 = vadd.f32 0.0, %v1267
        %1269 = vmatmul.bf16.gmra.mxu0 %v1183
        %v1270 = vpop.f32.mrf.mxu0
        %v1271 = vadd.f32 0.0, %v1270
        %v1272 = vpop.f32.mrf.mxu0
        %v1273 = vadd.f32 0.0, %v1272
        %1274 = vmatmul.bf16.gmra.mxu0 %v1186
        %v1275 = vpop.f32.mrf.mxu0
        %v1276 = vadd.f32 0.0, %v1275
        %v1277 = vpop.f32.mrf.mxu0
        %v1278 = vadd.f32 0.0, %v1277
        %1279 = vdwg.mxu0
        %v1280 = vadd.f32 %v1011, %v1201
        %v1281 = vadd.f32 %v1013, %v1203
        %v1282 = vadd.f32 %v1016, %v1206
        %v1283 = vadd.f32 %v1018, %v1208
        %v1284 = vadd.f32 %v1021, %v1211
        %v1285 = vadd.f32 %v1023, %v1213
        %v1286 = vadd.f32 %v1026, %v1216
        %v1287 = vadd.f32 %v1028, %v1218
        %v1288 = vadd.f32 %v1031, %v1221
        %v1289 = vadd.f32 %v1033, %v1223
        %v1290 = vadd.f32 %v1036, %v1226
        %v1291 = vadd.f32 %v1038, %v1228
        %v1292 = vadd.f32 %v1041, %v1231
        %v1293 = vadd.f32 %v1043, %v1233
        %v1294 = vadd.f32 %v1046, %v1236
        %v1295 = vadd.f32 %v1048, %v1238
        %v1296 = vadd.f32 %v1051, %v1241
        %v1297 = vadd.f32 %v1053, %v1243
        %v1298 = vadd.f32 %v1056, %v1246
        %v1299 = vadd.f32 %v1058, %v1248
        %v1300 = vadd.f32 %v1061, %v1251
        %v1301 = vadd.f32 %v1063, %v1253
        %v1302 = vadd.f32 %v1066, %v1256
        %v1303 = vadd.f32 %v1068, %v1258
        %v1304 = vadd.f32 %v1071, %v1261
        %v1305 = vadd.f32 %v1073, %v1263
        %v1306 = vadd.f32 %v1076, %v1266
        %v1307 = vadd.f32 %v1078, %v1268
        %v1308 = vadd.f32 %v1081, %v1271
        %v1309 = vadd.f32 %v1083, %v1273
        %v1310 = vadd.f32 %v1086, %v1276
        %v1311 = vadd.f32 %v1088, %v1278
        %v1312 = vld [vmem:[%s678] sm:$0xff]
        %v1313 = vld [vmem:[%s678 + $0x8] sm:$0xff]
        %v1314 = vld [vmem:[%s678 + $0x18] sm:$0xff]
        %v1315 = vld [vmem:[%s678 + $0x20] sm:$0xff]
        %v1316 = vld [vmem:[%s678 + $0x30] sm:$0xff]
        %v1317 = vld [vmem:[%s678 + $0x38] sm:$0xff]
        %v1318 = vld [vmem:[%s678 + $0x48] sm:$0xff]
        %v1319 = vld [vmem:[%s678 + $0x50] sm:$0xff]
        %v1320 = vld [vmem:[%s678 + $0x60] sm:$0xff]
        %v1321 = vld [vmem:[%s678 + $0x68] sm:$0xff]
        %v1322 = vld [vmem:[%s678 + $0x78] sm:$0xff]
        %v1323 = vld [vmem:[%s678 + $0x80] sm:$0xff]
        %v1324 = vld [vmem:[%s678 + $0x90] sm:$0xff]
        %v1325 = vld [vmem:[%s678 + $0x98] sm:$0xff]
        %v1326 = vld [vmem:[%s678 + $0xa8] sm:$0xff]
        %v1327 = vld [vmem:[%s678 + $0xb0] sm:$0xff]
        %v1328 = vld [vmem:[%s678 + $0xc0] sm:$0xff]
        %v1329 = vld [vmem:[%s678 + $0xc8] sm:$0xff]
        %v1330 = vld [vmem:[%s678 + $0xd8] sm:$0xff]
        %v1331 = vld [vmem:[%s678 + $0xe0] sm:$0xff]
        %v1332 = vld [vmem:[%s678 + $0xf0] sm:$0xff]
        %v1333 = vld [vmem:[%s678 + $0xf8] sm:$0xff]
        %v1334 = vld [vmem:[%s678 + $0x108] sm:$0xff]
        %v1335 = vld [vmem:[%s678 + $0x110] sm:$0xff]
        %v1336 = vld [vmem:[%s678 + $0x120] sm:$0xff]
        %v1337 = vld [vmem:[%s678 + $0x128] sm:$0xff]
        %v1338 = vld [vmem:[%s678 + $0x138] sm:$0xff]
        %v1339 = vld [vmem:[%s678 + $0x140] sm:$0xff]
        %v1340 = vld [vmem:[%s678 + $0x150] sm:$0xff]
        %v1341 = vld [vmem:[%s678 + $0x158] sm:$0xff]
        %v1342 = vld [vmem:[%s678 + $0x168] sm:$0xff]
        %v1343 = vld [vmem:[%s678 + $0x170] sm:$0xff]
        %v1344 = vpack.c.bf16 %v1313, %v1312
        %v1345 = vpack.c.bf16 %v1315, %v1314
        %v1346 = vpack.c.bf16 %v1317, %v1316
        %v1347 = vpack.c.bf16 %v1319, %v1318
        %v1348 = vpack.c.bf16 %v1321, %v1320
        %v1349 = vpack.c.bf16 %v1323, %v1322
        %v1350 = vpack.c.bf16 %v1325, %v1324
        %v1351 = vpack.c.bf16 %v1327, %v1326
        %v1352 = vpack.c.bf16 %v1329, %v1328
        %v1353 = vpack.c.bf16 %v1331, %v1330
        %v1354 = vpack.c.bf16 %v1333, %v1332
        %v1355 = vpack.c.bf16 %v1335, %v1334
        %v1356 = vpack.c.bf16 %v1337, %v1336
        %v1357 = vpack.c.bf16 %v1339, %v1338
        %v1358 = vpack.c.bf16 %v1341, %v1340
        %v1359 = vpack.c.bf16 %v1343, %v1342
        %s1360 = scalar_lea.vmem %s3, 6
        %v1361 = vld [vmem:[%s1360] sm:$0x3]
        %v1363 = vsel %vm449, %v1344, 0
        %v1366 = vsel %vm449, %v1345, 0
        %v1369 = vsel %vm449, %v1346, 0
        %v1372 = vsel %vm449, %v1347, 0
        %v1375 = vsel %vm449, %v1348, 0
        %v1378 = vsel %vm449, %v1349, 0
        %v1381 = vsel %vm449, %v1350, 0
        %v1384 = vsel %vm449, %v1351, 0
        %v1387 = vsel %vm449, %v1352, 0
        %v1390 = vsel %vm449, %v1353, 0
        %v1393 = vsel %vm449, %v1354, 0
        %v1396 = vsel %vm449, %v1355, 0
        %v1399 = vsel %vm449, %v1356, 0
        %v1402 = vsel %vm449, %v1357, 0
        %v1405 = vsel %vm449, %v1358, 0
        %v1408 = vsel %vm449, %v1359, 0
        %v1411 = vsel %vm498, %v1361, 0
        %1413 = vmatpush.bf16.msra.mxu0 0
        %1414 = vmatpush.bf16.msra.mxu0 0
        %1415 = vmatpush.bf16.msra.mxu0 0
        %1416 = vmatpush.bf16.msra.mxu0 0
        %1417 = vmatpush.bf16.msra.mxu0 0
        %1418 = vmatpush.bf16.msra.mxu0 0
        %1419 = vmatpush.bf16.msra.mxu0 0
        %1420 = vmatpush.bf16.msra.mxu0 %v1411
        %1421 = vmatmul.bf16.gmra.mxu0 %v1363
        %v1422 = vpop.f32.mrf.mxu0
        %v1423 = vadd.f32 0.0, %v1422
        %v1424 = vpop.f32.mrf.mxu0
        %v1425 = vadd.f32 0.0, %v1424
        %1426 = vmatmul.bf16.gmra.mxu0 %v1366
        %v1427 = vpop.f32.mrf.mxu0
        %v1428 = vadd.f32 0.0, %v1427
        %v1429 = vpop.f32.mrf.mxu0
        %v1430 = vadd.f32 0.0, %v1429
        %1431 = vmatmul.bf16.gmra.mxu0 %v1369
        %v1432 = vpop.f32.mrf.mxu0
        %v1433 = vadd.f32 0.0, %v1432
        %v1434 = vpop.f32.mrf.mxu0
        %v1435 = vadd.f32 0.0, %v1434
        %1436 = vmatmul.bf16.gmra.mxu0 %v1372
        %v1437 = vpop.f32.mrf.mxu0
        %v1438 = vadd.f32 0.0, %v1437
        %v1439 = vpop.f32.mrf.mxu0
        %v1440 = vadd.f32 0.0, %v1439
        %1441 = vmatmul.bf16.gmra.mxu0 %v1375
        %v1442 = vpop.f32.mrf.mxu0
        %v1443 = vadd.f32 0.0, %v1442
        %v1444 = vpop.f32.mrf.mxu0
        %v1445 = vadd.f32 0.0, %v1444
        %1446 = vmatmul.bf16.gmra.mxu0 %v1378
        %v1447 = vpop.f32.mrf.mxu0
        %v1448 = vadd.f32 0.0, %v1447
        %v1449 = vpop.f32.mrf.mxu0
        %v1450 = vadd.f32 0.0, %v1449
        %1451 = vmatmul.bf16.gmra.mxu0 %v1381
        %v1452 = vpop.f32.mrf.mxu0
        %v1453 = vadd.f32 0.0, %v1452
        %v1454 = vpop.f32.mrf.mxu0
        %v1455 = vadd.f32 0.0, %v1454
        %1456 = vmatmul.bf16.gmra.mxu0 %v1384
        %v1457 = vpop.f32.mrf.mxu0
        %v1458 = vadd.f32 0.0, %v1457
        %v1459 = vpop.f32.mrf.mxu0
        %v1460 = vadd.f32 0.0, %v1459
        %1461 = vmatmul.bf16.gmra.mxu0 %v1387
        %v1462 = vpop.f32.mrf.mxu0
        %v1463 = vadd.f32 0.0, %v1462
        %v1464 = vpop.f32.mrf.mxu0
        %v1465 = vadd.f32 0.0, %v1464
        %1466 = vmatmul.bf16.gmra.mxu0 %v1390
        %v1467 = vpop.f32.mrf.mxu0
        %v1468 = vadd.f32 0.0, %v1467
        %v1469 = vpop.f32.mrf.mxu0
        %v1470 = vadd.f32 0.0, %v1469
        %1471 = vmatmul.bf16.gmra.mxu0 %v1393
        %v1472 = vpop.f32.mrf.mxu0
        %v1473 = vadd.f32 0.0, %v1472
        %v1474 = vpop.f32.mrf.mxu0
        %v1475 = vadd.f32 0.0, %v1474
        %1476 = vmatmul.bf16.gmra.mxu0 %v1396
        %v1477 = vpop.f32.mrf.mxu0
        %v1478 = vadd.f32 0.0, %v1477
        %v1479 = vpop.f32.mrf.mxu0
        %v1480 = vadd.f32 0.0, %v1479
        %1481 = vmatmul.bf16.gmra.mxu0 %v1399
        %v1482 = vpop.f32.mrf.mxu0
        %v1483 = vadd.f32 0.0, %v1482
        %v1484 = vpop.f32.mrf.mxu0
        %v1485 = vadd.f32 0.0, %v1484
        %1486 = vmatmul.bf16.gmra.mxu0 %v1402
        %v1487 = vpop.f32.mrf.mxu0
        %v1488 = vadd.f32 0.0, %v1487
        %v1489 = vpop.f32.mrf.mxu0
        %v1490 = vadd.f32 0.0, %v1489
        %1491 = vmatmul.bf16.gmra.mxu0 %v1405
        %v1492 = vpop.f32.mrf.mxu0
        %v1493 = vadd.f32 0.0, %v1492
        %v1494 = vpop.f32.mrf.mxu0
        %v1495 = vadd.f32 0.0, %v1494
        %1496 = vmatmul.bf16.gmra.mxu0 %v1408
        %v1497 = vpop.f32.mrf.mxu0
        %v1498 = vadd.f32 0.0, %v1497
        %v1499 = vpop.f32.mrf.mxu0
        %v1500 = vadd.f32 0.0, %v1499
        %1501 = vdwg.mxu0
        %v1502 = vadd.f32 %v1280, %v1423
        %v1503 = vadd.f32 %v1281, %v1425
        %v1504 = vadd.f32 %v1282, %v1428
        %v1505 = vadd.f32 %v1283, %v1430
        %v1506 = vadd.f32 %v1284, %v1433
        %v1507 = vadd.f32 %v1285, %v1435
        %v1508 = vadd.f32 %v1286, %v1438
        %v1509 = vadd.f32 %v1287, %v1440
        %v1510 = vadd.f32 %v1288, %v1443
        %v1511 = vadd.f32 %v1289, %v1445
        %v1512 = vadd.f32 %v1290, %v1448
        %v1513 = vadd.f32 %v1291, %v1450
        %v1514 = vadd.f32 %v1292, %v1453
        %v1515 = vadd.f32 %v1293, %v1455
        %v1516 = vadd.f32 %v1294, %v1458
        %v1517 = vadd.f32 %v1295, %v1460
        %v1518 = vadd.f32 %v1296, %v1463
        %v1519 = vadd.f32 %v1297, %v1465
        %v1520 = vadd.f32 %v1298, %v1468
        %v1521 = vadd.f32 %v1299, %v1470
        %v1522 = vadd.f32 %v1300, %v1473
        %v1523 = vadd.f32 %v1301, %v1475
        %v1524 = vadd.f32 %v1302, %v1478
        %v1525 = vadd.f32 %v1303, %v1480
        %v1526 = vadd.f32 %v1304, %v1483
        %v1527 = vadd.f32 %v1305, %v1485
        %v1528 = vadd.f32 %v1306, %v1488
        %v1529 = vadd.f32 %v1307, %v1490
        %v1530 = vadd.f32 %v1308, %v1493
        %v1531 = vadd.f32 %v1309, %v1495
        %v1532 = vadd.f32 %v1310, %v1498
        %v1533 = vadd.f32 %v1311, %v1500
        %v1534 = vld [vmem:[%s678 + $0x1] sm:$0xff]
        %v1535 = vld [vmem:[%s678 + $0x9] sm:$0xff]
        %v1536 = vld [vmem:[%s678 + $0x19] sm:$0xff]
        %v1537 = vld [vmem:[%s678 + $0x21] sm:$0xff]
        %v1538 = vld [vmem:[%s678 + $0x31] sm:$0xff]
        %v1539 = vld [vmem:[%s678 + $0x39] sm:$0xff]
        %v1540 = vld [vmem:[%s678 + $0x49] sm:$0xff]
        %v1541 = vld [vmem:[%s678 + $0x51] sm:$0xff]
        %v1542 = vld [vmem:[%s678 + $0x61] sm:$0xff]
        %v1543 = vld [vmem:[%s678 + $0x69] sm:$0xff]
        %v1544 = vld [vmem:[%s678 + $0x79] sm:$0xff]
        %v1545 = vld [vmem:[%s678 + $0x81] sm:$0xff]
        %v1546 = vld [vmem:[%s678 + $0x91] sm:$0xff]
        %v1547 = vld [vmem:[%s678 + $0x99] sm:$0xff]
        %v1548 = vld [vmem:[%s678 + $0xa9] sm:$0xff]
        %v1549 = vld [vmem:[%s678 + $0xb1] sm:$0xff]
        %v1550 = vld [vmem:[%s678 + $0xc1] sm:$0xff]
        %v1551 = vld [vmem:[%s678 + $0xc9] sm:$0xff]
        %v1552 = vld [vmem:[%s678 + $0xd9] sm:$0xff]
        %v1553 = vld [vmem:[%s678 + $0xe1] sm:$0xff]
        %v1554 = vld [vmem:[%s678 + $0xf1] sm:$0xff]
        %v1555 = vld [vmem:[%s678 + $0xf9] sm:$0xff]
        %v1556 = vld [vmem:[%s678 + $0x109] sm:$0xff]
        %v1557 = vld [vmem:[%s678 + $0x111] sm:$0xff]
        %v1558 = vld [vmem:[%s678 + $0x121] sm:$0xff]
        %v1559 = vld [vmem:[%s678 + $0x129] sm:$0xff]
        %v1560 = vld [vmem:[%s678 + $0x139] sm:$0xff]
        %v1561 = vld [vmem:[%s678 + $0x141] sm:$0xff]
        %v1562 = vld [vmem:[%s678 + $0x151] sm:$0xff]
        %v1563 = vld [vmem:[%s678 + $0x159] sm:$0xff]
        %v1564 = vld [vmem:[%s678 + $0x169] sm:$0xff]
        %v1565 = vld [vmem:[%s678 + $0x171] sm:$0xff]
        %v1566 = vpack.c.bf16 %v1535, %v1534
        %v1567 = vpack.c.bf16 %v1537, %v1536
        %v1568 = vpack.c.bf16 %v1539, %v1538
        %v1569 = vpack.c.bf16 %v1541, %v1540
        %v1570 = vpack.c.bf16 %v1543, %v1542
        %v1571 = vpack.c.bf16 %v1545, %v1544
        %v1572 = vpack.c.bf16 %v1547, %v1546
        %v1573 = vpack.c.bf16 %v1549, %v1548
        %v1574 = vpack.c.bf16 %v1551, %v1550
        %v1575 = vpack.c.bf16 %v1553, %v1552
        %v1576 = vpack.c.bf16 %v1555, %v1554
        %v1577 = vpack.c.bf16 %v1557, %v1556
        %v1578 = vpack.c.bf16 %v1559, %v1558
        %v1579 = vpack.c.bf16 %v1561, %v1560
        %v1580 = vpack.c.bf16 %v1563, %v1562
        %v1581 = vpack.c.bf16 %v1565, %v1564
        %s1582 = scalar_lea.vmem %s3, 8
        %v1583 = vld [vmem:[%s1582] sm:$0x3]
        %v1585 = vsel %vm449, %v1566, 0
        %v1588 = vsel %vm449, %v1567, 0
        %v1591 = vsel %vm449, %v1568, 0
        %v1594 = vsel %vm449, %v1569, 0
        %v1597 = vsel %vm449, %v1570, 0
        %v1600 = vsel %vm449, %v1571, 0
        %v1603 = vsel %vm449, %v1572, 0
        %v1606 = vsel %vm449, %v1573, 0
        %v1609 = vsel %vm449, %v1574, 0
        %v1612 = vsel %vm449, %v1575, 0
        %v1615 = vsel %vm449, %v1576, 0
        %v1618 = vsel %vm449, %v1577, 0
        %v1621 = vsel %vm449, %v1578, 0
        %v1624 = vsel %vm449, %v1579, 0
        %v1627 = vsel %vm449, %v1580, 0
        %v1630 = vsel %vm449, %v1581, 0
        %v1633 = vsel %vm498, %v1583, 0
        %1635 = vmatpush.bf16.msra.mxu0 0
        %1636 = vmatpush.bf16.msra.mxu0 0
        %1637 = vmatpush.bf16.msra.mxu0 0
        %1638 = vmatpush.bf16.msra.mxu0 0
        %1639 = vmatpush.bf16.msra.mxu0 0
        %1640 = vmatpush.bf16.msra.mxu0 0
        %1641 = vmatpush.bf16.msra.mxu0 0
        %1642 = vmatpush.bf16.msra.mxu0 %v1633
        %1643 = vmatmul.bf16.gmra.mxu0 %v1585
        %v1644 = vpop.f32.mrf.mxu0
        %v1645 = vadd.f32 0.0, %v1644
        %v1646 = vpop.f32.mrf.mxu0
        %v1647 = vadd.f32 0.0, %v1646
        %1648 = vmatmul.bf16.gmra.mxu0 %v1588
        %v1649 = vpop.f32.mrf.mxu0
        %v1650 = vadd.f32 0.0, %v1649
        %v1651 = vpop.f32.mrf.mxu0
        %v1652 = vadd.f32 0.0, %v1651
        %1653 = vmatmul.bf16.gmra.mxu0 %v1591
        %v1654 = vpop.f32.mrf.mxu0
        %v1655 = vadd.f32 0.0, %v1654
        %v1656 = vpop.f32.mrf.mxu0
        %v1657 = vadd.f32 0.0, %v1656
        %1658 = vmatmul.bf16.gmra.mxu0 %v1594
        %v1659 = vpop.f32.mrf.mxu0
        %v1660 = vadd.f32 0.0, %v1659
        %v1661 = vpop.f32.mrf.mxu0
        %v1662 = vadd.f32 0.0, %v1661
        %1663 = vmatmul.bf16.gmra.mxu0 %v1597
        %v1664 = vpop.f32.mrf.mxu0
        %v1665 = vadd.f32 0.0, %v1664
        %v1666 = vpop.f32.mrf.mxu0
        %v1667 = vadd.f32 0.0, %v1666
        %1668 = vmatmul.bf16.gmra.mxu0 %v1600
        %v1669 = vpop.f32.mrf.mxu0
        %v1670 = vadd.f32 0.0, %v1669
        %v1671 = vpop.f32.mrf.mxu0
        %v1672 = vadd.f32 0.0, %v1671
        %1673 = vmatmul.bf16.gmra.mxu0 %v1603
        %v1674 = vpop.f32.mrf.mxu0
        %v1675 = vadd.f32 0.0, %v1674
        %v1676 = vpop.f32.mrf.mxu0
        %v1677 = vadd.f32 0.0, %v1676
        %1678 = vmatmul.bf16.gmra.mxu0 %v1606
        %v1679 = vpop.f32.mrf.mxu0
        %v1680 = vadd.f32 0.0, %v1679
        %v1681 = vpop.f32.mrf.mxu0
        %v1682 = vadd.f32 0.0, %v1681
        %1683 = vmatmul.bf16.gmra.mxu0 %v1609
        %v1684 = vpop.f32.mrf.mxu0
        %v1685 = vadd.f32 0.0, %v1684
        %v1686 = vpop.f32.mrf.mxu0
        %v1687 = vadd.f32 0.0, %v1686
        %1688 = vmatmul.bf16.gmra.mxu0 %v1612
        %v1689 = vpop.f32.mrf.mxu0
        %v1690 = vadd.f32 0.0, %v1689
        %v1691 = vpop.f32.mrf.mxu0
        %v1692 = vadd.f32 0.0, %v1691
        %1693 = vmatmul.bf16.gmra.mxu0 %v1615
        %v1694 = vpop.f32.mrf.mxu0
        %v1695 = vadd.f32 0.0, %v1694
        %v1696 = vpop.f32.mrf.mxu0
        %v1697 = vadd.f32 0.0, %v1696
        %1698 = vmatmul.bf16.gmra.mxu0 %v1618
        %v1699 = vpop.f32.mrf.mxu0
        %v1700 = vadd.f32 0.0, %v1699
        %v1701 = vpop.f32.mrf.mxu0
        %v1702 = vadd.f32 0.0, %v1701
        %1703 = vmatmul.bf16.gmra.mxu0 %v1621
        %v1704 = vpop.f32.mrf.mxu0
        %v1705 = vadd.f32 0.0, %v1704
        %v1706 = vpop.f32.mrf.mxu0
        %v1707 = vadd.f32 0.0, %v1706
        %1708 = vmatmul.bf16.gmra.mxu0 %v1624
        %v1709 = vpop.f32.mrf.mxu0
        %v1710 = vadd.f32 0.0, %v1709
        %v1711 = vpop.f32.mrf.mxu0
        %v1712 = vadd.f32 0.0, %v1711
        %1713 = vmatmul.bf16.gmra.mxu0 %v1627
        %v1714 = vpop.f32.mrf.mxu0
        %v1715 = vadd.f32 0.0, %v1714
        %v1716 = vpop.f32.mrf.mxu0
        %v1717 = vadd.f32 0.0, %v1716
        %1718 = vmatmul.bf16.gmra.mxu0 %v1630
        %v1719 = vpop.f32.mrf.mxu0
        %v1720 = vadd.f32 0.0, %v1719
        %v1721 = vpop.f32.mrf.mxu0
        %v1722 = vadd.f32 0.0, %v1721
        %1723 = vdwg.mxu0
        %v1724 = vadd.f32 %v1502, %v1645
        %v1725 = vadd.f32 %v1503, %v1647
        %v1726 = vadd.f32 %v1504, %v1650
        %v1727 = vadd.f32 %v1505, %v1652
        %v1728 = vadd.f32 %v1506, %v1655
        %v1729 = vadd.f32 %v1507, %v1657
        %v1730 = vadd.f32 %v1508, %v1660
        %v1731 = vadd.f32 %v1509, %v1662
        %v1732 = vadd.f32 %v1510, %v1665
        %v1733 = vadd.f32 %v1511, %v1667
        %v1734 = vadd.f32 %v1512, %v1670
        %v1735 = vadd.f32 %v1513, %v1672
        %v1736 = vadd.f32 %v1514, %v1675
        %v1737 = vadd.f32 %v1515, %v1677
        %v1738 = vadd.f32 %v1516, %v1680
        %v1739 = vadd.f32 %v1517, %v1682
        %v1740 = vadd.f32 %v1518, %v1685
        %v1741 = vadd.f32 %v1519, %v1687
        %v1742 = vadd.f32 %v1520, %v1690
        %v1743 = vadd.f32 %v1521, %v1692
        %v1744 = vadd.f32 %v1522, %v1695
        %v1745 = vadd.f32 %v1523, %v1697
        %v1746 = vadd.f32 %v1524, %v1700
        %v1747 = vadd.f32 %v1525, %v1702
        %v1748 = vadd.f32 %v1526, %v1705
        %v1749 = vadd.f32 %v1527, %v1707
        %v1750 = vadd.f32 %v1528, %v1710
        %v1751 = vadd.f32 %v1529, %v1712
        %v1752 = vadd.f32 %v1530, %v1715
        %v1753 = vadd.f32 %v1531, %v1717
        %v1754 = vadd.f32 %v1532, %v1720
        %v1755 = vadd.f32 %v1533, %v1722
        %v1756 = vld [vmem:[%s678 + $0x2] sm:$0xff]
        %v1757 = vld [vmem:[%s678 + $0xa] sm:$0xff]
        %v1758 = vld [vmem:[%s678 + $0x1a] sm:$0xff]
        %v1759 = vld [vmem:[%s678 + $0x22] sm:$0xff]
        %v1760 = vld [vmem:[%s678 + $0x32] sm:$0xff]
        %v1761 = vld [vmem:[%s678 + $0x3a] sm:$0xff]
        %v1762 = vld [vmem:[%s678 + $0x4a] sm:$0xff]
        %v1763 = vld [vmem:[%s678 + $0x52] sm:$0xff]
        %v1764 = vld [vmem:[%s678 + $0x62] sm:$0xff]
        %v1765 = vld [vmem:[%s678 + $0x6a] sm:$0xff]
        %v1766 = vld [vmem:[%s678 + $0x7a] sm:$0xff]
        %v1767 = vld [vmem:[%s678 + $0x82] sm:$0xff]
        %v1768 = vld [vmem:[%s678 + $0x92] sm:$0xff]
        %v1769 = vld [vmem:[%s678 + $0x9a] sm:$0xff]
        %v1770 = vld [vmem:[%s678 + $0xaa] sm:$0xff]
        %v1771 = vld [vmem:[%s678 + $0xb2] sm:$0xff]
        %v1772 = vld [vmem:[%s678 + $0xc2] sm:$0xff]
        %v1773 = vld [vmem:[%s678 + $0xca] sm:$0xff]
        %v1774 = vld [vmem:[%s678 + $0xda] sm:$0xff]
        %v1775 = vld [vmem:[%s678 + $0xe2] sm:$0xff]
        %v1776 = vld [vmem:[%s678 + $0xf2] sm:$0xff]
        %v1777 = vld [vmem:[%s678 + $0xfa] sm:$0xff]
        %v1778 = vld [vmem:[%s678 + $0x10a] sm:$0xff]
        %v1779 = vld [vmem:[%s678 + $0x112] sm:$0xff]
        %v1780 = vld [vmem:[%s678 + $0x122] sm:$0xff]
        %v1781 = vld [vmem:[%s678 + $0x12a] sm:$0xff]
        %v1782 = vld [vmem:[%s678 + $0x13a] sm:$0xff]
        %v1783 = vld [vmem:[%s678 + $0x142] sm:$0xff]
        %v1784 = vld [vmem:[%s678 + $0x152] sm:$0xff]
        %v1785 = vld [vmem:[%s678 + $0x15a] sm:$0xff]
        %v1786 = vld [vmem:[%s678 + $0x16a] sm:$0xff]
        %v1787 = vld [vmem:[%s678 + $0x172] sm:$0xff]
        %v1788 = vpack.c.bf16 %v1757, %v1756
        %v1789 = vpack.c.bf16 %v1759, %v1758
        %v1790 = vpack.c.bf16 %v1761, %v1760
        %v1791 = vpack.c.bf16 %v1763, %v1762
        %v1792 = vpack.c.bf16 %v1765, %v1764
        %v1793 = vpack.c.bf16 %v1767, %v1766
        %v1794 = vpack.c.bf16 %v1769, %v1768
        %v1795 = vpack.c.bf16 %v1771, %v1770
        %v1796 = vpack.c.bf16 %v1773, %v1772
        %v1797 = vpack.c.bf16 %v1775, %v1774
        %v1798 = vpack.c.bf16 %v1777, %v1776
        %v1799 = vpack.c.bf16 %v1779, %v1778
        %v1800 = vpack.c.bf16 %v1781, %v1780
        %v1801 = vpack.c.bf16 %v1783, %v1782
        %v1802 = vpack.c.bf16 %v1785, %v1784
        %v1803 = vpack.c.bf16 %v1787, %v1786
        %s1804 = scalar_lea.vmem %s3, 10
        %v1805 = vld [vmem:[%s1804] sm:$0x3]
        %v1807 = vsel %vm449, %v1788, 0
        %v1810 = vsel %vm449, %v1789, 0
        %v1813 = vsel %vm449, %v1790, 0
        %v1816 = vsel %vm449, %v1791, 0
        %v1819 = vsel %vm449, %v1792, 0
        %v1822 = vsel %vm449, %v1793, 0
        %v1825 = vsel %vm449, %v1794, 0
        %v1828 = vsel %vm449, %v1795, 0
        %v1831 = vsel %vm449, %v1796, 0
        %v1834 = vsel %vm449, %v1797, 0
        %v1837 = vsel %vm449, %v1798, 0
        %v1840 = vsel %vm449, %v1799, 0
        %v1843 = vsel %vm449, %v1800, 0
        %v1846 = vsel %vm449, %v1801, 0
        %v1849 = vsel %vm449, %v1802, 0
        %v1852 = vsel %vm449, %v1803, 0
        %v1855 = vsel %vm498, %v1805, 0
        %1857 = vmatpush.bf16.msra.mxu0 0
        %1858 = vmatpush.bf16.msra.mxu0 0
        %1859 = vmatpush.bf16.msra.mxu0 0
        %1860 = vmatpush.bf16.msra.mxu0 0
        %1861 = vmatpush.bf16.msra.mxu0 0
        %1862 = vmatpush.bf16.msra.mxu0 0
        %1863 = vmatpush.bf16.msra.mxu0 0
        %1864 = vmatpush.bf16.msra.mxu0 %v1855
        %1865 = vmatmul.bf16.gmra.mxu0 %v1807
        %v1866 = vpop.f32.mrf.mxu0
        %v1867 = vadd.f32 0.0, %v1866
        %v1868 = vpop.f32.mrf.mxu0
        %v1869 = vadd.f32 0.0, %v1868
        %1870 = vmatmul.bf16.gmra.mxu0 %v1810
        %v1871 = vpop.f32.mrf.mxu0
        %v1872 = vadd.f32 0.0, %v1871
        %v1873 = vpop.f32.mrf.mxu0
        %v1874 = vadd.f32 0.0, %v1873
        %1875 = vmatmul.bf16.gmra.mxu0 %v1813
        %v1876 = vpop.f32.mrf.mxu0
        %v1877 = vadd.f32 0.0, %v1876
        %v1878 = vpop.f32.mrf.mxu0
        %v1879 = vadd.f32 0.0, %v1878
        %1880 = vmatmul.bf16.gmra.mxu0 %v1816
        %v1881 = vpop.f32.mrf.mxu0
        %v1882 = vadd.f32 0.0, %v1881
        %v1883 = vpop.f32.mrf.mxu0
        %v1884 = vadd.f32 0.0, %v1883
        %1885 = vmatmul.bf16.gmra.mxu0 %v1819
        %v1886 = vpop.f32.mrf.mxu0
        %v1887 = vadd.f32 0.0, %v1886
        %v1888 = vpop.f32.mrf.mxu0
        %v1889 = vadd.f32 0.0, %v1888
        %1890 = vmatmul.bf16.gmra.mxu0 %v1822
        %v1891 = vpop.f32.mrf.mxu0
        %v1892 = vadd.f32 0.0, %v1891
        %v1893 = vpop.f32.mrf.mxu0
        %v1894 = vadd.f32 0.0, %v1893
        %1895 = vmatmul.bf16.gmra.mxu0 %v1825
        %v1896 = vpop.f32.mrf.mxu0
        %v1897 = vadd.f32 0.0, %v1896
        %v1898 = vpop.f32.mrf.mxu0
        %v1899 = vadd.f32 0.0, %v1898
        %1900 = vmatmul.bf16.gmra.mxu0 %v1828
        %v1901 = vpop.f32.mrf.mxu0
        %v1902 = vadd.f32 0.0, %v1901
        %v1903 = vpop.f32.mrf.mxu0
        %v1904 = vadd.f32 0.0, %v1903
        %1905 = vmatmul.bf16.gmra.mxu0 %v1831
        %v1906 = vpop.f32.mrf.mxu0
        %v1907 = vadd.f32 0.0, %v1906
        %v1908 = vpop.f32.mrf.mxu0
        %v1909 = vadd.f32 0.0, %v1908
        %1910 = vmatmul.bf16.gmra.mxu0 %v1834
        %v1911 = vpop.f32.mrf.mxu0
        %v1912 = vadd.f32 0.0, %v1911
        %v1913 = vpop.f32.mrf.mxu0
        %v1914 = vadd.f32 0.0, %v1913
        %1915 = vmatmul.bf16.gmra.mxu0 %v1837
        %v1916 = vpop.f32.mrf.mxu0
        %v1917 = vadd.f32 0.0, %v1916
        %v1918 = vpop.f32.mrf.mxu0
        %v1919 = vadd.f32 0.0, %v1918
        %1920 = vmatmul.bf16.gmra.mxu0 %v1840
        %v1921 = vpop.f32.mrf.mxu0
        %v1922 = vadd.f32 0.0, %v1921
        %v1923 = vpop.f32.mrf.mxu0
        %v1924 = vadd.f32 0.0, %v1923
        %1925 = vmatmul.bf16.gmra.mxu0 %v1843
        %v1926 = vpop.f32.mrf.mxu0
        %v1927 = vadd.f32 0.0, %v1926
        %v1928 = vpop.f32.mrf.mxu0
        %v1929 = vadd.f32 0.0, %v1928
        %1930 = vmatmul.bf16.gmra.mxu0 %v1846
        %v1931 = vpop.f32.mrf.mxu0
        %v1932 = vadd.f32 0.0, %v1931
        %v1933 = vpop.f32.mrf.mxu0
        %v1934 = vadd.f32 0.0, %v1933
        %1935 = vmatmul.bf16.gmra.mxu0 %v1849
        %v1936 = vpop.f32.mrf.mxu0
        %v1937 = vadd.f32 0.0, %v1936
        %v1938 = vpop.f32.mrf.mxu0
        %v1939 = vadd.f32 0.0, %v1938
        %1940 = vmatmul.bf16.gmra.mxu0 %v1852
        %v1941 = vpop.f32.mrf.mxu0
        %v1942 = vadd.f32 0.0, %v1941
        %v1943 = vpop.f32.mrf.mxu0
        %v1944 = vadd.f32 0.0, %v1943
        %1945 = vdwg.mxu0
        %v1946 = vadd.f32 %v1724, %v1867
        %v1947 = vadd.f32 %v1725, %v1869
        %v1948 = vadd.f32 %v1726, %v1872
        %v1949 = vadd.f32 %v1727, %v1874
        %v1950 = vadd.f32 %v1728, %v1877
        %v1951 = vadd.f32 %v1729, %v1879
        %v1952 = vadd.f32 %v1730, %v1882
        %v1953 = vadd.f32 %v1731, %v1884
        %v1954 = vadd.f32 %v1732, %v1887
        %v1955 = vadd.f32 %v1733, %v1889
        %v1956 = vadd.f32 %v1734, %v1892
        %v1957 = vadd.f32 %v1735, %v1894
        %v1958 = vadd.f32 %v1736, %v1897
        %v1959 = vadd.f32 %v1737, %v1899
        %v1960 = vadd.f32 %v1738, %v1902
        %v1961 = vadd.f32 %v1739, %v1904
        %v1962 = vadd.f32 %v1740, %v1907
        %v1963 = vadd.f32 %v1741, %v1909
        %v1964 = vadd.f32 %v1742, %v1912
        %v1965 = vadd.f32 %v1743, %v1914
        %v1966 = vadd.f32 %v1744, %v1917
        %v1967 = vadd.f32 %v1745, %v1919
        %v1968 = vadd.f32 %v1746, %v1922
        %v1969 = vadd.f32 %v1747, %v1924
        %v1970 = vadd.f32 %v1748, %v1927
        %v1971 = vadd.f32 %v1749, %v1929
        %v1972 = vadd.f32 %v1750, %v1932
        %v1973 = vadd.f32 %v1751, %v1934
        %v1974 = vadd.f32 %v1752, %v1937
        %v1975 = vadd.f32 %v1753, %v1939
        %v1976 = vadd.f32 %v1754, %v1942
        %v1977 = vadd.f32 %v1755, %v1944
        %s1978 = scalar_lea.vmem [#allocation2], 48
        %v1979 = vld [vmem:[%s1978] sm:$0xff]
        %v1980 = vld [vmem:[%s1978 + $0x8] sm:$0xff]
        %v1981 = vld [vmem:[%s1978 + $0x18] sm:$0xff]
        %v1982 = vld [vmem:[%s1978 + $0x20] sm:$0xff]
        %v1983 = vld [vmem:[%s1978 + $0x30] sm:$0xff]
        %v1984 = vld [vmem:[%s1978 + $0x38] sm:$0xff]
        %v1985 = vld [vmem:[%s1978 + $0x48] sm:$0xff]
        %v1986 = vld [vmem:[%s1978 + $0x50] sm:$0xff]
        %v1987 = vld [vmem:[%s1978 + $0x60] sm:$0xff]
        %v1988 = vld [vmem:[%s1978 + $0x68] sm:$0xff]
        %v1989 = vld [vmem:[%s1978 + $0x78] sm:$0xff]
        %v1990 = vld [vmem:[%s1978 + $0x80] sm:$0xff]
        %v1991 = vld [vmem:[%s1978 + $0x90] sm:$0xff]
        %v1992 = vld [vmem:[%s1978 + $0x98] sm:$0xff]
        %v1993 = vld [vmem:[%s1978 + $0xa8] sm:$0xff]
        %v1994 = vld [vmem:[%s1978 + $0xb0] sm:$0xff]
        %v1995 = vld [vmem:[%s1978 + $0xc0] sm:$0xff]
        %v1996 = vld [vmem:[%s1978 + $0xc8] sm:$0xff]
        %v1997 = vld [vmem:[%s1978 + $0xd8] sm:$0xff]
        %v1998 = vld [vmem:[%s1978 + $0xe0] sm:$0xff]
        %v1999 = vld [vmem:[%s1978 + $0xf0] sm:$0xff]
        %v2000 = vld [vmem:[%s1978 + $0xf8] sm:$0xff]
        %v2001 = vld [vmem:[%s1978 + $0x108] sm:$0xff]
        %v2002 = vld [vmem:[%s1978 + $0x110] sm:$0xff]
        %v2003 = vld [vmem:[%s1978 + $0x120] sm:$0xff]
        %v2004 = vld [vmem:[%s1978 + $0x128] sm:$0xff]
        %v2005 = vld [vmem:[%s1978 + $0x138] sm:$0xff]
        %v2006 = vld [vmem:[%s1978 + $0x140] sm:$0xff]
        %v2007 = vld [vmem:[%s1978 + $0x150] sm:$0xff]
        %v2008 = vld [vmem:[%s1978 + $0x158] sm:$0xff]
        %v2009 = vld [vmem:[%s1978 + $0x168] sm:$0xff]
        %v2010 = vld [vmem:[%s1978 + $0x170] sm:$0xff]
        %v2011 = vpack.c.bf16 %v1980, %v1979
        %v2012 = vpack.c.bf16 %v1982, %v1981
        %v2013 = vpack.c.bf16 %v1984, %v1983
        %v2014 = vpack.c.bf16 %v1986, %v1985
        %v2015 = vpack.c.bf16 %v1988, %v1987
        %v2016 = vpack.c.bf16 %v1990, %v1989
        %v2017 = vpack.c.bf16 %v1992, %v1991
        %v2018 = vpack.c.bf16 %v1994, %v1993
        %v2019 = vpack.c.bf16 %v1996, %v1995
        %v2020 = vpack.c.bf16 %v1998, %v1997
        %v2021 = vpack.c.bf16 %v2000, %v1999
        %v2022 = vpack.c.bf16 %v2002, %v2001
        %v2023 = vpack.c.bf16 %v2004, %v2003
        %v2024 = vpack.c.bf16 %v2006, %v2005
        %v2025 = vpack.c.bf16 %v2008, %v2007
        %v2026 = vpack.c.bf16 %v2010, %v2009
        %s2027 = scalar_lea.vmem %s3, 12
        %v2028 = vld [vmem:[%s2027] sm:$0x3]
        %v2030 = vsel %vm449, %v2011, 0
        %v2033 = vsel %vm449, %v2012, 0
        %v2036 = vsel %vm449, %v2013, 0
        %v2039 = vsel %vm449, %v2014, 0
        %v2042 = vsel %vm449, %v2015, 0
        %v2045 = vsel %vm449, %v2016, 0
        %v2048 = vsel %vm449, %v2017, 0
        %v2051 = vsel %vm449, %v2018, 0
        %v2054 = vsel %vm449, %v2019, 0
        %v2057 = vsel %vm449, %v2020, 0
        %v2060 = vsel %vm449, %v2021, 0
        %v2063 = vsel %vm449, %v2022, 0
        %v2066 = vsel %vm449, %v2023, 0
        %v2069 = vsel %vm449, %v2024, 0
        %v2072 = vsel %vm449, %v2025, 0
        %v2075 = vsel %vm449, %v2026, 0
        %v2078 = vsel %vm498, %v2028, 0
        %2080 = vmatpush.bf16.msra.mxu0 0
        %2081 = vmatpush.bf16.msra.mxu0 0
        %2082 = vmatpush.bf16.msra.mxu0 0
        %2083 = vmatpush.bf16.msra.mxu0 0
        %2084 = vmatpush.bf16.msra.mxu0 0
        %2085 = vmatpush.bf16.msra.mxu0 0
        %2086 = vmatpush.bf16.msra.mxu0 0
        %2087 = vmatpush.bf16.msra.mxu0 %v2078
        %2088 = vmatmul.bf16.gmra.mxu0 %v2030
        %v2089 = vpop.f32.mrf.mxu0
        %v2090 = vadd.f32 0.0, %v2089
        %v2091 = vpop.f32.mrf.mxu0
        %v2092 = vadd.f32 0.0, %v2091
        %2093 = vmatmul.bf16.gmra.mxu0 %v2033
        %v2094 = vpop.f32.mrf.mxu0
        %v2095 = vadd.f32 0.0, %v2094
        %v2096 = vpop.f32.mrf.mxu0
        %v2097 = vadd.f32 0.0, %v2096
        %2098 = vmatmul.bf16.gmra.mxu0 %v2036
        %v2099 = vpop.f32.mrf.mxu0
        %v2100 = vadd.f32 0.0, %v2099
        %v2101 = vpop.f32.mrf.mxu0
        %v2102 = vadd.f32 0.0, %v2101
        %2103 = vmatmul.bf16.gmra.mxu0 %v2039
        %v2104 = vpop.f32.mrf.mxu0
        %v2105 = vadd.f32 0.0, %v2104
        %v2106 = vpop.f32.mrf.mxu0
        %v2107 = vadd.f32 0.0, %v2106
        %2108 = vmatmul.bf16.gmra.mxu0 %v2042
        %v2109 = vpop.f32.mrf.mxu0
        %v2110 = vadd.f32 0.0, %v2109
        %v2111 = vpop.f32.mrf.mxu0
        %v2112 = vadd.f32 0.0, %v2111
        %2113 = vmatmul.bf16.gmra.mxu0 %v2045
        %v2114 = vpop.f32.mrf.mxu0
        %v2115 = vadd.f32 0.0, %v2114
        %v2116 = vpop.f32.mrf.mxu0
        %v2117 = vadd.f32 0.0, %v2116
        %2118 = vmatmul.bf16.gmra.mxu0 %v2048
        %v2119 = vpop.f32.mrf.mxu0
        %v2120 = vadd.f32 0.0, %v2119
        %v2121 = vpop.f32.mrf.mxu0
        %v2122 = vadd.f32 0.0, %v2121
        %2123 = vmatmul.bf16.gmra.mxu0 %v2051
        %v2124 = vpop.f32.mrf.mxu0
        %v2125 = vadd.f32 0.0, %v2124
        %v2126 = vpop.f32.mrf.mxu0
        %v2127 = vadd.f32 0.0, %v2126
        %2128 = vmatmul.bf16.gmra.mxu0 %v2054
        %v2129 = vpop.f32.mrf.mxu0
        %v2130 = vadd.f32 0.0, %v2129
        %v2131 = vpop.f32.mrf.mxu0
        %v2132 = vadd.f32 0.0, %v2131
        %2133 = vmatmul.bf16.gmra.mxu0 %v2057
        %v2134 = vpop.f32.mrf.mxu0
        %v2135 = vadd.f32 0.0, %v2134
        %v2136 = vpop.f32.mrf.mxu0
        %v2137 = vadd.f32 0.0, %v2136
        %2138 = vmatmul.bf16.gmra.mxu0 %v2060
        %v2139 = vpop.f32.mrf.mxu0
        %v2140 = vadd.f32 0.0, %v2139
        %v2141 = vpop.f32.mrf.mxu0
        %v2142 = vadd.f32 0.0, %v2141
        %2143 = vmatmul.bf16.gmra.mxu0 %v2063
        %v2144 = vpop.f32.mrf.mxu0
        %v2145 = vadd.f32 0.0, %v2144
        %v2146 = vpop.f32.mrf.mxu0
        %v2147 = vadd.f32 0.0, %v2146
        %2148 = vmatmul.bf16.gmra.mxu0 %v2066
        %v2149 = vpop.f32.mrf.mxu0
        %v2150 = vadd.f32 0.0, %v2149
        %v2151 = vpop.f32.mrf.mxu0
        %v2152 = vadd.f32 0.0, %v2151
        %2153 = vmatmul.bf16.gmra.mxu0 %v2069
        %v2154 = vpop.f32.mrf.mxu0
        %v2155 = vadd.f32 0.0, %v2154
        %v2156 = vpop.f32.mrf.mxu0
        %v2157 = vadd.f32 0.0, %v2156
        %2158 = vmatmul.bf16.gmra.mxu0 %v2072
        %v2159 = vpop.f32.mrf.mxu0
        %v2160 = vadd.f32 0.0, %v2159
        %v2161 = vpop.f32.mrf.mxu0
        %v2162 = vadd.f32 0.0, %v2161
        %2163 = vmatmul.bf16.gmra.mxu0 %v2075
        %v2164 = vpop.f32.mrf.mxu0
        %v2165 = vadd.f32 0.0, %v2164
        %v2166 = vpop.f32.mrf.mxu0
        %v2167 = vadd.f32 0.0, %v2166
        %2168 = vdwg.mxu0
        %v2169 = vadd.f32 %v1946, %v2090
        %v2170 = vadd.f32 %v1947, %v2092
        %v2171 = vadd.f32 %v1948, %v2095
        %v2172 = vadd.f32 %v1949, %v2097
        %v2173 = vadd.f32 %v1950, %v2100
        %v2174 = vadd.f32 %v1951, %v2102
        %v2175 = vadd.f32 %v1952, %v2105
        %v2176 = vadd.f32 %v1953, %v2107
        %v2177 = vadd.f32 %v1954, %v2110
        %v2178 = vadd.f32 %v1955, %v2112
        %v2179 = vadd.f32 %v1956, %v2115
        %v2180 = vadd.f32 %v1957, %v2117
        %v2181 = vadd.f32 %v1958, %v2120
        %v2182 = vadd.f32 %v1959, %v2122
        %v2183 = vadd.f32 %v1960, %v2125
        %v2184 = vadd.f32 %v1961, %v2127
        %v2185 = vadd.f32 %v1962, %v2130
        %v2186 = vadd.f32 %v1963, %v2132
        %v2187 = vadd.f32 %v1964, %v2135
        %v2188 = vadd.f32 %v1965, %v2137
        %v2189 = vadd.f32 %v1966, %v2140
        %v2190 = vadd.f32 %v1967, %v2142
        %v2191 = vadd.f32 %v1968, %v2145
        %v2192 = vadd.f32 %v1969, %v2147
        %v2193 = vadd.f32 %v1970, %v2150
        %v2194 = vadd.f32 %v1971, %v2152
        %v2195 = vadd.f32 %v1972, %v2155
        %v2196 = vadd.f32 %v1973, %v2157
        %v2197 = vadd.f32 %v1974, %v2160
        %v2198 = vadd.f32 %v1975, %v2162
        %v2199 = vadd.f32 %v1976, %v2165
        %v2200 = vadd.f32 %v1977, %v2167
        %v2201 = vld [vmem:[%s1978 + $0x1] sm:$0xff]
        %v2202 = vld [vmem:[%s1978 + $0x9] sm:$0xff]
        %v2203 = vld [vmem:[%s1978 + $0x19] sm:$0xff]
        %v2204 = vld [vmem:[%s1978 + $0x21] sm:$0xff]
        %v2205 = vld [vmem:[%s1978 + $0x31] sm:$0xff]
        %v2206 = vld [vmem:[%s1978 + $0x39] sm:$0xff]
        %v2207 = vld [vmem:[%s1978 + $0x49] sm:$0xff]
        %v2208 = vld [vmem:[%s1978 + $0x51] sm:$0xff]
        %v2209 = vld [vmem:[%s1978 + $0x61] sm:$0xff]
        %v2210 = vld [vmem:[%s1978 + $0x69] sm:$0xff]
        %v2211 = vld [vmem:[%s1978 + $0x79] sm:$0xff]
        %v2212 = vld [vmem:[%s1978 + $0x81] sm:$0xff]
        %v2213 = vld [vmem:[%s1978 + $0x91] sm:$0xff]
        %v2214 = vld [vmem:[%s1978 + $0x99] sm:$0xff]
        %v2215 = vld [vmem:[%s1978 + $0xa9] sm:$0xff]
        %v2216 = vld [vmem:[%s1978 + $0xb1] sm:$0xff]
        %v2217 = vld [vmem:[%s1978 + $0xc1] sm:$0xff]
        %v2218 = vld [vmem:[%s1978 + $0xc9] sm:$0xff]
        %v2219 = vld [vmem:[%s1978 + $0xd9] sm:$0xff]
        %v2220 = vld [vmem:[%s1978 + $0xe1] sm:$0xff]
        %v2221 = vld [vmem:[%s1978 + $0xf1] sm:$0xff]
        %v2222 = vld [vmem:[%s1978 + $0xf9] sm:$0xff]
        %v2223 = vld [vmem:[%s1978 + $0x109] sm:$0xff]
        %v2224 = vld [vmem:[%s1978 + $0x111] sm:$0xff]
        %v2225 = vld [vmem:[%s1978 + $0x121] sm:$0xff]
        %v2226 = vld [vmem:[%s1978 + $0x129] sm:$0xff]
        %v2227 = vld [vmem:[%s1978 + $0x139] sm:$0xff]
        %v2228 = vld [vmem:[%s1978 + $0x141] sm:$0xff]
        %v2229 = vld [vmem:[%s1978 + $0x151] sm:$0xff]
        %v2230 = vld [vmem:[%s1978 + $0x159] sm:$0xff]
        %v2231 = vld [vmem:[%s1978 + $0x169] sm:$0xff]
        %v2232 = vld [vmem:[%s1978 + $0x171] sm:$0xff]
        %v2233 = vpack.c.bf16 %v2202, %v2201
        %v2234 = vpack.c.bf16 %v2204, %v2203
        %v2235 = vpack.c.bf16 %v2206, %v2205
        %v2236 = vpack.c.bf16 %v2208, %v2207
        %v2237 = vpack.c.bf16 %v2210, %v2209
        %v2238 = vpack.c.bf16 %v2212, %v2211
        %v2239 = vpack.c.bf16 %v2214, %v2213
        %v2240 = vpack.c.bf16 %v2216, %v2215
        %v2241 = vpack.c.bf16 %v2218, %v2217
        %v2242 = vpack.c.bf16 %v2220, %v2219
        %v2243 = vpack.c.bf16 %v2222, %v2221
        %v2244 = vpack.c.bf16 %v2224, %v2223
        %v2245 = vpack.c.bf16 %v2226, %v2225
        %v2246 = vpack.c.bf16 %v2228, %v2227
        %v2247 = vpack.c.bf16 %v2230, %v2229
        %v2248 = vpack.c.bf16 %v2232, %v2231
        %s2249 = scalar_lea.vmem %s3, 14
        %v2250 = vld [vmem:[%s2249] sm:$0x3]
        %v2252 = vsel %vm449, %v2233, 0
        %v2255 = vsel %vm449, %v2234, 0
        %v2258 = vsel %vm449, %v2235, 0
        %v2261 = vsel %vm449, %v2236, 0
        %v2264 = vsel %vm449, %v2237, 0
        %v2267 = vsel %vm449, %v2238, 0
        %v2270 = vsel %vm449, %v2239, 0
        %v2273 = vsel %vm449, %v2240, 0
        %v2276 = vsel %vm449, %v2241, 0
        %v2279 = vsel %vm449, %v2242, 0
        %v2282 = vsel %vm449, %v2243, 0
        %v2285 = vsel %vm449, %v2244, 0
        %v2288 = vsel %vm449, %v2245, 0
        %v2291 = vsel %vm449, %v2246, 0
        %v2294 = vsel %vm449, %v2247, 0
        %v2297 = vsel %vm449, %v2248, 0
        %v2300 = vsel %vm498, %v2250, 0
        %2302 = vmatpush.bf16.msra.mxu0 0
        %2303 = vmatpush.bf16.msra.mxu0 0
        %2304 = vmatpush.bf16.msra.mxu0 0
        %2305 = vmatpush.bf16.msra.mxu0 0
        %2306 = vmatpush.bf16.msra.mxu0 0
        %2307 = vmatpush.bf16.msra.mxu0 0
        %2308 = vmatpush.bf16.msra.mxu0 0
        %2309 = vmatpush.bf16.msra.mxu0 %v2300
        %2310 = vmatmul.bf16.gmra.mxu0 %v2252
        %v2311 = vpop.f32.mrf.mxu0
        %v2312 = vadd.f32 0.0, %v2311
        %v2313 = vpop.f32.mrf.mxu0
        %v2314 = vadd.f32 0.0, %v2313
        %2315 = vmatmul.bf16.gmra.mxu0 %v2255
        %v2316 = vpop.f32.mrf.mxu0
        %v2317 = vadd.f32 0.0, %v2316
        %v2318 = vpop.f32.mrf.mxu0
        %v2319 = vadd.f32 0.0, %v2318
        %2320 = vmatmul.bf16.gmra.mxu0 %v2258
        %v2321 = vpop.f32.mrf.mxu0
        %v2322 = vadd.f32 0.0, %v2321
        %v2323 = vpop.f32.mrf.mxu0
        %v2324 = vadd.f32 0.0, %v2323
        %2325 = vmatmul.bf16.gmra.mxu0 %v2261
        %v2326 = vpop.f32.mrf.mxu0
        %v2327 = vadd.f32 0.0, %v2326
        %v2328 = vpop.f32.mrf.mxu0
        %v2329 = vadd.f32 0.0, %v2328
        %2330 = vmatmul.bf16.gmra.mxu0 %v2264
        %v2331 = vpop.f32.mrf.mxu0
        %v2332 = vadd.f32 0.0, %v2331
        %v2333 = vpop.f32.mrf.mxu0
        %v2334 = vadd.f32 0.0, %v2333
        %2335 = vmatmul.bf16.gmra.mxu0 %v2267
        %v2336 = vpop.f32.mrf.mxu0
        %v2337 = vadd.f32 0.0, %v2336
        %v2338 = vpop.f32.mrf.mxu0
        %v2339 = vadd.f32 0.0, %v2338
        %2340 = vmatmul.bf16.gmra.mxu0 %v2270
        %v2341 = vpop.f32.mrf.mxu0
        %v2342 = vadd.f32 0.0, %v2341
        %v2343 = vpop.f32.mrf.mxu0
        %v2344 = vadd.f32 0.0, %v2343
        %2345 = vmatmul.bf16.gmra.mxu0 %v2273
        %v2346 = vpop.f32.mrf.mxu0
        %v2347 = vadd.f32 0.0, %v2346
        %v2348 = vpop.f32.mrf.mxu0
        %v2349 = vadd.f32 0.0, %v2348
        %2350 = vmatmul.bf16.gmra.mxu0 %v2276
        %v2351 = vpop.f32.mrf.mxu0
        %v2352 = vadd.f32 0.0, %v2351
        %v2353 = vpop.f32.mrf.mxu0
        %v2354 = vadd.f32 0.0, %v2353
        %2355 = vmatmul.bf16.gmra.mxu0 %v2279
        %v2356 = vpop.f32.mrf.mxu0
        %v2357 = vadd.f32 0.0, %v2356
        %v2358 = vpop.f32.mrf.mxu0
        %v2359 = vadd.f32 0.0, %v2358
        %2360 = vmatmul.bf16.gmra.mxu0 %v2282
        %v2361 = vpop.f32.mrf.mxu0
        %v2362 = vadd.f32 0.0, %v2361
        %v2363 = vpop.f32.mrf.mxu0
        %v2364 = vadd.f32 0.0, %v2363
        %2365 = vmatmul.bf16.gmra.mxu0 %v2285
        %v2366 = vpop.f32.mrf.mxu0
        %v2367 = vadd.f32 0.0, %v2366
        %v2368 = vpop.f32.mrf.mxu0
        %v2369 = vadd.f32 0.0, %v2368
        %2370 = vmatmul.bf16.gmra.mxu0 %v2288
        %v2371 = vpop.f32.mrf.mxu0
        %v2372 = vadd.f32 0.0, %v2371
        %v2373 = vpop.f32.mrf.mxu0
        %v2374 = vadd.f32 0.0, %v2373
        %2375 = vmatmul.bf16.gmra.mxu0 %v2291
        %v2376 = vpop.f32.mrf.mxu0
        %v2377 = vadd.f32 0.0, %v2376
        %v2378 = vpop.f32.mrf.mxu0
        %v2379 = vadd.f32 0.0, %v2378
        %2380 = vmatmul.bf16.gmra.mxu0 %v2294
        %v2381 = vpop.f32.mrf.mxu0
        %v2382 = vadd.f32 0.0, %v2381
        %v2383 = vpop.f32.mrf.mxu0
        %v2384 = vadd.f32 0.0, %v2383
        %2385 = vmatmul.bf16.gmra.mxu0 %v2297
        %v2386 = vpop.f32.mrf.mxu0
        %v2387 = vadd.f32 0.0, %v2386
        %v2388 = vpop.f32.mrf.mxu0
        %v2389 = vadd.f32 0.0, %v2388
        %2390 = vdwg.mxu0
        %v2391 = vadd.f32 %v2169, %v2312
        %v2392 = vadd.f32 %v2170, %v2314
        %v2393 = vadd.f32 %v2171, %v2317
        %v2394 = vadd.f32 %v2172, %v2319
        %v2395 = vadd.f32 %v2173, %v2322
        %v2396 = vadd.f32 %v2174, %v2324
        %v2397 = vadd.f32 %v2175, %v2327
        %v2398 = vadd.f32 %v2176, %v2329
        %v2399 = vadd.f32 %v2177, %v2332
        %v2400 = vadd.f32 %v2178, %v2334
        %v2401 = vadd.f32 %v2179, %v2337
        %v2402 = vadd.f32 %v2180, %v2339
        %v2403 = vadd.f32 %v2181, %v2342
        %v2404 = vadd.f32 %v2182, %v2344
        %v2405 = vadd.f32 %v2183, %v2347
        %v2406 = vadd.f32 %v2184, %v2349
        %v2407 = vadd.f32 %v2185, %v2352
        %v2408 = vadd.f32 %v2186, %v2354
        %v2409 = vadd.f32 %v2187, %v2357
        %v2410 = vadd.f32 %v2188, %v2359
        %v2411 = vadd.f32 %v2189, %v2362
        %v2412 = vadd.f32 %v2190, %v2364
        %v2413 = vadd.f32 %v2191, %v2367
        %v2414 = vadd.f32 %v2192, %v2369
        %v2415 = vadd.f32 %v2193, %v2372
        %v2416 = vadd.f32 %v2194, %v2374
        %v2417 = vadd.f32 %v2195, %v2377
        %v2418 = vadd.f32 %v2196, %v2379
        %v2419 = vadd.f32 %v2197, %v2382
        %v2420 = vadd.f32 %v2198, %v2384
        %v2421 = vadd.f32 %v2199, %v2387
        %v2422 = vadd.f32 %v2200, %v2389
        %v2423 = vld [vmem:[%s1978 + $0x2] sm:$0xff]
        %v2424 = vld [vmem:[%s1978 + $0xa] sm:$0xff]
        %v2425 = vld [vmem:[%s1978 + $0x1a] sm:$0xff]
        %v2426 = vld [vmem:[%s1978 + $0x22] sm:$0xff]
        %v2427 = vld [vmem:[%s1978 + $0x32] sm:$0xff]
        %v2428 = vld [vmem:[%s1978 + $0x3a] sm:$0xff]
        %v2429 = vld [vmem:[%s1978 + $0x4a] sm:$0xff]
        %v2430 = vld [vmem:[%s1978 + $0x52] sm:$0xff]
        %v2431 = vld [vmem:[%s1978 + $0x62] sm:$0xff]
        %v2432 = vld [vmem:[%s1978 + $0x6a] sm:$0xff]
        %v2433 = vld [vmem:[%s1978 + $0x7a] sm:$0xff]
        %v2434 = vld [vmem:[%s1978 + $0x82] sm:$0xff]
        %v2435 = vld [vmem:[%s1978 + $0x92] sm:$0xff]
        %v2436 = vld [vmem:[%s1978 + $0x9a] sm:$0xff]
        %v2437 = vld [vmem:[%s1978 + $0xaa] sm:$0xff]
        %v2438 = vld [vmem:[%s1978 + $0xb2] sm:$0xff]
        %v2439 = vld [vmem:[%s1978 + $0xc2] sm:$0xff]
        %v2440 = vld [vmem:[%s1978 + $0xca] sm:$0xff]
        %v2441 = vld [vmem:[%s1978 + $0xda] sm:$0xff]
        %v2442 = vld [vmem:[%s1978 + $0xe2] sm:$0xff]
        %v2443 = vld [vmem:[%s1978 + $0xf2] sm:$0xff]
        %v2444 = vld [vmem:[%s1978 + $0xfa] sm:$0xff]
        %v2445 = vld [vmem:[%s1978 + $0x10a] sm:$0xff]
        %v2446 = vld [vmem:[%s1978 + $0x112] sm:$0xff]
        %v2447 = vld [vmem:[%s1978 + $0x122] sm:$0xff]
        %v2448 = vld [vmem:[%s1978 + $0x12a] sm:$0xff]
        %v2449 = vld [vmem:[%s1978 + $0x13a] sm:$0xff]
        %v2450 = vld [vmem:[%s1978 + $0x142] sm:$0xff]
        %v2451 = vld [vmem:[%s1978 + $0x152] sm:$0xff]
        %v2452 = vld [vmem:[%s1978 + $0x15a] sm:$0xff]
        %v2453 = vld [vmem:[%s1978 + $0x16a] sm:$0xff]
        %v2454 = vld [vmem:[%s1978 + $0x172] sm:$0xff]
        %v2455 = vpack.c.bf16 %v2424, %v2423
        %v2456 = vpack.c.bf16 %v2426, %v2425
        %v2457 = vpack.c.bf16 %v2428, %v2427
        %v2458 = vpack.c.bf16 %v2430, %v2429
        %v2459 = vpack.c.bf16 %v2432, %v2431
        %v2460 = vpack.c.bf16 %v2434, %v2433
        %v2461 = vpack.c.bf16 %v2436, %v2435
        %v2462 = vpack.c.bf16 %v2438, %v2437
        %v2463 = vpack.c.bf16 %v2440, %v2439
        %v2464 = vpack.c.bf16 %v2442, %v2441
        %v2465 = vpack.c.bf16 %v2444, %v2443
        %v2466 = vpack.c.bf16 %v2446, %v2445
        %v2467 = vpack.c.bf16 %v2448, %v2447
        %v2468 = vpack.c.bf16 %v2450, %v2449
        %v2469 = vpack.c.bf16 %v2452, %v2451
        %v2470 = vpack.c.bf16 %v2454, %v2453
        %s2471 = scalar_lea.vmem %s3, 16
        %v2472 = vld [vmem:[%s2471] sm:$0x3]
        %v2474 = vsel %vm449, %v2455, 0
        %v2477 = vsel %vm449, %v2456, 0
        %v2480 = vsel %vm449, %v2457, 0
        %v2483 = vsel %vm449, %v2458, 0
        %v2486 = vsel %vm449, %v2459, 0
        %v2489 = vsel %vm449, %v2460, 0
        %v2492 = vsel %vm449, %v2461, 0
        %v2495 = vsel %vm449, %v2462, 0
        %v2498 = vsel %vm449, %v2463, 0
        %v2501 = vsel %vm449, %v2464, 0
        %v2504 = vsel %vm449, %v2465, 0
        %v2507 = vsel %vm449, %v2466, 0
        %v2510 = vsel %vm449, %v2467, 0
        %v2513 = vsel %vm449, %v2468, 0
        %v2516 = vsel %vm449, %v2469, 0
        %v2519 = vsel %vm449, %v2470, 0
        %v2522 = vsel %vm498, %v2472, 0
        %2524 = vmatpush.bf16.msra.mxu0 0
        %2525 = vmatpush.bf16.msra.mxu0 0
        %2526 = vmatpush.bf16.msra.mxu0 0
        %2527 = vmatpush.bf16.msra.mxu0 0
        %2528 = vmatpush.bf16.msra.mxu0 0
        %2529 = vmatpush.bf16.msra.mxu0 0
        %2530 = vmatpush.bf16.msra.mxu0 0
        %2531 = vmatpush.bf16.msra.mxu0 %v2522
        %2532 = vmatmul.bf16.gmra.mxu0 %v2474
        %v2533 = vpop.f32.mrf.mxu0
        %v2534 = vadd.f32 0.0, %v2533
        %v2535 = vpop.f32.mrf.mxu0
        %v2536 = vadd.f32 0.0, %v2535
        %2537 = vmatmul.bf16.gmra.mxu0 %v2477
        %v2538 = vpop.f32.mrf.mxu0
        %v2539 = vadd.f32 0.0, %v2538
        %v2540 = vpop.f32.mrf.mxu0
        %v2541 = vadd.f32 0.0, %v2540
        %2542 = vmatmul.bf16.gmra.mxu0 %v2480
        %v2543 = vpop.f32.mrf.mxu0
        %v2544 = vadd.f32 0.0, %v2543
        %v2545 = vpop.f32.mrf.mxu0
        %v2546 = vadd.f32 0.0, %v2545
        %2547 = vmatmul.bf16.gmra.mxu0 %v2483
        %v2548 = vpop.f32.mrf.mxu0
        %v2549 = vadd.f32 0.0, %v2548
        %v2550 = vpop.f32.mrf.mxu0
        %v2551 = vadd.f32 0.0, %v2550
        %2552 = vmatmul.bf16.gmra.mxu0 %v2486
        %v2553 = vpop.f32.mrf.mxu0
        %v2554 = vadd.f32 0.0, %v2553
        %v2555 = vpop.f32.mrf.mxu0
        %v2556 = vadd.f32 0.0, %v2555
        %2557 = vmatmul.bf16.gmra.mxu0 %v2489
        %v2558 = vpop.f32.mrf.mxu0
        %v2559 = vadd.f32 0.0, %v2558
        %v2560 = vpop.f32.mrf.mxu0
        %v2561 = vadd.f32 0.0, %v2560
        %2562 = vmatmul.bf16.gmra.mxu0 %v2492
        %v2563 = vpop.f32.mrf.mxu0
        %v2564 = vadd.f32 0.0, %v2563
        %v2565 = vpop.f32.mrf.mxu0
        %v2566 = vadd.f32 0.0, %v2565
        %2567 = vmatmul.bf16.gmra.mxu0 %v2495
        %v2568 = vpop.f32.mrf.mxu0
        %v2569 = vadd.f32 0.0, %v2568
        %v2570 = vpop.f32.mrf.mxu0
        %v2571 = vadd.f32 0.0, %v2570
        %2572 = vmatmul.bf16.gmra.mxu0 %v2498
        %v2573 = vpop.f32.mrf.mxu0
        %v2574 = vadd.f32 0.0, %v2573
        %v2575 = vpop.f32.mrf.mxu0
        %v2576 = vadd.f32 0.0, %v2575
        %2577 = vmatmul.bf16.gmra.mxu0 %v2501
        %v2578 = vpop.f32.mrf.mxu0
        %v2579 = vadd.f32 0.0, %v2578
        %v2580 = vpop.f32.mrf.mxu0
        %v2581 = vadd.f32 0.0, %v2580
        %2582 = vmatmul.bf16.gmra.mxu0 %v2504
        %v2583 = vpop.f32.mrf.mxu0
        %v2584 = vadd.f32 0.0, %v2583
        %v2585 = vpop.f32.mrf.mxu0
        %v2586 = vadd.f32 0.0, %v2585
        %2587 = vmatmul.bf16.gmra.mxu0 %v2507
        %v2588 = vpop.f32.mrf.mxu0
        %v2589 = vadd.f32 0.0, %v2588
        %v2590 = vpop.f32.mrf.mxu0
        %v2591 = vadd.f32 0.0, %v2590
        %2592 = vmatmul.bf16.gmra.mxu0 %v2510
        %v2593 = vpop.f32.mrf.mxu0
        %v2594 = vadd.f32 0.0, %v2593
        %v2595 = vpop.f32.mrf.mxu0
        %v2596 = vadd.f32 0.0, %v2595
        %2597 = vmatmul.bf16.gmra.mxu0 %v2513
        %v2598 = vpop.f32.mrf.mxu0
        %v2599 = vadd.f32 0.0, %v2598
        %v2600 = vpop.f32.mrf.mxu0
        %v2601 = vadd.f32 0.0, %v2600
        %2602 = vmatmul.bf16.gmra.mxu0 %v2516
        %v2603 = vpop.f32.mrf.mxu0
        %v2604 = vadd.f32 0.0, %v2603
        %v2605 = vpop.f32.mrf.mxu0
        %v2606 = vadd.f32 0.0, %v2605
        %2607 = vmatmul.bf16.gmra.mxu0 %v2519
        %v2608 = vpop.f32.mrf.mxu0
        %v2609 = vadd.f32 0.0, %v2608
        %v2610 = vpop.f32.mrf.mxu0
        %v2611 = vadd.f32 0.0, %v2610
        %2612 = vdwg.mxu0
        %v2613 = vadd.f32 %v2391, %v2534
        %v2614 = vadd.f32 %v2392, %v2536
        %v2615 = vadd.f32 %v2393, %v2539
        %v2616 = vadd.f32 %v2394, %v2541
        %v2617 = vadd.f32 %v2395, %v2544
        %v2618 = vadd.f32 %v2396, %v2546
        %v2619 = vadd.f32 %v2397, %v2549
        %v2620 = vadd.f32 %v2398, %v2551
        %v2621 = vadd.f32 %v2399, %v2554
        %v2622 = vadd.f32 %v2400, %v2556
        %v2623 = vadd.f32 %v2401, %v2559
        %v2624 = vadd.f32 %v2402, %v2561
        %v2625 = vadd.f32 %v2403, %v2564
        %v2626 = vadd.f32 %v2404, %v2566
        %v2627 = vadd.f32 %v2405, %v2569
        %v2628 = vadd.f32 %v2406, %v2571
        %v2629 = vadd.f32 %v2407, %v2574
        %v2630 = vadd.f32 %v2408, %v2576
        %v2631 = vadd.f32 %v2409, %v2579
        %v2632 = vadd.f32 %v2410, %v2581
        %v2633 = vadd.f32 %v2411, %v2584
        %v2634 = vadd.f32 %v2412, %v2586
        %v2635 = vadd.f32 %v2413, %v2589
        %v2636 = vadd.f32 %v2414, %v2591
        %v2637 = vadd.f32 %v2415, %v2594
        %v2638 = vadd.f32 %v2416, %v2596
        %v2639 = vadd.f32 %v2417, %v2599
        %v2640 = vadd.f32 %v2418, %v2601
        %v2641 = vadd.f32 %v2419, %v2604
        %v2642 = vadd.f32 %v2420, %v2606
        %v2643 = vadd.f32 %v2421, %v2609
        %v2644 = vadd.f32 %v2422, %v2611
        %v2645 = vld [vmem:[%s4] sm:$0x1]
        %v2647 = vperm.slane %v2645, 0
        %v2649 = vadd.f32 %v2613, %v2647
        %v2650 = vadd.f32 %v2614, %v2647
        %v2651 = vadd.f32 %v2615, %v2647
        %v2652 = vadd.f32 %v2616, %v2647
        %v2653 = vadd.f32 %v2617, %v2647
        %v2654 = vadd.f32 %v2618, %v2647
        %v2655 = vadd.f32 %v2619, %v2647
        %v2656 = vadd.f32 %v2620, %v2647
        %v2657 = vadd.f32 %v2621, %v2647
        %v2658 = vadd.f32 %v2622, %v2647
        %v2659 = vadd.f32 %v2623, %v2647
        %v2660 = vadd.f32 %v2624, %v2647
        %v2661 = vadd.f32 %v2625, %v2647
        %v2662 = vadd.f32 %v2626, %v2647
        %v2663 = vadd.f32 %v2627, %v2647
        %v2664 = vadd.f32 %v2628, %v2647
        %v2665 = vadd.f32 %v2629, %v2647
        %v2666 = vadd.f32 %v2630, %v2647
        %v2667 = vadd.f32 %v2631, %v2647
        %v2668 = vadd.f32 %v2632, %v2647
        %v2669 = vadd.f32 %v2633, %v2647
        %v2670 = vadd.f32 %v2634, %v2647
        %v2671 = vadd.f32 %v2635, %v2647
        %v2672 = vadd.f32 %v2636, %v2647
        %v2673 = vadd.f32 %v2637, %v2647
        %v2674 = vadd.f32 %v2638, %v2647
        %v2675 = vadd.f32 %v2639, %v2647
        %v2676 = vadd.f32 %v2640, %v2647
        %v2677 = vadd.f32 %v2641, %v2647
        %v2678 = vadd.f32 %v2642, %v2647
        %v2679 = vadd.f32 %v2643, %v2647
        %v2680 = vadd.f32 %v2644, %v2647
        %v2681 = vmax.f32 %v2649, 0.0
        %v2682 = vmax.f32 %v2650, 0.0
        %v2683 = vmax.f32 %v2651, 0.0
        %v2684 = vmax.f32 %v2652, 0.0
        %v2685 = vmax.f32 %v2653, 0.0
        %v2686 = vmax.f32 %v2654, 0.0
        %v2687 = vmax.f32 %v2655, 0.0
        %v2688 = vmax.f32 %v2656, 0.0
        %v2689 = vmax.f32 %v2657, 0.0
        %v2690 = vmax.f32 %v2658, 0.0
        %v2691 = vmax.f32 %v2659, 0.0
        %v2692 = vmax.f32 %v2660, 0.0
        %v2693 = vmax.f32 %v2661, 0.0
        %v2694 = vmax.f32 %v2662, 0.0
        %v2695 = vmax.f32 %v2663, 0.0
        %v2696 = vmax.f32 %v2664, 0.0
        %v2697 = vmax.f32 %v2665, 0.0
        %v2698 = vmax.f32 %v2666, 0.0
        %v2699 = vmax.f32 %v2667, 0.0
        %v2700 = vmax.f32 %v2668, 0.0
        %v2701 = vmax.f32 %v2669, 0.0
        %v2702 = vmax.f32 %v2670, 0.0
        %v2703 = vmax.f32 %v2671, 0.0
        %v2704 = vmax.f32 %v2672, 0.0
        %v2705 = vmax.f32 %v2673, 0.0
        %v2706 = vmax.f32 %v2674, 0.0
        %v2707 = vmax.f32 %v2675, 0.0
        %v2708 = vmax.f32 %v2676, 0.0
        %v2709 = vmax.f32 %v2677, 0.0
        %v2710 = vmax.f32 %v2678, 0.0
        %v2711 = vmax.f32 %v2679, 0.0
        %v2712 = vmax.f32 %v2680, 0.0
        %v2713 = vpack.c.bf16 %v2682, %v2681
        %v2714 = vpack.c.bf16 %v2684, %v2683
        %v2715 = vpack.c.bf16 %v2686, %v2685
        %v2716 = vpack.c.bf16 %v2688, %v2687
        %v2717 = vpack.c.bf16 %v2690, %v2689
        %v2718 = vpack.c.bf16 %v2692, %v2691
        %v2719 = vpack.c.bf16 %v2694, %v2693
        %v2720 = vpack.c.bf16 %v2696, %v2695
        %v2721 = vpack.c.bf16 %v2698, %v2697
        %v2722 = vpack.c.bf16 %v2700, %v2699
        %v2723 = vpack.c.bf16 %v2702, %v2701
        %v2724 = vpack.c.bf16 %v2704, %v2703
        %v2725 = vpack.c.bf16 %v2706, %v2705
        %v2726 = vpack.c.bf16 %v2708, %v2707
        %v2727 = vpack.c.bf16 %v2710, %v2709
        %v2728 = vpack.c.bf16 %v2712, %v2711
        %v2729 = vld [vmem:[%s5] sm:$0x3]
        %v2730 = vld [vmem:[%s6] sm:$0x1]
        %v2732 = vperm.slane %v2730, 0
        %v2735 = vsel %vm449, %v2713, 0
        %v2738 = vsel %vm449, %v2714, 0
        %v2741 = vsel %vm449, %v2715, 0
        %v2744 = vsel %vm449, %v2716, 0
        %v2747 = vsel %vm449, %v2717, 0
        %v2750 = vsel %vm449, %v2718, 0
        %v2753 = vsel %vm449, %v2719, 0
        %v2756 = vsel %vm449, %v2720, 0
        %v2759 = vsel %vm449, %v2721, 0
        %v2762 = vsel %vm449, %v2722, 0
        %v2765 = vsel %vm449, %v2723, 0
        %v2768 = vsel %vm449, %v2724, 0
        %v2771 = vsel %vm449, %v2725, 0
        %v2774 = vsel %vm449, %v2726, 0
        %v2777 = vsel %vm449, %v2727, 0
        %v2780 = vsel %vm449, %v2728, 0
        %v2783 = vsel %vm498, %v2729, 0
        %2785 = vmatpush.bf16.msra.mxu0 0
        %2786 = vmatpush.bf16.msra.mxu0 0
        %2787 = vmatpush.bf16.msra.mxu0 0
        %2788 = vmatpush.bf16.msra.mxu0 0
        %2789 = vmatpush.bf16.msra.mxu0 0
        %2790 = vmatpush.bf16.msra.mxu0 0
        %2791 = vmatpush.bf16.msra.mxu0 0
        %2792 = vmatpush.bf16.msra.mxu0 %v2783
        %2793 = vmatmul.bf16.gmra.mxu0 %v2735
        %v2794 = vpop.f32.mrf.mxu0
        %v2795 = vadd.f32 %v2732, %v2794
        %v2796 = vpop.f32.mrf.mxu0
        %v2797 = vadd.f32 %v2732, %v2796
        %2798 = vmatmul.bf16.gmra.mxu0 %v2738
        %v2799 = vpop.f32.mrf.mxu0
        %v2800 = vadd.f32 %v2732, %v2799
        %v2801 = vpop.f32.mrf.mxu0
        %v2802 = vadd.f32 %v2732, %v2801
        %2803 = vmatmul.bf16.gmra.mxu0 %v2741
        %v2804 = vpop.f32.mrf.mxu0
        %v2805 = vadd.f32 %v2732, %v2804
        %v2806 = vpop.f32.mrf.mxu0
        %v2807 = vadd.f32 %v2732, %v2806
        %2808 = vmatmul.bf16.gmra.mxu0 %v2744
        %v2809 = vpop.f32.mrf.mxu0
        %v2810 = vadd.f32 %v2732, %v2809
        %v2811 = vpop.f32.mrf.mxu0
        %v2812 = vadd.f32 %v2732, %v2811
        %2813 = vmatmul.bf16.gmra.mxu0 %v2747
        %v2814 = vpop.f32.mrf.mxu0
        %v2815 = vadd.f32 %v2732, %v2814
        %v2816 = vpop.f32.mrf.mxu0
        %v2817 = vadd.f32 %v2732, %v2816
        %2818 = vmatmul.bf16.gmra.mxu0 %v2750
        %v2819 = vpop.f32.mrf.mxu0
        %v2820 = vadd.f32 %v2732, %v2819
        %v2821 = vpop.f32.mrf.mxu0
        %v2822 = vadd.f32 %v2732, %v2821
        %2823 = vmatmul.bf16.gmra.mxu0 %v2753
        %v2824 = vpop.f32.mrf.mxu0
        %v2825 = vadd.f32 %v2732, %v2824
        %v2826 = vpop.f32.mrf.mxu0
        %v2827 = vadd.f32 %v2732, %v2826
        %2828 = vmatmul.bf16.gmra.mxu0 %v2756
        %v2829 = vpop.f32.mrf.mxu0
        %v2830 = vadd.f32 %v2732, %v2829
        %v2831 = vpop.f32.mrf.mxu0
        %v2832 = vadd.f32 %v2732, %v2831
        %2833 = vmatmul.bf16.gmra.mxu0 %v2759
        %v2834 = vpop.f32.mrf.mxu0
        %v2835 = vadd.f32 %v2732, %v2834
        %v2836 = vpop.f32.mrf.mxu0
        %v2837 = vadd.f32 %v2732, %v2836
        %2838 = vmatmul.bf16.gmra.mxu0 %v2762
        %v2839 = vpop.f32.mrf.mxu0
        %v2840 = vadd.f32 %v2732, %v2839
        %v2841 = vpop.f32.mrf.mxu0
        %v2842 = vadd.f32 %v2732, %v2841
        %2843 = vmatmul.bf16.gmra.mxu0 %v2765
        %v2844 = vpop.f32.mrf.mxu0
        %v2845 = vadd.f32 %v2732, %v2844
        %v2846 = vpop.f32.mrf.mxu0
        %v2847 = vadd.f32 %v2732, %v2846
        %2848 = vmatmul.bf16.gmra.mxu0 %v2768
        %v2849 = vpop.f32.mrf.mxu0
        %v2850 = vadd.f32 %v2732, %v2849
        %v2851 = vpop.f32.mrf.mxu0
        %v2852 = vadd.f32 %v2732, %v2851
        %2853 = vmatmul.bf16.gmra.mxu0 %v2771
        %v2854 = vpop.f32.mrf.mxu0
        %v2855 = vadd.f32 %v2732, %v2854
        %v2856 = vpop.f32.mrf.mxu0
        %v2857 = vadd.f32 %v2732, %v2856
        %2858 = vmatmul.bf16.gmra.mxu0 %v2774
        %v2859 = vpop.f32.mrf.mxu0
        %v2860 = vadd.f32 %v2732, %v2859
        %v2861 = vpop.f32.mrf.mxu0
        %v2862 = vadd.f32 %v2732, %v2861
        %2863 = vmatmul.bf16.gmra.mxu0 %v2777
        %v2864 = vpop.f32.mrf.mxu0
        %v2865 = vadd.f32 %v2732, %v2864
        %v2866 = vpop.f32.mrf.mxu0
        %v2867 = vadd.f32 %v2732, %v2866
        %2868 = vmatmul.bf16.gmra.mxu0 %v2780
        %v2869 = vpop.f32.mrf.mxu0
        %v2870 = vadd.f32 %v2732, %v2869
        %v2871 = vpop.f32.mrf.mxu0
        %v2872 = vadd.f32 %v2732, %v2871
        %2873 = vdwg.mxu0
        %v2874 = vld [vmem:[%s7] sm:$0x3]
        %v2875 = vld [vmem:[%s8] sm:$0x1]
        %v2877 = vperm.slane %v2875, 0
        %v2880 = vsel %vm498, %v2874, 0
        %2882 = vmatpush.bf16.msra.mxu0 0
        %2883 = vmatpush.bf16.msra.mxu0 0
        %2884 = vmatpush.bf16.msra.mxu0 0
        %2885 = vmatpush.bf16.msra.mxu0 0
        %2886 = vmatpush.bf16.msra.mxu0 0
        %2887 = vmatpush.bf16.msra.mxu0 0
        %2888 = vmatpush.bf16.msra.mxu0 0
        %2889 = vmatpush.bf16.msra.mxu0 %v2880
        %2890 = vmatmul.bf16.gmra.mxu0 %v451
        %v2891 = vpop.f32.mrf.mxu0
        %v2892 = vadd.f32 %v2877, %v2891
        %v2893 = vpop.f32.mrf.mxu0
        %v2894 = vadd.f32 %v2877, %v2893
        %2895 = vmatmul.bf16.gmra.mxu0 %v454
        %v2896 = vpop.f32.mrf.mxu0
        %v2897 = vadd.f32 %v2877, %v2896
        %v2898 = vpop.f32.mrf.mxu0
        %v2899 = vadd.f32 %v2877, %v2898
        %2900 = vmatmul.bf16.gmra.mxu0 %v457
        %v2901 = vpop.f32.mrf.mxu0
        %v2902 = vadd.f32 %v2877, %v2901
        %v2903 = vpop.f32.mrf.mxu0
        %v2904 = vadd.f32 %v2877, %v2903
        %2905 = vmatmul.bf16.gmra.mxu0 %v460
        %v2906 = vpop.f32.mrf.mxu0
        %v2907 = vadd.f32 %v2877, %v2906
        %v2908 = vpop.f32.mrf.mxu0
        %v2909 = vadd.f32 %v2877, %v2908
        %2910 = vmatmul.bf16.gmra.mxu0 %v463
        %v2911 = vpop.f32.mrf.mxu0
        %v2912 = vadd.f32 %v2877, %v2911
        %v2913 = vpop.f32.mrf.mxu0
        %v2914 = vadd.f32 %v2877, %v2913
        %2915 = vmatmul.bf16.gmra.mxu0 %v466
        %v2916 = vpop.f32.mrf.mxu0
        %v2917 = vadd.f32 %v2877, %v2916
        %v2918 = vpop.f32.mrf.mxu0
        %v2919 = vadd.f32 %v2877, %v2918
        %2920 = vmatmul.bf16.gmra.mxu0 %v469
        %v2921 = vpop.f32.mrf.mxu0
        %v2922 = vadd.f32 %v2877, %v2921
        %v2923 = vpop.f32.mrf.mxu0
        %v2924 = vadd.f32 %v2877, %v2923
        %2925 = vmatmul.bf16.gmra.mxu0 %v472
        %v2926 = vpop.f32.mrf.mxu0
        %v2927 = vadd.f32 %v2877, %v2926
        %v2928 = vpop.f32.mrf.mxu0
        %v2929 = vadd.f32 %v2877, %v2928
        %2930 = vmatmul.bf16.gmra.mxu0 %v475
        %v2931 = vpop.f32.mrf.mxu0
        %v2932 = vadd.f32 %v2877, %v2931
        %v2933 = vpop.f32.mrf.mxu0
        %v2934 = vadd.f32 %v2877, %v2933
        %2935 = vmatmul.bf16.gmra.mxu0 %v478
        %v2936 = vpop.f32.mrf.mxu0
        %v2937 = vadd.f32 %v2877, %v2936
        %v2938 = vpop.f32.mrf.mxu0
        %v2939 = vadd.f32 %v2877, %v2938
        %2940 = vmatmul.bf16.gmra.mxu0 %v481
        %v2941 = vpop.f32.mrf.mxu0
        %v2942 = vadd.f32 %v2877, %v2941
        %v2943 = vpop.f32.mrf.mxu0
        %v2944 = vadd.f32 %v2877, %v2943
        %2945 = vmatmul.bf16.gmra.mxu0 %v484
        %v2946 = vpop.f32.mrf.mxu0
        %v2947 = vadd.f32 %v2877, %v2946
        %v2948 = vpop.f32.mrf.mxu0
        %v2949 = vadd.f32 %v2877, %v2948
        %2950 = vmatmul.bf16.gmra.mxu0 %v487
        %v2951 = vpop.f32.mrf.mxu0
        %v2952 = vadd.f32 %v2877, %v2951
        %v2953 = vpop.f32.mrf.mxu0
        %v2954 = vadd.f32 %v2877, %v2953
        %2955 = vmatmul.bf16.gmra.mxu0 %v490
        %v2956 = vpop.f32.mrf.mxu0
        %v2957 = vadd.f32 %v2877, %v2956
        %v2958 = vpop.f32.mrf.mxu0
        %v2959 = vadd.f32 %v2877, %v2958
        %2960 = vmatmul.bf16.gmra.mxu0 %v493
        %v2961 = vpop.f32.mrf.mxu0
        %v2962 = vadd.f32 %v2877, %v2961
        %v2963 = vpop.f32.mrf.mxu0
        %v2964 = vadd.f32 %v2877, %v2963
        %2965 = vmatmul.bf16.gmra.mxu0 %v496
        %v2966 = vpop.f32.mrf.mxu0
        %v2967 = vadd.f32 %v2877, %v2966
        %v2968 = vpop.f32.mrf.mxu0
        %v2969 = vadd.f32 %v2877, %v2968
        %2970 = vdwg.mxu0
        %v2971 = vadd.f32 %v2795, %v2892
        %v2972 = vadd.f32 %v2797, %v2894
        %v2973 = vadd.f32 %v2800, %v2897
        %v2974 = vadd.f32 %v2802, %v2899
        %v2975 = vadd.f32 %v2805, %v2902
        %v2976 = vadd.f32 %v2807, %v2904
        %v2977 = vadd.f32 %v2810, %v2907
        %v2978 = vadd.f32 %v2812, %v2909
        %v2979 = vadd.f32 %v2815, %v2912
        %v2980 = vadd.f32 %v2817, %v2914
        %v2981 = vadd.f32 %v2820, %v2917
        %v2982 = vadd.f32 %v2822, %v2919
        %v2983 = vadd.f32 %v2825, %v2922
        %v2984 = vadd.f32 %v2827, %v2924
        %v2985 = vadd.f32 %v2830, %v2927
        %v2986 = vadd.f32 %v2832, %v2929
        %v2987 = vadd.f32 %v2835, %v2932
        %v2988 = vadd.f32 %v2837, %v2934
        %v2989 = vadd.f32 %v2840, %v2937
        %v2990 = vadd.f32 %v2842, %v2939
        %v2991 = vadd.f32 %v2845, %v2942
        %v2992 = vadd.f32 %v2847, %v2944
        %v2993 = vadd.f32 %v2850, %v2947
        %v2994 = vadd.f32 %v2852, %v2949
        %v2995 = vadd.f32 %v2855, %v2952
        %v2996 = vadd.f32 %v2857, %v2954
        %v2997 = vadd.f32 %v2860, %v2957
        %v2998 = vadd.f32 %v2862, %v2959
        %v2999 = vadd.f32 %v2865, %v2962
        %v3000 = vadd.f32 %v2867, %v2964
        %v3001 = vadd.f32 %v2870, %v2967
        %v3002 = vadd.f32 %v2872, %v2969
        %v3003 = vmax.f32 %v2971, 0.0
        %v3004 = vmax.f32 %v2972, 0.0
        %v3005 = vmax.f32 %v2973, 0.0
        %v3006 = vmax.f32 %v2974, 0.0
        %v3007 = vmax.f32 %v2975, 0.0
        %v3008 = vmax.f32 %v2976, 0.0
        %v3009 = vmax.f32 %v2977, 0.0
        %v3010 = vmax.f32 %v2978, 0.0
        %v3011 = vmax.f32 %v2979, 0.0
        %v3012 = vmax.f32 %v2980, 0.0
        %v3013 = vmax.f32 %v2981, 0.0
        %v3014 = vmax.f32 %v2982, 0.0
        %v3015 = vmax.f32 %v2983, 0.0
        %v3016 = vmax.f32 %v2984, 0.0
        %v3017 = vmax.f32 %v2985, 0.0
        %v3018 = vmax.f32 %v2986, 0.0
        %v3019 = vmax.f32 %v2987, 0.0
        %v3020 = vmax.f32 %v2988, 0.0
        %v3021 = vmax.f32 %v2989, 0.0
        %v3022 = vmax.f32 %v2990, 0.0
        %v3023 = vmax.f32 %v2991, 0.0
        %v3024 = vmax.f32 %v2992, 0.0
        %v3025 = vmax.f32 %v2993, 0.0
        %v3026 = vmax.f32 %v2994, 0.0
        %v3027 = vmax.f32 %v2995, 0.0
        %v3028 = vmax.f32 %v2996, 0.0
        %v3029 = vmax.f32 %v2997, 0.0
        %v3030 = vmax.f32 %v2998, 0.0
        %v3031 = vmax.f32 %v2999, 0.0
        %v3032 = vmax.f32 %v3000, 0.0
        %v3033 = vmax.f32 %v3001, 0.0
        %v3034 = vmax.f32 %v3002, 0.0
        %vm3035 = vcmask 130048
        %3036 = vst.msk [vmem:[%s325] sm:$0xff] %vm3035, %v3003
        %3037 = vst.msk [vmem:[%s325 + $0x8] sm:$0xff] %vm3035, %v3004
        %3038 = vst.msk [vmem:[%s325 + $0x10] sm:$0xff] %vm3035, %v3005
        %3039 = vst.msk [vmem:[%s325 + $0x18] sm:$0xff] %vm3035, %v3006
        %3040 = vst.msk [vmem:[%s325 + $0x20] sm:$0xff] %vm3035, %v3007
        %3041 = vst.msk [vmem:[%s325 + $0x28] sm:$0xff] %vm3035, %v3008
        %3042 = vst.msk [vmem:[%s325 + $0x30] sm:$0xff] %vm3035, %v3009
        %3043 = vst.msk [vmem:[%s325 + $0x38] sm:$0xff] %vm3035, %v3010
        %3044 = vst.msk [vmem:[%s325 + $0x40] sm:$0xff] %vm3035, %v3011
        %3045 = vst.msk [vmem:[%s325 + $0x48] sm:$0xff] %vm3035, %v3012
        %3046 = vst.msk [vmem:[%s325 + $0x50] sm:$0xff] %vm3035, %v3013
        %3047 = vst.msk [vmem:[%s325 + $0x58] sm:$0xff] %vm3035, %v3014
        %3048 = vst.msk [vmem:[%s325 + $0x60] sm:$0xff] %vm3035, %v3015
        %3049 = vst.msk [vmem:[%s325 + $0x68] sm:$0xff] %vm3035, %v3016
        %3050 = vst.msk [vmem:[%s325 + $0x70] sm:$0xff] %vm3035, %v3017
        %3051 = vst.msk [vmem:[%s325 + $0x78] sm:$0xff] %vm3035, %v3018
        %3052 = vst.msk [vmem:[%s325 + $0x80] sm:$0xff] %vm3035, %v3019
        %3053 = vst.msk [vmem:[%s325 + $0x88] sm:$0xff] %vm3035, %v3020
        %3054 = vst.msk [vmem:[%s325 + $0x90] sm:$0xff] %vm3035, %v3021
        %3055 = vst.msk [vmem:[%s325 + $0x98] sm:$0xff] %vm3035, %v3022
        %3056 = vst.msk [vmem:[%s325 + $0xa0] sm:$0xff] %vm3035, %v3023
        %3057 = vst.msk [vmem:[%s325 + $0xa8] sm:$0xff] %vm3035, %v3024
        %3058 = vst.msk [vmem:[%s325 + $0xb0] sm:$0xff] %vm3035, %v3025
        %3059 = vst.msk [vmem:[%s325 + $0xb8] sm:$0xff] %vm3035, %v3026
        %3060 = vst.msk [vmem:[%s325 + $0xc0] sm:$0xff] %vm3035, %v3027
        %3061 = vst.msk [vmem:[%s325 + $0xc8] sm:$0xff] %vm3035, %v3028
        %3062 = vst.msk [vmem:[%s325 + $0xd0] sm:$0xff] %vm3035, %v3029
        %3063 = vst.msk [vmem:[%s325 + $0xd8] sm:$0xff] %vm3035, %v3030
        %3064 = vst.msk [vmem:[%s325 + $0xe0] sm:$0xff] %vm3035, %v3031
        %3065 = vst.msk [vmem:[%s325 + $0xe8] sm:$0xff] %vm3035, %v3032
        %3066 = vst.msk [vmem:[%s325 + $0xf0] sm:$0xff] %vm3035, %v3033
        %3067 = vst.msk [vmem:[%s325 + $0xf8] sm:$0xff] %vm3035, %v3034
        %s3068 = sand.u32 %s225, 1
        %s3069 = scalar_lea.sflag [#allocation4], %s3068
        %s3070 = sand.u32 %s225, 1
        %s3071 = smul.addr %s3070, 256
        %s3072 = scalar_lea.vmem [#allocation3], %s3071
        // Predicated region
        $region57: #{tpu_custom_call.1} parent=55 // pred_check
          %p3073 = pneg %p235
        $region58: #{tpu_custom_call.1} parent=55 // pred_check_branch
          %3075 = sbr.rel (%p3073) target = $region60
        $region59: #{tpu_custom_call.1} parent=55 // pred_region
          %3077 = vsyncadd %s3069, 0
          %s3078 = smul.addr %s23, 32
          %s3079 = smul.addr %s3078, 8
          %s3080 = scalar_lea.hbm %s9, %s3079
          %s3081 = sshll.u32 %s3072, 4
          %s3082 = int_to_ptr.vmem [resolvable:$true] %s3081
          %s3083 = sshll.u32 %s3080, 4
          %s3084 = int_to_ptr.hbm [resolvable:$true] %s3083
          %3089 = dma.vmem_to_hbm [thread:$0]  %s3082, 4096, %s3084, %s3069, 128, 128, 8
        $region60: #{tpu_custom_call.1} parent=55 // pred_fallthru
          _
      $region56: #{tpu_custom_call.1} parent=5 // pred_fallthru
        _
      %p3090 = scmp.le.s32.totalorder 2, %s18
      // Predicated region
      $region61: #{tpu_custom_call.1} parent=5 // pred_check
        %p3091 = pneg %p3090
      $region62: #{tpu_custom_call.1} parent=5 // pred_check_branch
        %3093 = sbr.rel (%p3091) target = $region64
      $region63: #{tpu_custom_call.1} parent=5 // pred_region
        %s3094 = ssub.s32 %s18, 2
        // Predicated region
        $region65: #{tpu_custom_call.1} parent=63 // pred_check
          %p3095 = pneg %p241
        $region66: #{tpu_custom_call.1} parent=63 // pred_check_branch
          %3097 = sbr.rel (%p3095) target = $region68
        $region67: #{tpu_custom_call.1} parent=63 // pred_region
          %s3098 = sand.u32 %s226, 1
          %s3099 = scalar_lea.sflag [#allocation4], %s3098
          %s3100 = sand.u32 %s226, 1
          %s3101 = smul.addr %s3100, 256
          %s3102 = scalar_lea.vmem [#allocation3], %s3101
          %3104 = dma.done %s3099, 4096
        $region68: #{tpu_custom_call.1} parent=63 // pred_fallthru
          _
      $region64: #{tpu_custom_call.1} parent=5 // pred_fallthru
        _
    $region6: #{tpu_custom_call.1} parent=1 // loop_footer
      %s22 = sadd.s32 1, %s18
    $region7: #{tpu_custom_call.1} parent=1 // loop_footer_branch
      %17 = sbr.rel target = $region3
    $region8: #{tpu_custom_call.1} parent=1 // loop_exit
      _
    %3105 = vsyncpa [#allocation4], 1
    %s3106 = scalar_lea.sflag [#allocation4], 1
    %3107 = vsyncpa %s3106, 1

</llo_original>
